<compile_context>
chip_gen: v6e
topology: v6e:2x2x1
jax: 0.10.0
libtpu: 0.0.40
codegen_flags: <defaults>
</compile_context>

<pallas_src>
import functools

import jax
import jax.numpy as jnp
from jax import lax
from jax.experimental import pallas as pl
from jax.experimental.pallas import tpu as pltpu

EPS = 1e-5  # nn.InstanceNorm1d default eps


def _encoder_layer_kernel(
    # shared data
    row_ref, col_ref, cost_ref, rep_ref, ssum_ref, qmask_ref,
    # per-block parameters, stacked along a leading axis of size 2
    wq_ref, wk_ref, wv_ref, wc_ref, bc_ref,
    w1a_ref, w1b_ref, b1m_ref, w2m_ref, b2m_ref,
    g1_ref, be1_ref, fw1_ref, fb1_ref, fw2_ref, fb2_ref, g2_ref, be2_ref,
    # output
    out_ref,
    # scratch
    oc_ref,
    *, batch, n_pos, head_num, qkv_dim):
  """Both EncodingBlocks (t=0 row, t=1 col) in one kernel invocation."""
  B, N, H, D = batch, n_pos, head_num, qkv_dim

  row = row_ref[...]                       # (B*N, E)
  col = col_ref[...]                       # (B*M, E)   (requires N == M)

  rep = rep_ref[...]                       # (M, M*ms)   lane-replication matrix
  ssum = ssum_ref[...]                     # (M*ms, M)   segment-sum (ms-reduction)
  qmask = qmask_ref[...]                   # (H*N, H*D)  head block-diagonal 0/1 mask

  def add_norm(x, y, gamma, beta):
    # Add & InstanceNorm1d over positions, per batch & channel, in the flat
    # (B*N, E) layout (per-batch sublane slices; no (B, N, E) reshape).
    added = x + y
    parts = []
    for b in range(B):
      blk = added[b * N:(b + 1) * N]                       # (N, E)
      mean = jnp.mean(blk, axis=0, keepdims=True)
      cen = blk - mean
      var = jnp.mean(cen * cen, axis=0, keepdims=True)
      parts.append(cen * lax.rsqrt(var + EPS))
    return jnp.concatenate(parts, axis=0) * gamma + beta

  for t in range(2):                       # 0 = row block, 1 = col block (static)
    self_emb = row if t == 0 else col      # queries / residual stream
    other_emb = col if t == 0 else row     # keys / values

    wq = wq_ref[t]                         # (E, H*D)
    wk = wk_ref[t]                         # (E, H*D)
    wv = wv_ref[t]                         # (E, H*D)
    wc = wc_ref[t]                         # (H*D, E)
    bc = bc_ref[t]                         # (1, E)
    w1a = w1a_ref[t]                       # (H*N, M*ms)  W1[:,0,:], 1/sqrt(D) folded
    w1b = w1b_ref[t]                       # (H*N, M*ms)  W1[:,1,:]
    b1m = b1m_ref[t]                       # (H*N, M*ms)
    w2m = w2m_ref[t]                       # (H*N, M*ms)
    b2m = b2m_ref[t]                       # (H*N, M)

    # Fused per-head projections: 3 batched matmuls per block (was 3*H).
    q_all = jnp.dot(self_emb, wq, preferred_element_type=jnp.float32)   # (B*N, HD)
    k_all = jnp.dot(other_emb, wk, preferred_element_type=jnp.float32)  # (B*M, HD)
    v_all = jnp.dot(other_emb, wv, preferred_element_type=jnp.float32)  # (B*M, HD)

    # TODO(synk): switch to lax.fori_loop(..., unroll=True) before scaling B.
    for b in range(B):
      q_b = q_all[b * N:(b + 1) * N]       # (N, HD)  sublane slice
      k_b = k_all[b * N:(b + 1) * N]       # (M, HD)
      v_b = v_all[b * N:(b + 1) * N]       # (M, HD)

      # All-head q.k dots in ONE matmul: block-diagonal Q (heads on sublanes)
      # contracted with k_b over the last dim (no transpose).
      q_blk = jnp.concatenate([q_b] * H, axis=0) * qmask            # (H*N, HD)
      dots = lax.dot_general(q_blk, k_b, (((1,), (1,)), ((), ())),
                             preferred_element_type=jnp.float32)    # (H*N, M)

      # Mixed-score MLP, all heads at once, lane-dense (H*N, M*ms) slab.
      dot_tiled = jnp.dot(dots, rep, preferred_element_type=jnp.float32)
      ms1 = jnp.maximum(dot_tiled * w1a + cost_ref[t, b] * w1b + b1m, 0.0)
      # ms-reduction: per-head W2 as an elementwise multiply (row-indexed by
      # head) followed by a fixed segment-sum matmul.
      ms2 = jnp.dot(ms1 * w2m, ssum, preferred_element_type=jnp.float32) + b2m

      # Softmax over the key axis (M lanes); reciprocal on the EUP.
      mx = jnp.max(ms2, axis=-1, keepdims=True)
      ex = jnp.exp(ms2 - mx)
      attn = ex * pl.reciprocal(jnp.sum(ex, axis=-1, keepdims=True),
                                approx=True)                        # (H*N, M)

      # Multi-head combine: one matmul, block-diagonal mask, fold head groups.
      z = jnp.dot(attn, v_b, preferred_element_type=jnp.float32) * qmask
      oc = z[0:N]
      for h in range(1, H):
        oc = oc + z[h * N:(h + 1) * N]                              # (N, HD)
      oc_ref[t, b * N:(b + 1) * N, :] = oc

    comb = oc_ref[t]                                                # (B*N, HD)
    mh = jnp.dot(comb, wc, preferred_element_type=jnp.float32) + bc

    out1 = add_norm(self_emb, mh, g1_ref[t], be1_ref[t])
    hidden = jnp.maximum(
        jnp.dot(out1, fw1_ref[t], preferred_element_type=jnp.float32)
        + fb1_ref[t], 0.0)
    out2 = (jnp.dot(hidden, fw2_ref[t], preferred_element_type=jnp.float32)
            + fb2_ref[t])
    out3 = add_norm(out1, out2, g2_ref[t], be2_ref[t])

    out_ref[t] = out3.astype(out_ref.dtype)


def _pack_block(p, n_pos, softmax_len, qkv_dim):
  """Derive kernel-layout tensors for one EncodingBlock (torch-layout params)."""
  H = p['mix1_w'].shape[0]
  ms = p['mix1_w'].shape[-1]
  N, M, D = n_pos, softmax_len, qkv_dim
  inv_sqrt_d = 1.0 / (D ** 0.5)

  def head_lane(v_hs, scale=1.0):
    # (H, ms) -> (H*N, M*ms): broadcast over positions (rows) and keys (lanes).
    rows = jnp.repeat(v_hs * scale, N, axis=0)            # (H*N, ms)
    return jnp.tile(rows, (1, M))                         # (H*N, M*ms)

  w1a = head_lane(p['mix1_w'][:, 0, :], inv_sqrt_d)
  w1b = head_lane(p['mix1_w'][:, 1, :])
  b1m = head_lane(p['mix1_b'])
  w2m = head_lane(p['mix2_w'])
  b2m = jnp.tile(jnp.repeat(p['mix2_b'], N, axis=0), (1, M))   # (H*N, M)

  return (p['wq'], p['wk'], p['wv'], p['wc'], p['bc'],
          w1a, w1b, b1m, w2m, b2m,
          p['g1'], p['be1'], p['w1'], p['b1'], p['w2'], p['b2'],
          p['g2'], p['be2'])


@functools.partial(jax.jit, static_argnames=('head_num', 'qkv_dim'))
def encoder_layer_forward(row_emb, col_emb, cost_mat, row_params, col_params,
                          *, head_num, qkv_dim):
  B, N, E = row_emb.shape
  M = col_emb.shape[1]
  # TODO(synk): the fused path assumes a square cost matrix (N == M);
  # rectangular MatNet instances would need padding/masking or a 2-call split.
  assert N == M, "fused EncoderLayer kernel requires N == M"
  H, D = head_num, qkv_dim
  HD = H * D
  ms = row_params['mix1_w'].shape[-1]

  row_flat = row_emb.reshape(B * N, E)
  col_flat = col_emb.reshape(B * M, E)

  # Cost and cost^T: stacked, head-tiled and lane-replicated wrapper-side
  # (pure replication = layout plumbing; no weights folded in).
  def cost_slab(c):                                      # (B, N, M) -> (B, H*N, M*ms)
    return jnp.repeat(jnp.tile(c, (1, H, 1)), ms, axis=2)

  cost_stack = jnp.stack([cost_slab(cost_mat),
                          cost_slab(jnp.transpose(cost_mat, (0, 2, 1)))],
                         axis=0)                         # (2, B, H*N, M*ms)

  # Fixed layout matrices.
  rep = jnp.repeat(jnp.eye(M, dtype=jnp.float32), ms, axis=1)      # (M, M*ms)
  ssum = jnp.transpose(rep)                                        # (M*ms, M)
  row_h = jnp.repeat(jnp.arange(H), N)
  lane_h = jnp.repeat(jnp.arange(H), D)
  qmask = (row_h[:, None] == lane_h[None, :]).astype(jnp.float32)  # (H*N, H*D)

  packed = [jnp.stack(pair, axis=0) for pair in
            zip(_pack_block(row_params, N, M, D),
                _pack_block(col_params, M, N, D))]

  kernel = functools.partial(_encoder_layer_kernel,
                             batch=B, n_pos=N, head_num=H, qkv_dim=D)

  out = pl.pallas_call(
      kernel,
      out_shape=jax.ShapeDtypeStruct((2, B * N, E), jnp.float32),
      scratch_shapes=[pltpu.VMEM((2, B * N, HD), jnp.float32)],
  )(row_flat, col_flat, cost_stack, rep, ssum, qmask, *packed)

  return out[0].reshape(B, N, E), out[1].reshape(B, M, E)


def init_block_params(key, E, head_num, qkv_dim, ms_hidden, ff_hidden):
  HD = head_num * qkv_dim
  keys = jax.random.split(key, 13)

  def u(k, shape, bound):
    return jax.random.uniform(k, shape, jnp.float32, -bound, bound)

  def lin(k, fan_in, shape):     # matches torch.nn.Linear default init range
    return u(k, shape, 1.0 / (fan_in ** 0.5))

  mix1_init = 0.5 ** 0.5
  mix2_init = (1.0 / 16.0) ** 0.5
  return dict(
      wq=lin(keys[0], E, (E, HD)),
      wk=lin(keys[1], E, (E, HD)),
      wv=lin(keys[2], E, (E, HD)),
      mix1_w=u(keys[3], (head_num, 2, ms_hidden), mix1_init),
      mix1_b=u(keys[4], (head_num, ms_hidden), mix1_init),
      mix2_w=u(keys[5], (head_num, ms_hidden), mix2_init),
      mix2_b=u(keys[6], (head_num, 1), mix2_init),
      wc=lin(keys[7], HD, (HD, E)),
      bc=lin(keys[8], HD, (1, E)),
      g1=jnp.ones((1, E), jnp.float32), be1=jnp.zeros((1, E), jnp.float32),
      w1=lin(keys[9], E, (E, ff_hidden)),
      b1=lin(keys[10], E, (1, ff_hidden)),
      w2=lin(keys[11], ff_hidden, (ff_hidden, E)),
      b2=lin(keys[12], ff_hidden, (1, E)),
      g2=jnp.ones((1, E), jnp.float32), be2=jnp.zeros((1, E), jnp.float32),
  )


def _reference_block(row, col, cost, p, head_num, qkv_dim):
  """Pure-JAX (XLA) reference for one 'mix' EncodingBlock (torch semantics)."""
  B, N, E = row.shape
  M = col.shape[1]
  H, D = head_num, qkv_dim
  q = (row @ p['wq']).reshape(B, N, H, D).transpose(0, 2, 1, 3)
  k = (col @ p['wk']).reshape(B, M, H, D).transpose(0, 2, 1, 3)
  v = (col @ p['wv']).reshape(B, M, H, D).transpose(0, 2, 1, 3)
  dot = jnp.einsum('bhnd,bhmd->bhnm', q, k) / (D ** 0.5)
  w1a = p['mix1_w'][:, 0, :]
  w1b = p['mix1_w'][:, 1, :]
  ms1 = jax.nn.relu(dot[..., None] * w1a[None, :, None, None, :]
                    + cost[:, None, :, :, None] * w1b[None, :, None, None, :]
                    + p['mix1_b'][None, :, None, None, :])
  ms2 = (jnp.sum(ms1 * p['mix2_w'][None, :, None, None, :], axis=-1)
         + p['mix2_b'][None, :, None, :])
  attn = jax.nn.softmax(ms2, axis=-1)
  out = jnp.einsum('bhnm,bhmd->bhnd', attn, v)
  out_concat = out.transpose(0, 2, 1, 3).reshape(B, N, H * D)
  mh = out_concat @ p['wc'] + p['bc']

  def add_norm(a, b, g, be):
    added = a + b
    mean = added.mean(axis=1, keepdims=True)
    var = ((added - mean) ** 2).mean(axis=1, keepdims=True)
    return (added - mean) * jax.lax.rsqrt(var + EPS) * g + be

  out1 = add_norm(row, mh, p['g1'], p['be1'])
  hidden = jax.nn.relu(out1 @ p['w1'] + p['b1'])
  out2 = hidden @ p['w2'] + p['b2']
  return add_norm(out1, out2, p['g2'], p['be2'])


if __name__ == "__main__":
  # model_params: embedding_dim=32, head_num=4, qkv_dim=8,
  #               ms_hidden_dim=16, ff_hidden_dim=64, TMHA='mix', MMHA='mix'
  B, N, M, E = 2, 8, 8, 32
  HEAD_NUM, QKV_DIM, MS_HIDDEN, FF_HIDDEN = 4, 8, 16, 64

  key = jax.random.PRNGKey(0)
  k_row, k_col, k_cost, k_p1, k_p2 = jax.random.split(key, 5)

  row_emb = jax.random.normal(k_row, (B, N, E), jnp.float32)
  col_emb = jax.random.normal(k_col, (B, M, E), jnp.float32)
  cost_mat = jax.random.uniform(k_cost, (B, N, M), jnp.float32)

  row_params = init_block_params(k_p1, E, HEAD_NUM, QKV_DIM, MS_HIDDEN, FF_HIDDEN)
  col_params = init_block_params(k_p2, E, HEAD_NUM, QKV_DIM, MS_HIDDEN, FF_HIDDEN)

  row_out, col_out = encoder_layer_forward(
      row_emb, col_emb, cost_mat, row_params, col_params,
      head_num=HEAD_NUM, qkv_dim=QKV_DIM)
  jax.block_until_ready((row_out, col_out))

  # Pure-JAX reference check (loose tolerance: approx-reciprocal softmax and
  # reassociated/fused matmuls differ slightly from the plain f32 reference).
  with jax.default_matmul_precision("float32"):
    ref_row = _reference_block(row_emb, col_emb, cost_mat, row_params,
                               HEAD_NUM, QKV_DIM)
    ref_col = _reference_block(col_emb, row_emb,
                               jnp.transpose(cost_mat, (0, 2, 1)),
                               col_params, HEAD_NUM, QKV_DIM)

  assert row_out.shape == (B, N, E) and col_out.shape == (B, M, E)
  assert bool(jnp.all(jnp.isfinite(row_out))) and bool(jnp.all(jnp.isfinite(col_out)))
  assert bool(jnp.allclose(row_out, ref_row, rtol=5e-2, atol=5e-2))
  assert bool(jnp.allclose(col_out, ref_col, rtol=5e-2, atol=5e-2))
  print("KERNEL_OK")
</pallas_src>

<mosaic_0001>
module attributes {stable_mosaic.version = 11 : i64} {
  func.func @_encoder_layer_kernel(%arg0: memref<16x32xf32, #tpu.memory_space<vmem>>, %arg1: memref<16x32xf32, #tpu.memory_space<vmem>>, %arg2: memref<2x2x32x128xf32, #tpu.memory_space<vmem>>, %arg3: memref<8x128xf32, #tpu.memory_space<vmem>>, %arg4: memref<128x8xf32, #tpu.memory_space<vmem>>, %arg5: memref<32x32xf32, #tpu.memory_space<vmem>>, %arg6: memref<2x32x32xf32, #tpu.memory_space<vmem>>, %arg7: memref<2x32x32xf32, #tpu.memory_space<vmem>>, %arg8: memref<2x32x32xf32, #tpu.memory_space<vmem>>, %arg9: memref<2x32x32xf32, #tpu.memory_space<vmem>>, %arg10: memref<2x1x32xf32, #tpu.memory_space<vmem>>, %arg11: memref<2x32x128xf32, #tpu.memory_space<vmem>>, %arg12: memref<2x32x128xf32, #tpu.memory_space<vmem>>, %arg13: memref<2x32x128xf32, #tpu.memory_space<vmem>>, %arg14: memref<2x32x128xf32, #tpu.memory_space<vmem>>, %arg15: memref<2x32x8xf32, #tpu.memory_space<vmem>>, %arg16: memref<2x1x32xf32, #tpu.memory_space<vmem>>, %arg17: memref<2x1x32xf32, #tpu.memory_space<vmem>>, %arg18: memref<2x32x64xf32, #tpu.memory_space<vmem>>, %arg19: memref<2x1x64xf32, #tpu.memory_space<vmem>>, %arg20: memref<2x64x32xf32, #tpu.memory_space<vmem>>, %arg21: memref<2x1x32xf32, #tpu.memory_space<vmem>>, %arg22: memref<2x1x32xf32, #tpu.memory_space<vmem>>, %arg23: memref<2x1x32xf32, #tpu.memory_space<vmem>>, %arg24: memref<2x16x32xf32, #tpu.memory_space<vmem>>, %arg25: memref<2x16x32xf32, #tpu.memory_space<vmem>>) attributes {dimension_semantics = [], scalar_prefetch = 0 : i64, scratch_operands = 1 : i64, tpu.core_type = #tpu.core_type<tc>} {
    %c0 = arith.constant 0 : index
    %c0_0 = arith.constant 0 : index
    %0 = vector.load %arg0[%c0, %c0_0] : memref<16x32xf32, #tpu.memory_space<vmem>>, vector<16x32xf32>
    %c0_1 = arith.constant 0 : index
    %c0_2 = arith.constant 0 : index
    %1 = vector.load %arg1[%c0_1, %c0_2] : memref<16x32xf32, #tpu.memory_space<vmem>>, vector<16x32xf32>
    %c0_3 = arith.constant 0 : index
    %c0_4 = arith.constant 0 : index
    %2 = vector.load %arg3[%c0_3, %c0_4] : memref<8x128xf32, #tpu.memory_space<vmem>>, vector<8x128xf32>
    %c0_5 = arith.constant 0 : index
    %c0_6 = arith.constant 0 : index
    %3 = vector.load %arg4[%c0_5, %c0_6] : memref<128x8xf32, #tpu.memory_space<vmem>>, vector<128x8xf32>
    %c0_7 = arith.constant 0 : index
    %c0_8 = arith.constant 0 : index
    %4 = vector.load %arg5[%c0_7, %c0_8] : memref<32x32xf32, #tpu.memory_space<vmem>>, vector<32x32xf32>
    %c0_9 = arith.constant 0 : index
    %c0_10 = arith.constant 0 : index
    %c0_11 = arith.constant 0 : index
    %5 = vector.load %arg6[%c0_9, %c0_10, %c0_11] : memref<2x32x32xf32, #tpu.memory_space<vmem>>, vector<1x32x32xf32>
    %6 = vector.shape_cast %5 : vector<1x32x32xf32> to vector<32x32xf32>
    %c0_12 = arith.constant 0 : index
    %c0_13 = arith.constant 0 : index
    %c0_14 = arith.constant 0 : index
    %7 = vector.load %arg7[%c0_12, %c0_13, %c0_14] : memref<2x32x32xf32, #tpu.memory_space<vmem>>, vector<1x32x32xf32>
    %8 = vector.shape_cast %7 : vector<1x32x32xf32> to vector<32x32xf32>
    %c0_15 = arith.constant 0 : index
    %c0_16 = arith.constant 0 : index
    %c0_17 = arith.constant 0 : index
    %9 = vector.load %arg8[%c0_15, %c0_16, %c0_17] : memref<2x32x32xf32, #tpu.memory_space<vmem>>, vector<1x32x32xf32>
    %10 = vector.shape_cast %9 : vector<1x32x32xf32> to vector<32x32xf32>
    %c0_18 = arith.constant 0 : index
    %c0_19 = arith.constant 0 : index
    %c0_20 = arith.constant 0 : index
    %11 = vector.load %arg9[%c0_18, %c0_19, %c0_20] : memref<2x32x32xf32, #tpu.memory_space<vmem>>, vector<1x32x32xf32>
    %12 = vector.shape_cast %11 : vector<1x32x32xf32> to vector<32x32xf32>
    %c0_21 = arith.constant 0 : index
    %c0_22 = arith.constant 0 : index
    %c0_23 = arith.constant 0 : index
    %13 = vector.load %arg10[%c0_21, %c0_22, %c0_23] : memref<2x1x32xf32, #tpu.memory_space<vmem>>, vector<1x1x32xf32>
    %14 = vector.shape_cast %13 : vector<1x1x32xf32> to vector<1x32xf32>
    %c0_24 = arith.constant 0 : index
    %c0_25 = arith.constant 0 : index
    %c0_26 = arith.constant 0 : index
    %15 = vector.load %arg11[%c0_24, %c0_25, %c0_26] : memref<2x32x128xf32, #tpu.memory_space<vmem>>, vector<1x32x128xf32>
    %16 = vector.shape_cast %15 : vector<1x32x128xf32> to vector<32x128xf32>
    %c0_27 = arith.constant 0 : index
    %c0_28 = arith.constant 0 : index
    %c0_29 = arith.constant 0 : index
    %17 = vector.load %arg12[%c0_27, %c0_28, %c0_29] : memref<2x32x128xf32, #tpu.memory_space<vmem>>, vector<1x32x128xf32>
    %18 = vector.shape_cast %17 : vector<1x32x128xf32> to vector<32x128xf32>
    %c0_30 = arith.constant 0 : index
    %c0_31 = arith.constant 0 : index
    %c0_32 = arith.constant 0 : index
    %19 = vector.load %arg13[%c0_30, %c0_31, %c0_32] : memref<2x32x128xf32, #tpu.memory_space<vmem>>, vector<1x32x128xf32>
    %20 = vector.shape_cast %19 : vector<1x32x128xf32> to vector<32x128xf32>
    %c0_33 = arith.constant 0 : index
    %c0_34 = arith.constant 0 : index
    %c0_35 = arith.constant 0 : index
    %21 = vector.load %arg14[%c0_33, %c0_34, %c0_35] : memref<2x32x128xf32, #tpu.memory_space<vmem>>, vector<1x32x128xf32>
    %22 = vector.shape_cast %21 : vector<1x32x128xf32> to vector<32x128xf32>
    %c0_36 = arith.constant 0 : index
    %c0_37 = arith.constant 0 : index
    %c0_38 = arith.constant 0 : index
    %23 = vector.load %arg15[%c0_36, %c0_37, %c0_38] : memref<2x32x8xf32, #tpu.memory_space<vmem>>, vector<1x32x8xf32>
    %24 = vector.shape_cast %23 : vector<1x32x8xf32> to vector<32x8xf32>
    %cst = arith.constant dense<0.000000e+00> : vector<16x32xf32>
    %25 = tpu.matmul %0, %6, %cst {dimension_numbers = #tpu.dot_dimension_numbers<[1], [0], [0], [1], [0, 0, 1, 1], [], []>} : vector<16x32xf32>, vector<32x32xf32>, vector<16x32xf32> -> vector<16x32xf32>
    %cst_39 = arith.constant dense<0.000000e+00> : vector<16x32xf32>
    %26 = tpu.matmul %1, %8, %cst_39 {dimension_numbers = #tpu.dot_dimension_numbers<[1], [0], [0], [1], [0, 0, 1, 1], [], []>} : vector<16x32xf32>, vector<32x32xf32>, vector<16x32xf32> -> vector<16x32xf32>
    %cst_40 = arith.constant dense<0.000000e+00> : vector<16x32xf32>
    %27 = tpu.matmul %1, %10, %cst_40 {dimension_numbers = #tpu.dot_dimension_numbers<[1], [0], [0], [1], [0, 0, 1, 1], [], []>} : vector<16x32xf32>, vector<32x32xf32>, vector<16x32xf32> -> vector<16x32xf32>
    %28 = vector.extract_strided_slice %25 {offsets = [0, 0], sizes = [8, 32], strides = [1, 1]} : vector<16x32xf32> to vector<8x32xf32>
    %29 = vector.extract_strided_slice %26 {offsets = [0, 0], sizes = [8, 32], strides = [1, 1]} : vector<16x32xf32> to vector<8x32xf32>
    %30 = vector.extract_strided_slice %27 {offsets = [0, 0], sizes = [8, 32], strides = [1, 1]} : vector<16x32xf32> to vector<8x32xf32>
    %31 = tpu.concatenate %28, %28, %28, %28 in 0 : vector<8x32xf32>, vector<8x32xf32>, vector<8x32xf32>, vector<8x32xf32> -> vector<32x32xf32>
    %32 = arith.mulf %31, %4 : vector<32x32xf32>
    %cst_41 = arith.constant dense<0.000000e+00> : vector<32x8xf32>
    %33 = tpu.matmul %32, %29, %cst_41 {dimension_numbers = #tpu.dot_dimension_numbers<[1], [1], [0], [0], [0, 0, 1, 0], [], []>} : vector<32x32xf32>, vector<8x32xf32>, vector<32x8xf32> -> vector<32x8xf32>
    %cst_42 = arith.constant dense<0.000000e+00> : vector<32x128xf32>
    %34 = tpu.matmul %33, %2, %cst_42 {dimension_numbers = #tpu.dot_dimension_numbers<[1], [0], [0], [1], [0, 0, 1, 1], [], []>} : vector<32x8xf32>, vector<8x128xf32>, vector<32x128xf32> -> vector<32x128xf32>
    %35 = arith.mulf %34, %16 : vector<32x128xf32>
    %c0_43 = arith.constant 0 : index
    %c0_44 = arith.constant 0 : index
    %c0_45 = arith.constant 0 : index
    %c0_46 = arith.constant 0 : index
    %36 = vector.load %arg2[%c0_43, %c0_44, %c0_45, %c0_46] : memref<2x2x32x128xf32, #tpu.memory_space<vmem>>, vector<1x1x32x128xf32>
    %37 = vector.shape_cast %36 : vector<1x1x32x128xf32> to vector<32x128xf32>
    %38 = arith.mulf %37, %18 : vector<32x128xf32>
    %39 = arith.addf %35, %38 : vector<32x128xf32>
    %40 = arith.addf %39, %20 : vector<32x128xf32>
    %cst_47 = arith.constant 0.000000e+00 : f32
    %41 = vector.broadcast %cst_47 : f32 to vector<32x128xf32>
    %42 = arith.maximumf %40, %41 : vector<32x128xf32>
    %43 = arith.mulf %42, %22 : vector<32x128xf32>
    %cst_48 = arith.constant dense<0.000000e+00> : vector<32x8xf32>
    %44 = tpu.matmul %43, %3, %cst_48 {dimension_numbers = #tpu.dot_dimension_numbers<[1], [0], [0], [1], [0, 0, 1, 1], [], []>} : vector<32x128xf32>, vector<128x8xf32>, vector<32x8xf32> -> vector<32x8xf32>
    %45 = arith.addf %44, %24 : vector<32x8xf32>
    %cst_49 = arith.constant dense<0xFF800000> : vector<32xf32>
    %46 = vector.multi_reduction <maximumf>, %45, %cst_49 [1] : vector<32x8xf32> to vector<32xf32>
    %47 = vector.shape_cast %46 : vector<32xf32> to vector<32x1xf32>
    %48 = vector.broadcast %47 : vector<32x1xf32> to vector<32x8xf32>
    %49 = arith.subf %45, %48 : vector<32x8xf32>
    %50 = math.exp %49 : vector<32x8xf32>
    %cst_50 = arith.constant dense<0.000000e+00> : vector<32xf32>
    %51 = vector.multi_reduction <add>, %50, %cst_50 [1] : vector<32x8xf32> to vector<32xf32>
    %52 = vector.shape_cast %51 : vector<32xf32> to vector<32x1xf32>
    %53 = tpu.reciprocal %52 {approx = true} : vector<32x1xf32> -> vector<32x1xf32>
    %54 = vector.broadcast %53 : vector<32x1xf32> to vector<32x8xf32>
    %55 = arith.mulf %50, %54 : vector<32x8xf32>
    %cst_51 = arith.constant dense<0.000000e+00> : vector<32x32xf32>
    %56 = tpu.matmul %55, %30, %cst_51 {dimension_numbers = #tpu.dot_dimension_numbers<[1], [0], [0], [1], [0, 0, 1, 1], [], []>} : vector<32x8xf32>, vector<8x32xf32>, vector<32x32xf32> -> vector<32x32xf32>
    %57 = arith.mulf %56, %4 : vector<32x32xf32>
    %58 = vector.extract_strided_slice %57 {offsets = [0, 0], sizes = [8, 32], strides = [1, 1]} : vector<32x32xf32> to vector<8x32xf32>
    %59 = vector.extract_strided_slice %57 {offsets = [8, 0], sizes = [8, 32], strides = [1, 1]} : vector<32x32xf32> to vector<8x32xf32>
    %60 = arith.addf %58, %59 : vector<8x32xf32>
    %61 = vector.extract_strided_slice %57 {offsets = [16, 0], sizes = [8, 32], strides = [1, 1]} : vector<32x32xf32> to vector<8x32xf32>
    %62 = arith.addf %60, %61 : vector<8x32xf32>
    %63 = vector.extract_strided_slice %57 {offsets = [24, 0], sizes = [8, 32], strides = [1, 1]} : vector<32x32xf32> to vector<8x32xf32>
    %64 = arith.addf %62, %63 : vector<8x32xf32>
    %c0_52 = arith.constant 0 : index
    %c0_53 = arith.constant 0 : index
    %c0_54 = arith.constant 0 : index
    %65 = vector.load %arg25[%c0_52, %c0_53, %c0_54] : memref<2x16x32xf32, #tpu.memory_space<vmem>>, vector<1x8x32xf32>
    %66 = vector.shape_cast %65 : vector<1x8x32xf32> to vector<8x32xf32>
    %67 = vector.shape_cast %64 : vector<8x32xf32> to vector<1x8x32xf32>
    tpu.vector_store %arg25[%c0_52, %c0_53, %c0_54], %67 {strides = array<i32>} : memref<2x16x32xf32, #tpu.memory_space<vmem>>, vector<1x8x32xf32>,
    %68 = vector.extract_strided_slice %25 {offsets = [8, 0], sizes = [8, 32], strides = [1, 1]} : vector<16x32xf32> to vector<8x32xf32>
    %69 = vector.extract_strided_slice %26 {offsets = [8, 0], sizes = [8, 32], strides = [1, 1]} : vector<16x32xf32> to vector<8x32xf32>
    %70 = vector.extract_strided_slice %27 {offsets = [8, 0], sizes = [8, 32], strides = [1, 1]} : vector<16x32xf32> to vector<8x32xf32>
    %71 = tpu.concatenate %68, %68, %68, %68 in 0 : vector<8x32xf32>, vector<8x32xf32>, vector<8x32xf32>, vector<8x32xf32> -> vector<32x32xf32>
    %72 = arith.mulf %71, %4 : vector<32x32xf32>
    %cst_55 = arith.constant dense<0.000000e+00> : vector<32x8xf32>
    %73 = tpu.matmul %72, %69, %cst_55 {dimension_numbers = #tpu.dot_dimension_numbers<[1], [1], [0], [0], [0, 0, 1, 0], [], []>} : vector<32x32xf32>, vector<8x32xf32>, vector<32x8xf32> -> vector<32x8xf32>
    %cst_56 = arith.constant dense<0.000000e+00> : vector<32x128xf32>
    %74 = tpu.matmul %73, %2, %cst_56 {dimension_numbers = #tpu.dot_dimension_numbers<[1], [0], [0], [1], [0, 0, 1, 1], [], []>} : vector<32x8xf32>, vector<8x128xf32>, vector<32x128xf32> -> vector<32x128xf32>
    %75 = arith.mulf %74, %16 : vector<32x128xf32>
    %c0_57 = arith.constant 0 : index
    %c1 = arith.constant 1 : index
    %c0_58 = arith.constant 0 : index
    %c0_59 = arith.constant 0 : index
    %76 = vector.load %arg2[%c0_57, %c1, %c0_58, %c0_59] : memref<2x2x32x128xf32, #tpu.memory_space<vmem>>, vector<1x1x32x128xf32>
    %77 = vector.shape_cast %76 : vector<1x1x32x128xf32> to vector<32x128xf32>
    %78 = arith.mulf %77, %18 : vector<32x128xf32>
    %79 = arith.addf %75, %78 : vector<32x128xf32>
    %80 = arith.addf %79, %20 : vector<32x128xf32>
    %cst_60 = arith.constant 0.000000e+00 : f32
    %81 = vector.broadcast %cst_60 : f32 to vector<32x128xf32>
    %82 = arith.maximumf %80, %81 : vector<32x128xf32>
    %83 = arith.mulf %82, %22 : vector<32x128xf32>
    %cst_61 = arith.constant dense<0.000000e+00> : vector<32x8xf32>
    %84 = tpu.matmul %83, %3, %cst_61 {dimension_numbers = #tpu.dot_dimension_numbers<[1], [0], [0], [1], [0, 0, 1, 1], [], []>} : vector<32x128xf32>, vector<128x8xf32>, vector<32x8xf32> -> vector<32x8xf32>
    %85 = arith.addf %84, %24 : vector<32x8xf32>
    %cst_62 = arith.constant dense<0xFF800000> : vector<32xf32>
    %86 = vector.multi_reduction <maximumf>, %85, %cst_62 [1] : vector<32x8xf32> to vector<32xf32>
    %87 = vector.shape_cast %86 : vector<32xf32> to vector<32x1xf32>
    %88 = vector.broadcast %87 : vector<32x1xf32> to vector<32x8xf32>
    %89 = arith.subf %85, %88 : vector<32x8xf32>
    %90 = math.exp %89 : vector<32x8xf32>
    %cst_63 = arith.constant dense<0.000000e+00> : vector<32xf32>
    %91 = vector.multi_reduction <add>, %90, %cst_63 [1] : vector<32x8xf32> to vector<32xf32>
    %92 = vector.shape_cast %91 : vector<32xf32> to vector<32x1xf32>
    %93 = tpu.reciprocal %92 {approx = true} : vector<32x1xf32> -> vector<32x1xf32>
    %94 = vector.broadcast %93 : vector<32x1xf32> to vector<32x8xf32>
    %95 = arith.mulf %90, %94 : vector<32x8xf32>
    %cst_64 = arith.constant dense<0.000000e+00> : vector<32x32xf32>
    %96 = tpu.matmul %95, %70, %cst_64 {dimension_numbers = #tpu.dot_dimension_numbers<[1], [0], [0], [1], [0, 0, 1, 1], [], []>} : vector<32x8xf32>, vector<8x32xf32>, vector<32x32xf32> -> vector<32x32xf32>
    %97 = arith.mulf %96, %4 : vector<32x32xf32>
    %98 = vector.extract_strided_slice %97 {offsets = [0, 0], sizes = [8, 32], strides = [1, 1]} : vector<32x32xf32> to vector<8x32xf32>
    %99 = vector.extract_strided_slice %97 {offsets = [8, 0], sizes = [8, 32], strides = [1, 1]} : vector<32x32xf32> to vector<8x32xf32>
    %100 = arith.addf %98, %99 : vector<8x32xf32>
    %101 = vector.extract_strided_slice %97 {offsets = [16, 0], sizes = [8, 32], strides = [1, 1]} : vector<32x32xf32> to vector<8x32xf32>
    %102 = arith.addf %100, %101 : vector<8x32xf32>
    %103 = vector.extract_strided_slice %97 {offsets = [24, 0], sizes = [8, 32], strides = [1, 1]} : vector<32x32xf32> to vector<8x32xf32>
    %104 = arith.addf %102, %103 : vector<8x32xf32>
    %c0_65 = arith.constant 0 : index
    %c8 = arith.constant 8 : index
    %c0_66 = arith.constant 0 : index
    %105 = vector.load %arg25[%c0_65, %c8, %c0_66] : memref<2x16x32xf32, #tpu.memory_space<vmem>>, vector<1x8x32xf32>
    %106 = vector.shape_cast %105 : vector<1x8x32xf32> to vector<8x32xf32>
    %107 = vector.shape_cast %104 : vector<8x32xf32> to vector<1x8x32xf32>
    tpu.vector_store %arg25[%c0_65, %c8, %c0_66], %107 {strides = array<i32>} : memref<2x16x32xf32, #tpu.memory_space<vmem>>, vector<1x8x32xf32>,
    %c0_67 = arith.constant 0 : index
    %c0_68 = arith.constant 0 : index
    %c0_69 = arith.constant 0 : index
    %108 = vector.load %arg25[%c0_67, %c0_68, %c0_69] : memref<2x16x32xf32, #tpu.memory_space<vmem>>, vector<1x16x32xf32>
    %109 = vector.shape_cast %108 : vector<1x16x32xf32> to vector<16x32xf32>
    %cst_70 = arith.constant dense<0.000000e+00> : vector<16x32xf32>
    %110 = tpu.matmul %109, %12, %cst_70 {dimension_numbers = #tpu.dot_dimension_numbers<[1], [0], [0], [1], [0, 0, 1, 1], [], []>} : vector<16x32xf32>, vector<32x32xf32>, vector<16x32xf32> -> vector<16x32xf32>
    %111 = vector.broadcast %14 : vector<1x32xf32> to vector<16x32xf32>
    %112 = arith.addf %110, %111 : vector<16x32xf32>
    %c0_71 = arith.constant 0 : index
    %c0_72 = arith.constant 0 : index
    %c0_73 = arith.constant 0 : index
    %113 = vector.load %arg16[%c0_71, %c0_72, %c0_73] : memref<2x1x32xf32, #tpu.memory_space<vmem>>, vector<1x1x32xf32>
    %114 = vector.shape_cast %113 : vector<1x1x32xf32> to vector<1x32xf32>
    %c0_74 = arith.constant 0 : index
    %c0_75 = arith.constant 0 : index
    %c0_76 = arith.constant 0 : index
    %115 = vector.load %arg17[%c0_74, %c0_75, %c0_76] : memref<2x1x32xf32, #tpu.memory_space<vmem>>, vector<1x1x32xf32>
    %116 = vector.shape_cast %115 : vector<1x1x32xf32> to vector<1x32xf32>
    %117 = arith.addf %0, %112 : vector<16x32xf32>
    %118 = vector.extract_strided_slice %117 {offsets = [0, 0], sizes = [8, 32], strides = [1, 1]} : vector<16x32xf32> to vector<8x32xf32>
    %cst_77 = arith.constant dense<0.000000e+00> : vector<32xf32>
    %119 = vector.multi_reduction <add>, %118, %cst_77 [0] : vector<8x32xf32> to vector<32xf32>
    %120 = vector.shape_cast %119 : vector<32xf32> to vector<1x32xf32>
    %cst_78 = arith.constant 8.000000e+00 : f32
    %121 = vector.broadcast %cst_78 : f32 to vector<1x32xf32>
    %122 = arith.divf %120, %121 : vector<1x32xf32>
    %123 = vector.broadcast %122 : vector<1x32xf32> to vector<8x32xf32>
    %124 = arith.subf %118, %123 : vector<8x32xf32>
    %125 = arith.mulf %124, %124 : vector<8x32xf32>
    %cst_79 = arith.constant dense<0.000000e+00> : vector<32xf32>
    %126 = vector.multi_reduction <add>, %125, %cst_79 [0] : vector<8x32xf32> to vector<32xf32>
    %127 = vector.shape_cast %126 : vector<32xf32> to vector<1x32xf32>
    %cst_80 = arith.constant 8.000000e+00 : f32
    %128 = vector.broadcast %cst_80 : f32 to vector<1x32xf32>
    %129 = arith.divf %127, %128 : vector<1x32xf32>
    %cst_81 = arith.constant 9.99999974E-6 : f32
    %130 = vector.broadcast %cst_81 : f32 to vector<1x32xf32>
    %131 = arith.addf %129, %130 : vector<1x32xf32>
    %132 = math.rsqrt %131 : vector<1x32xf32>
    %133 = vector.broadcast %132 : vector<1x32xf32> to vector<8x32xf32>
    %134 = arith.mulf %124, %133 : vector<8x32xf32>
    %135 = vector.extract_strided_slice %117 {offsets = [8, 0], sizes = [8, 32], strides = [1, 1]} : vector<16x32xf32> to vector<8x32xf32>
    %cst_82 = arith.constant dense<0.000000e+00> : vector<32xf32>
    %136 = vector.multi_reduction <add>, %135, %cst_82 [0] : vector<8x32xf32> to vector<32xf32>
    %137 = vector.shape_cast %136 : vector<32xf32> to vector<1x32xf32>
    %cst_83 = arith.constant 8.000000e+00 : f32
    %138 = vector.broadcast %cst_83 : f32 to vector<1x32xf32>
    %139 = arith.divf %137, %138 : vector<1x32xf32>
    %140 = vector.broadcast %139 : vector<1x32xf32> to vector<8x32xf32>
    %141 = arith.subf %135, %140 : vector<8x32xf32>
    %142 = arith.mulf %141, %141 : vector<8x32xf32>
    %cst_84 = arith.constant dense<0.000000e+00> : vector<32xf32>
    %143 = vector.multi_reduction <add>, %142, %cst_84 [0] : vector<8x32xf32> to vector<32xf32>
    %144 = vector.shape_cast %143 : vector<32xf32> to vector<1x32xf32>
    %cst_85 = arith.constant 8.000000e+00 : f32
    %145 = vector.broadcast %cst_85 : f32 to vector<1x32xf32>
    %146 = arith.divf %144, %145 : vector<1x32xf32>
    %cst_86 = arith.constant 9.99999974E-6 : f32
    %147 = vector.broadcast %cst_86 : f32 to vector<1x32xf32>
    %148 = arith.addf %146, %147 : vector<1x32xf32>
    %149 = math.rsqrt %148 : vector<1x32xf32>
    %150 = vector.broadcast %149 : vector<1x32xf32> to vector<8x32xf32>
    %151 = arith.mulf %141, %150 : vector<8x32xf32>
    %152 = tpu.concatenate %134, %151 in 0 : vector<8x32xf32>, vector<8x32xf32> -> vector<16x32xf32>
    %153 = vector.broadcast %114 : vector<1x32xf32> to vector<16x32xf32>
    %154 = arith.mulf %152, %153 : vector<16x32xf32>
    %155 = vector.broadcast %116 : vector<1x32xf32> to vector<16x32xf32>
    %156 = arith.addf %154, %155 : vector<16x32xf32>
    %c0_87 = arith.constant 0 : index
    %c0_88 = arith.constant 0 : index
    %c0_89 = arith.constant 0 : index
    %157 = vector.load %arg18[%c0_87, %c0_88, %c0_89] : memref<2x32x64xf32, #tpu.memory_space<vmem>>, vector<1x32x64xf32>
    %158 = vector.shape_cast %157 : vector<1x32x64xf32> to vector<32x64xf32>
    %cst_90 = arith.constant dense<0.000000e+00> : vector<16x64xf32>
    %159 = tpu.matmul %156, %158, %cst_90 {dimension_numbers = #tpu.dot_dimension_numbers<[1], [0], [0], [1], [0, 0, 1, 1], [], []>} : vector<16x32xf32>, vector<32x64xf32>, vector<16x64xf32> -> vector<16x64xf32>
    %c0_91 = arith.constant 0 : index
    %c0_92 = arith.constant 0 : index
    %c0_93 = arith.constant 0 : index
    %160 = vector.load %arg19[%c0_91, %c0_92, %c0_93] : memref<2x1x64xf32, #tpu.memory_space<vmem>>, vector<1x1x64xf32>
    %161 = vector.shape_cast %160 : vector<1x1x64xf32> to vector<1x64xf32>
    %162 = vector.broadcast %161 : vector<1x64xf32> to vector<16x64xf32>
    %163 = arith.addf %159, %162 : vector<16x64xf32>
    %cst_94 = arith.constant 0.000000e+00 : f32
    %164 = vector.broadcast %cst_94 : f32 to vector<16x64xf32>
    %165 = arith.maximumf %163, %164 : vector<16x64xf32>
    %c0_95 = arith.constant 0 : index
    %c0_96 = arith.constant 0 : index
    %c0_97 = arith.constant 0 : index
    %166 = vector.load %arg20[%c0_95, %c0_96, %c0_97] : memref<2x64x32xf32, #tpu.memory_space<vmem>>, vector<1x64x32xf32>
    %167 = vector.shape_cast %166 : vector<1x64x32xf32> to vector<64x32xf32>
    %cst_98 = arith.constant dense<0.000000e+00> : vector<16x32xf32>
    %168 = tpu.matmul %165, %167, %cst_98 {dimension_numbers = #tpu.dot_dimension_numbers<[1], [0], [0], [1], [0, 0, 1, 1], [], []>} : vector<16x64xf32>, vector<64x32xf32>, vector<16x32xf32> -> vector<16x32xf32>
    %c0_99 = arith.constant 0 : index
    %c0_100 = arith.constant 0 : index
    %c0_101 = arith.constant 0 : index
    %169 = vector.load %arg21[%c0_99, %c0_100, %c0_101] : memref<2x1x32xf32, #tpu.memory_space<vmem>>, vector<1x1x32xf32>
    %170 = vector.shape_cast %169 : vector<1x1x32xf32> to vector<1x32xf32>
    %171 = vector.broadcast %170 : vector<1x32xf32> to vector<16x32xf32>
    %172 = arith.addf %168, %171 : vector<16x32xf32>
    %c0_102 = arith.constant 0 : index
    %c0_103 = arith.constant 0 : index
    %c0_104 = arith.constant 0 : index
    %173 = vector.load %arg22[%c0_102, %c0_103, %c0_104] : memref<2x1x32xf32, #tpu.memory_space<vmem>>, vector<1x1x32xf32>
    %174 = vector.shape_cast %173 : vector<1x1x32xf32> to vector<1x32xf32>
    %c0_105 = arith.constant 0 : index
    %c0_106 = arith.constant 0 : index
    %c0_107 = arith.constant 0 : index
    %175 = vector.load %arg23[%c0_105, %c0_106, %c0_107] : memref<2x1x32xf32, #tpu.memory_space<vmem>>, vector<1x1x32xf32>
    %176 = vector.shape_cast %175 : vector<1x1x32xf32> to vector<1x32xf32>
    %177 = arith.addf %156, %172 : vector<16x32xf32>
    %178 = vector.extract_strided_slice %177 {offsets = [0, 0], sizes = [8, 32], strides = [1, 1]} : vector<16x32xf32> to vector<8x32xf32>
    %cst_108 = arith.constant dense<0.000000e+00> : vector<32xf32>
    %179 = vector.multi_reduction <add>, %178, %cst_108 [0] : vector<8x32xf32> to vector<32xf32>
    %180 = vector.shape_cast %179 : vector<32xf32> to vector<1x32xf32>
    %cst_109 = arith.constant 8.000000e+00 : f32
    %181 = vector.broadcast %cst_109 : f32 to vector<1x32xf32>
    %182 = arith.divf %180, %181 : vector<1x32xf32>
    %183 = vector.broadcast %182 : vector<1x32xf32> to vector<8x32xf32>
    %184 = arith.subf %178, %183 : vector<8x32xf32>
    %185 = arith.mulf %184, %184 : vector<8x32xf32>
    %cst_110 = arith.constant dense<0.000000e+00> : vector<32xf32>
    %186 = vector.multi_reduction <add>, %185, %cst_110 [0] : vector<8x32xf32> to vector<32xf32>
    %187 = vector.shape_cast %186 : vector<32xf32> to vector<1x32xf32>
    %cst_111 = arith.constant 8.000000e+00 : f32
    %188 = vector.broadcast %cst_111 : f32 to vector<1x32xf32>
    %189 = arith.divf %187, %188 : vector<1x32xf32>
    %cst_112 = arith.constant 9.99999974E-6 : f32
    %190 = vector.broadcast %cst_112 : f32 to vector<1x32xf32>
    %191 = arith.addf %189, %190 : vector<1x32xf32>
    %192 = math.rsqrt %191 : vector<1x32xf32>
    %193 = vector.broadcast %192 : vector<1x32xf32> to vector<8x32xf32>
    %194 = arith.mulf %184, %193 : vector<8x32xf32>
    %195 = vector.extract_strided_slice %177 {offsets = [8, 0], sizes = [8, 32], strides = [1, 1]} : vector<16x32xf32> to vector<8x32xf32>
    %cst_113 = arith.constant dense<0.000000e+00> : vector<32xf32>
    %196 = vector.multi_reduction <add>, %195, %cst_113 [0] : vector<8x32xf32> to vector<32xf32>
    %197 = vector.shape_cast %196 : vector<32xf32> to vector<1x32xf32>
    %cst_114 = arith.constant 8.000000e+00 : f32
    %198 = vector.broadcast %cst_114 : f32 to vector<1x32xf32>
    %199 = arith.divf %197, %198 : vector<1x32xf32>
    %200 = vector.broadcast %199 : vector<1x32xf32> to vector<8x32xf32>
    %201 = arith.subf %195, %200 : vector<8x32xf32>
    %202 = arith.mulf %201, %201 : vector<8x32xf32>
    %cst_115 = arith.constant dense<0.000000e+00> : vector<32xf32>
    %203 = vector.multi_reduction <add>, %202, %cst_115 [0] : vector<8x32xf32> to vector<32xf32>
    %204 = vector.shape_cast %203 : vector<32xf32> to vector<1x32xf32>
    %cst_116 = arith.constant 8.000000e+00 : f32
    %205 = vector.broadcast %cst_116 : f32 to vector<1x32xf32>
    %206 = arith.divf %204, %205 : vector<1x32xf32>
    %cst_117 = arith.constant 9.99999974E-6 : f32
    %207 = vector.broadcast %cst_117 : f32 to vector<1x32xf32>
    %208 = arith.addf %206, %207 : vector<1x32xf32>
    %209 = math.rsqrt %208 : vector<1x32xf32>
    %210 = vector.broadcast %209 : vector<1x32xf32> to vector<8x32xf32>
    %211 = arith.mulf %201, %210 : vector<8x32xf32>
    %212 = tpu.concatenate %194, %211 in 0 : vector<8x32xf32>, vector<8x32xf32> -> vector<16x32xf32>
    %213 = vector.broadcast %174 : vector<1x32xf32> to vector<16x32xf32>
    %214 = arith.mulf %212, %213 : vector<16x32xf32>
    %215 = vector.broadcast %176 : vector<1x32xf32> to vector<16x32xf32>
    %216 = arith.addf %214, %215 : vector<16x32xf32>
    %c0_118 = arith.constant 0 : index
    %c0_119 = arith.constant 0 : index
    %c0_120 = arith.constant 0 : index
    %217 = vector.load %arg24[%c0_118, %c0_119, %c0_120] : memref<2x16x32xf32, #tpu.memory_space<vmem>>, vector<1x16x32xf32>
    %218 = vector.shape_cast %217 : vector<1x16x32xf32> to vector<16x32xf32>
    %219 = vector.shape_cast %216 : vector<16x32xf32> to vector<1x16x32xf32>
    tpu.vector_store %arg24[%c0_118, %c0_119, %c0_120], %219 {strides = array<i32>} : memref<2x16x32xf32, #tpu.memory_space<vmem>>, vector<1x16x32xf32>,
    %c1_121 = arith.constant 1 : index
    %c0_122 = arith.constant 0 : index
    %c0_123 = arith.constant 0 : index
    %220 = vector.load %arg6[%c1_121, %c0_122, %c0_123] : memref<2x32x32xf32, #tpu.memory_space<vmem>>, vector<1x32x32xf32>
    %221 = vector.shape_cast %220 : vector<1x32x32xf32> to vector<32x32xf32>
    %c1_124 = arith.constant 1 : index
    %c0_125 = arith.constant 0 : index
    %c0_126 = arith.constant 0 : index
    %222 = vector.load %arg7[%c1_124, %c0_125, %c0_126] : memref<2x32x32xf32, #tpu.memory_space<vmem>>, vector<1x32x32xf32>
    %223 = vector.shape_cast %222 : vector<1x32x32xf32> to vector<32x32xf32>
    %c1_127 = arith.constant 1 : index
    %c0_128 = arith.constant 0 : index
    %c0_129 = arith.constant 0 : index
    %224 = vector.load %arg8[%c1_127, %c0_128, %c0_129] : memref<2x32x32xf32, #tpu.memory_space<vmem>>, vector<1x32x32xf32>
    %225 = vector.shape_cast %224 : vector<1x32x32xf32> to vector<32x32xf32>
    %c1_130 = arith.constant 1 : index
    %c0_131 = arith.constant 0 : index
    %c0_132 = arith.constant 0 : index
    %226 = vector.load %arg9[%c1_130, %c0_131, %c0_132] : memref<2x32x32xf32, #tpu.memory_space<vmem>>, vector<1x32x32xf32>
    %227 = vector.shape_cast %226 : vector<1x32x32xf32> to vector<32x32xf32>
    %c1_133 = arith.constant 1 : index
    %c0_134 = arith.constant 0 : index
    %c0_135 = arith.constant 0 : index
    %228 = vector.load %arg10[%c1_133, %c0_134, %c0_135] : memref<2x1x32xf32, #tpu.memory_space<vmem>>, vector<1x1x32xf32>
    %229 = vector.shape_cast %228 : vector<1x1x32xf32> to vector<1x32xf32>
    %c1_136 = arith.constant 1 : index
    %c0_137 = arith.constant 0 : index
    %c0_138 = arith.constant 0 : index
    %230 = vector.load %arg11[%c1_136, %c0_137, %c0_138] : memref<2x32x128xf32, #tpu.memory_space<vmem>>, vector<1x32x128xf32>
    %231 = vector.shape_cast %230 : vector<1x32x128xf32> to vector<32x128xf32>
    %c1_139 = arith.constant 1 : index
    %c0_140 = arith.constant 0 : index
    %c0_141 = arith.constant 0 : index
    %232 = vector.load %arg12[%c1_139, %c0_140, %c0_141] : memref<2x32x128xf32, #tpu.memory_space<vmem>>, vector<1x32x128xf32>
    %233 = vector.shape_cast %232 : vector<1x32x128xf32> to vector<32x128xf32>
    %c1_142 = arith.constant 1 : index
    %c0_143 = arith.constant 0 : index
    %c0_144 = arith.constant 0 : index
    %234 = vector.load %arg13[%c1_142, %c0_143, %c0_144] : memref<2x32x128xf32, #tpu.memory_space<vmem>>, vector<1x32x128xf32>
    %235 = vector.shape_cast %234 : vector<1x32x128xf32> to vector<32x128xf32>
    %c1_145 = arith.constant 1 : index
    %c0_146 = arith.constant 0 : index
    %c0_147 = arith.constant 0 : index
    %236 = vector.load %arg14[%c1_145, %c0_146, %c0_147] : memref<2x32x128xf32, #tpu.memory_space<vmem>>, vector<1x32x128xf32>
    %237 = vector.shape_cast %236 : vector<1x32x128xf32> to vector<32x128xf32>
    %c1_148 = arith.constant 1 : index
    %c0_149 = arith.constant 0 : index
    %c0_150 = arith.constant 0 : index
    %238 = vector.load %arg15[%c1_148, %c0_149, %c0_150] : memref<2x32x8xf32, #tpu.memory_space<vmem>>, vector<1x32x8xf32>
    %239 = vector.shape_cast %238 : vector<1x32x8xf32> to vector<32x8xf32>
    %cst_151 = arith.constant dense<0.000000e+00> : vector<16x32xf32>
    %240 = tpu.matmul %1, %221, %cst_151 {dimension_numbers = #tpu.dot_dimension_numbers<[1], [0], [0], [1], [0, 0, 1, 1], [], []>} : vector<16x32xf32>, vector<32x32xf32>, vector<16x32xf32> -> vector<16x32xf32>
    %cst_152 = arith.constant dense<0.000000e+00> : vector<16x32xf32>
    %241 = tpu.matmul %0, %223, %cst_152 {dimension_numbers = #tpu.dot_dimension_numbers<[1], [0], [0], [1], [0, 0, 1, 1], [], []>} : vector<16x32xf32>, vector<32x32xf32>, vector<16x32xf32> -> vector<16x32xf32>
    %cst_153 = arith.constant dense<0.000000e+00> : vector<16x32xf32>
    %242 = tpu.matmul %0, %225, %cst_153 {dimension_numbers = #tpu.dot_dimension_numbers<[1], [0], [0], [1], [0, 0, 1, 1], [], []>} : vector<16x32xf32>, vector<32x32xf32>, vector<16x32xf32> -> vector<16x32xf32>
    %243 = vector.extract_strided_slice %240 {offsets = [0, 0], sizes = [8, 32], strides = [1, 1]} : vector<16x32xf32> to vector<8x32xf32>
    %244 = vector.extract_strided_slice %241 {offsets = [0, 0], sizes = [8, 32], strides = [1, 1]} : vector<16x32xf32> to vector<8x32xf32>
    %245 = vector.extract_strided_slice %242 {offsets = [0, 0], sizes = [8, 32], strides = [1, 1]} : vector<16x32xf32> to vector<8x32xf32>
    %246 = tpu.concatenate %243, %243, %243, %243 in 0 : vector<8x32xf32>, vector<8x32xf32>, vector<8x32xf32>, vector<8x32xf32> -> vector<32x32xf32>
    %247 = arith.mulf %246, %4 : vector<32x32xf32>
    %cst_154 = arith.constant dense<0.000000e+00> : vector<32x8xf32>
    %248 = tpu.matmul %247, %244, %cst_154 {dimension_numbers = #tpu.dot_dimension_numbers<[1], [1], [0], [0], [0, 0, 1, 0], [], []>} : vector<32x32xf32>, vector<8x32xf32>, vector<32x8xf32> -> vector<32x8xf32>
    %cst_155 = arith.constant dense<0.000000e+00> : vector<32x128xf32>
    %249 = tpu.matmul %248, %2, %cst_155 {dimension_numbers = #tpu.dot_dimension_numbers<[1], [0], [0], [1], [0, 0, 1, 1], [], []>} : vector<32x8xf32>, vector<8x128xf32>, vector<32x128xf32> -> vector<32x128xf32>
    %250 = arith.mulf %249, %231 : vector<32x128xf32>
    %c1_156 = arith.constant 1 : index
    %c0_157 = arith.constant 0 : index
    %c0_158 = arith.constant 0 : index
    %c0_159 = arith.constant 0 : index
    %251 = vector.load %arg2[%c1_156, %c0_157, %c0_158, %c0_159] : memref<2x2x32x128xf32, #tpu.memory_space<vmem>>, vector<1x1x32x128xf32>
    %252 = vector.shape_cast %251 : vector<1x1x32x128xf32> to vector<32x128xf32>
    %253 = arith.mulf %252, %233 : vector<32x128xf32>
    %254 = arith.addf %250, %253 : vector<32x128xf32>
    %255 = arith.addf %254, %235 : vector<32x128xf32>
    %cst_160 = arith.constant 0.000000e+00 : f32
    %256 = vector.broadcast %cst_160 : f32 to vector<32x128xf32>
    %257 = arith.maximumf %255, %256 : vector<32x128xf32>
    %258 = arith.mulf %257, %237 : vector<32x128xf32>
    %cst_161 = arith.constant dense<0.000000e+00> : vector<32x8xf32>
    %259 = tpu.matmul %258, %3, %cst_161 {dimension_numbers = #tpu.dot_dimension_numbers<[1], [0], [0], [1], [0, 0, 1, 1], [], []>} : vector<32x128xf32>, vector<128x8xf32>, vector<32x8xf32> -> vector<32x8xf32>
    %260 = arith.addf %259, %239 : vector<32x8xf32>
    %cst_162 = arith.constant dense<0xFF800000> : vector<32xf32>
    %261 = vector.multi_reduction <maximumf>, %260, %cst_162 [1] : vector<32x8xf32> to vector<32xf32>
    %262 = vector.shape_cast %261 : vector<32xf32> to vector<32x1xf32>
    %263 = vector.broadcast %262 : vector<32x1xf32> to vector<32x8xf32>
    %264 = arith.subf %260, %263 : vector<32x8xf32>
    %265 = math.exp %264 : vector<32x8xf32>
    %cst_163 = arith.constant dense<0.000000e+00> : vector<32xf32>
    %266 = vector.multi_reduction <add>, %265, %cst_163 [1] : vector<32x8xf32> to vector<32xf32>
    %267 = vector.shape_cast %266 : vector<32xf32> to vector<32x1xf32>
    %268 = tpu.reciprocal %267 {approx = true} : vector<32x1xf32> -> vector<32x1xf32>
    %269 = vector.broadcast %268 : vector<32x1xf32> to vector<32x8xf32>
    %270 = arith.mulf %265, %269 : vector<32x8xf32>
    %cst_164 = arith.constant dense<0.000000e+00> : vector<32x32xf32>
    %271 = tpu.matmul %270, %245, %cst_164 {dimension_numbers = #tpu.dot_dimension_numbers<[1], [0], [0], [1], [0, 0, 1, 1], [], []>} : vector<32x8xf32>, vector<8x32xf32>, vector<32x32xf32> -> vector<32x32xf32>
    %272 = arith.mulf %271, %4 : vector<32x32xf32>
    %273 = vector.extract_strided_slice %272 {offsets = [0, 0], sizes = [8, 32], strides = [1, 1]} : vector<32x32xf32> to vector<8x32xf32>
    %274 = vector.extract_strided_slice %272 {offsets = [8, 0], sizes = [8, 32], strides = [1, 1]} : vector<32x32xf32> to vector<8x32xf32>
    %275 = arith.addf %273, %274 : vector<8x32xf32>
    %276 = vector.extract_strided_slice %272 {offsets = [16, 0], sizes = [8, 32], strides = [1, 1]} : vector<32x32xf32> to vector<8x32xf32>
    %277 = arith.addf %275, %276 : vector<8x32xf32>
    %278 = vector.extract_strided_slice %272 {offsets = [24, 0], sizes = [8, 32], strides = [1, 1]} : vector<32x32xf32> to vector<8x32xf32>
    %279 = arith.addf %277, %278 : vector<8x32xf32>
    %c1_165 = arith.constant 1 : index
    %c0_166 = arith.constant 0 : index
    %c0_167 = arith.constant 0 : index
    %280 = vector.load %arg25[%c1_165, %c0_166, %c0_167] : memref<2x16x32xf32, #tpu.memory_space<vmem>>, vector<1x8x32xf32>
    %281 = vector.shape_cast %280 : vector<1x8x32xf32> to vector<8x32xf32>
    %282 = vector.shape_cast %279 : vector<8x32xf32> to vector<1x8x32xf32>
    tpu.vector_store %arg25[%c1_165, %c0_166, %c0_167], %282 {strides = array<i32>} : memref<2x16x32xf32, #tpu.memory_space<vmem>>, vector<1x8x32xf32>,
    %283 = vector.extract_strided_slice %240 {offsets = [8, 0], sizes = [8, 32], strides = [1, 1]} : vector<16x32xf32> to vector<8x32xf32>
    %284 = vector.extract_strided_slice %241 {offsets = [8, 0], sizes = [8, 32], strides = [1, 1]} : vector<16x32xf32> to vector<8x32xf32>
    %285 = vector.extract_strided_slice %242 {offsets = [8, 0], sizes = [8, 32], strides = [1, 1]} : vector<16x32xf32> to vector<8x32xf32>
    %286 = tpu.concatenate %283, %283, %283, %283 in 0 : vector<8x32xf32>, vector<8x32xf32>, vector<8x32xf32>, vector<8x32xf32> -> vector<32x32xf32>
    %287 = arith.mulf %286, %4 : vector<32x32xf32>
    %cst_168 = arith.constant dense<0.000000e+00> : vector<32x8xf32>
    %288 = tpu.matmul %287, %284, %cst_168 {dimension_numbers = #tpu.dot_dimension_numbers<[1], [1], [0], [0], [0, 0, 1, 0], [], []>} : vector<32x32xf32>, vector<8x32xf32>, vector<32x8xf32> -> vector<32x8xf32>
    %cst_169 = arith.constant dense<0.000000e+00> : vector<32x128xf32>
    %289 = tpu.matmul %288, %2, %cst_169 {dimension_numbers = #tpu.dot_dimension_numbers<[1], [0], [0], [1], [0, 0, 1, 1], [], []>} : vector<32x8xf32>, vector<8x128xf32>, vector<32x128xf32> -> vector<32x128xf32>
    %290 = arith.mulf %289, %231 : vector<32x128xf32>
    %c1_170 = arith.constant 1 : index
    %c1_171 = arith.constant 1 : index
    %c0_172 = arith.constant 0 : index
    %c0_173 = arith.constant 0 : index
    %291 = vector.load %arg2[%c1_170, %c1_171, %c0_172, %c0_173] : memref<2x2x32x128xf32, #tpu.memory_space<vmem>>, vector<1x1x32x128xf32>
    %292 = vector.shape_cast %291 : vector<1x1x32x128xf32> to vector<32x128xf32>
    %293 = arith.mulf %292, %233 : vector<32x128xf32>
    %294 = arith.addf %290, %293 : vector<32x128xf32>
    %295 = arith.addf %294, %235 : vector<32x128xf32>
    %cst_174 = arith.constant 0.000000e+00 : f32
    %296 = vector.broadcast %cst_174 : f32 to vector<32x128xf32>
    %297 = arith.maximumf %295, %296 : vector<32x128xf32>
    %298 = arith.mulf %297, %237 : vector<32x128xf32>
    %cst_175 = arith.constant dense<0.000000e+00> : vector<32x8xf32>
    %299 = tpu.matmul %298, %3, %cst_175 {dimension_numbers = #tpu.dot_dimension_numbers<[1], [0], [0], [1], [0, 0, 1, 1], [], []>} : vector<32x128xf32>, vector<128x8xf32>, vector<32x8xf32> -> vector<32x8xf32>
    %300 = arith.addf %299, %239 : vector<32x8xf32>
    %cst_176 = arith.constant dense<0xFF800000> : vector<32xf32>
    %301 = vector.multi_reduction <maximumf>, %300, %cst_176 [1] : vector<32x8xf32> to vector<32xf32>
    %302 = vector.shape_cast %301 : vector<32xf32> to vector<32x1xf32>
    %303 = vector.broadcast %302 : vector<32x1xf32> to vector<32x8xf32>
    %304 = arith.subf %300, %303 : vector<32x8xf32>
    %305 = math.exp %304 : vector<32x8xf32>
    %cst_177 = arith.constant dense<0.000000e+00> : vector<32xf32>
    %306 = vector.multi_reduction <add>, %305, %cst_177 [1] : vector<32x8xf32> to vector<32xf32>
    %307 = vector.shape_cast %306 : vector<32xf32> to vector<32x1xf32>
    %308 = tpu.reciprocal %307 {approx = true} : vector<32x1xf32> -> vector<32x1xf32>
    %309 = vector.broadcast %308 : vector<32x1xf32> to vector<32x8xf32>
    %310 = arith.mulf %305, %309 : vector<32x8xf32>
    %cst_178 = arith.constant dense<0.000000e+00> : vector<32x32xf32>
    %311 = tpu.matmul %310, %285, %cst_178 {dimension_numbers = #tpu.dot_dimension_numbers<[1], [0], [0], [1], [0, 0, 1, 1], [], []>} : vector<32x8xf32>, vector<8x32xf32>, vector<32x32xf32> -> vector<32x32xf32>
    %312 = arith.mulf %311, %4 : vector<32x32xf32>
    %313 = vector.extract_strided_slice %312 {offsets = [0, 0], sizes = [8, 32], strides = [1, 1]} : vector<32x32xf32> to vector<8x32xf32>
    %314 = vector.extract_strided_slice %312 {offsets = [8, 0], sizes = [8, 32], strides = [1, 1]} : vector<32x32xf32> to vector<8x32xf32>
    %315 = arith.addf %313, %314 : vector<8x32xf32>
    %316 = vector.extract_strided_slice %312 {offsets = [16, 0], sizes = [8, 32], strides = [1, 1]} : vector<32x32xf32> to vector<8x32xf32>
    %317 = arith.addf %315, %316 : vector<8x32xf32>
    %318 = vector.extract_strided_slice %312 {offsets = [24, 0], sizes = [8, 32], strides = [1, 1]} : vector<32x32xf32> to vector<8x32xf32>
    %319 = arith.addf %317, %318 : vector<8x32xf32>
    %c1_179 = arith.constant 1 : index
    %c8_180 = arith.constant 8 : index
    %c0_181 = arith.constant 0 : index
    %320 = vector.load %arg25[%c1_179, %c8_180, %c0_181] : memref<2x16x32xf32, #tpu.memory_space<vmem>>, vector<1x8x32xf32>
    %321 = vector.shape_cast %320 : vector<1x8x32xf32> to vector<8x32xf32>
    %322 = vector.shape_cast %319 : vector<8x32xf32> to vector<1x8x32xf32>
    tpu.vector_store %arg25[%c1_179, %c8_180, %c0_181], %322 {strides = array<i32>} : memref<2x16x32xf32, #tpu.memory_space<vmem>>, vector<1x8x32xf32>,
    %c1_182 = arith.constant 1 : index
    %c0_183 = arith.constant 0 : index
    %c0_184 = arith.constant 0 : index
    %323 = vector.load %arg25[%c1_182, %c0_183, %c0_184] : memref<2x16x32xf32, #tpu.memory_space<vmem>>, vector<1x16x32xf32>
    %324 = vector.shape_cast %323 : vector<1x16x32xf32> to vector<16x32xf32>
    %cst_185 = arith.constant dense<0.000000e+00> : vector<16x32xf32>
    %325 = tpu.matmul %324, %227, %cst_185 {dimension_numbers = #tpu.dot_dimension_numbers<[1], [0], [0], [1], [0, 0, 1, 1], [], []>} : vector<16x32xf32>, vector<32x32xf32>, vector<16x32xf32> -> vector<16x32xf32>
    %326 = vector.broadcast %229 : vector<1x32xf32> to vector<16x32xf32>
    %327 = arith.addf %325, %326 : vector<16x32xf32>
    %c1_186 = arith.constant 1 : index
    %c0_187 = arith.constant 0 : index
    %c0_188 = arith.constant 0 : index
    %328 = vector.load %arg16[%c1_186, %c0_187, %c0_188] : memref<2x1x32xf32, #tpu.memory_space<vmem>>, vector<1x1x32xf32>
    %329 = vector.shape_cast %328 : vector<1x1x32xf32> to vector<1x32xf32>
    %c1_189 = arith.constant 1 : index
    %c0_190 = arith.constant 0 : index
    %c0_191 = arith.constant 0 : index
    %330 = vector.load %arg17[%c1_189, %c0_190, %c0_191] : memref<2x1x32xf32, #tpu.memory_space<vmem>>, vector<1x1x32xf32>
    %331 = vector.shape_cast %330 : vector<1x1x32xf32> to vector<1x32xf32>
    %332 = arith.addf %1, %327 : vector<16x32xf32>
    %333 = vector.extract_strided_slice %332 {offsets = [0, 0], sizes = [8, 32], strides = [1, 1]} : vector<16x32xf32> to vector<8x32xf32>
    %cst_192 = arith.constant dense<0.000000e+00> : vector<32xf32>
    %334 = vector.multi_reduction <add>, %333, %cst_192 [0] : vector<8x32xf32> to vector<32xf32>
    %335 = vector.shape_cast %334 : vector<32xf32> to vector<1x32xf32>
    %cst_193 = arith.constant 8.000000e+00 : f32
    %336 = vector.broadcast %cst_193 : f32 to vector<1x32xf32>
    %337 = arith.divf %335, %336 : vector<1x32xf32>
    %338 = vector.broadcast %337 : vector<1x32xf32> to vector<8x32xf32>
    %339 = arith.subf %333, %338 : vector<8x32xf32>
    %340 = arith.mulf %339, %339 : vector<8x32xf32>
    %cst_194 = arith.constant dense<0.000000e+00> : vector<32xf32>
    %341 = vector.multi_reduction <add>, %340, %cst_194 [0] : vector<8x32xf32> to vector<32xf32>
    %342 = vector.shape_cast %341 : vector<32xf32> to vector<1x32xf32>
    %cst_195 = arith.constant 8.000000e+00 : f32
    %343 = vector.broadcast %cst_195 : f32 to vector<1x32xf32>
    %344 = arith.divf %342, %343 : vector<1x32xf32>
    %cst_196 = arith.constant 9.99999974E-6 : f32
    %345 = vector.broadcast %cst_196 : f32 to vector<1x32xf32>
    %346 = arith.addf %344, %345 : vector<1x32xf32>
    %347 = math.rsqrt %346 : vector<1x32xf32>
    %348 = vector.broadcast %347 : vector<1x32xf32> to vector<8x32xf32>
    %349 = arith.mulf %339, %348 : vector<8x32xf32>
    %350 = vector.extract_strided_slice %332 {offsets = [8, 0], sizes = [8, 32], strides = [1, 1]} : vector<16x32xf32> to vector<8x32xf32>
    %cst_197 = arith.constant dense<0.000000e+00> : vector<32xf32>
    %351 = vector.multi_reduction <add>, %350, %cst_197 [0] : vector<8x32xf32> to vector<32xf32>
    %352 = vector.shape_cast %351 : vector<32xf32> to vector<1x32xf32>
    %cst_198 = arith.constant 8.000000e+00 : f32
    %353 = vector.broadcast %cst_198 : f32 to vector<1x32xf32>
    %354 = arith.divf %352, %353 : vector<1x32xf32>
    %355 = vector.broadcast %354 : vector<1x32xf32> to vector<8x32xf32>
    %356 = arith.subf %350, %355 : vector<8x32xf32>
    %357 = arith.mulf %356, %356 : vector<8x32xf32>
    %cst_199 = arith.constant dense<0.000000e+00> : vector<32xf32>
    %358 = vector.multi_reduction <add>, %357, %cst_199 [0] : vector<8x32xf32> to vector<32xf32>
    %359 = vector.shape_cast %358 : vector<32xf32> to vector<1x32xf32>
    %cst_200 = arith.constant 8.000000e+00 : f32
    %360 = vector.broadcast %cst_200 : f32 to vector<1x32xf32>
    %361 = arith.divf %359, %360 : vector<1x32xf32>
    %cst_201 = arith.constant 9.99999974E-6 : f32
    %362 = vector.broadcast %cst_201 : f32 to vector<1x32xf32>
    %363 = arith.addf %361, %362 : vector<1x32xf32>
    %364 = math.rsqrt %363 : vector<1x32xf32>
    %365 = vector.broadcast %364 : vector<1x32xf32> to vector<8x32xf32>
    %366 = arith.mulf %356, %365 : vector<8x32xf32>
    %367 = tpu.concatenate %349, %366 in 0 : vector<8x32xf32>, vector<8x32xf32> -> vector<16x32xf32>
    %368 = vector.broadcast %329 : vector<1x32xf32> to vector<16x32xf32>
    %369 = arith.mulf %367, %368 : vector<16x32xf32>
    %370 = vector.broadcast %331 : vector<1x32xf32> to vector<16x32xf32>
    %371 = arith.addf %369, %370 : vector<16x32xf32>
    %c1_202 = arith.constant 1 : index
    %c0_203 = arith.constant 0 : index
    %c0_204 = arith.constant 0 : index
    %372 = vector.load %arg18[%c1_202, %c0_203, %c0_204] : memref<2x32x64xf32, #tpu.memory_space<vmem>>, vector<1x32x64xf32>
    %373 = vector.shape_cast %372 : vector<1x32x64xf32> to vector<32x64xf32>
    %cst_205 = arith.constant dense<0.000000e+00> : vector<16x64xf32>
    %374 = tpu.matmul %371, %373, %cst_205 {dimension_numbers = #tpu.dot_dimension_numbers<[1], [0], [0], [1], [0, 0, 1, 1], [], []>} : vector<16x32xf32>, vector<32x64xf32>, vector<16x64xf32> -> vector<16x64xf32>
    %c1_206 = arith.constant 1 : index
    %c0_207 = arith.constant 0 : index
    %c0_208 = arith.constant 0 : index
    %375 = vector.load %arg19[%c1_206, %c0_207, %c0_208] : memref<2x1x64xf32, #tpu.memory_space<vmem>>, vector<1x1x64xf32>
    %376 = vector.shape_cast %375 : vector<1x1x64xf32> to vector<1x64xf32>
    %377 = vector.broadcast %376 : vector<1x64xf32> to vector<16x64xf32>
    %378 = arith.addf %374, %377 : vector<16x64xf32>
    %cst_209 = arith.constant 0.000000e+00 : f32
    %379 = vector.broadcast %cst_209 : f32 to vector<16x64xf32>
    %380 = arith.maximumf %378, %379 : vector<16x64xf32>
    %c1_210 = arith.constant 1 : index
    %c0_211 = arith.constant 0 : index
    %c0_212 = arith.constant 0 : index
    %381 = vector.load %arg20[%c1_210, %c0_211, %c0_212] : memref<2x64x32xf32, #tpu.memory_space<vmem>>, vector<1x64x32xf32>
    %382 = vector.shape_cast %381 : vector<1x64x32xf32> to vector<64x32xf32>
    %cst_213 = arith.constant dense<0.000000e+00> : vector<16x32xf32>
    %383 = tpu.matmul %380, %382, %cst_213 {dimension_numbers = #tpu.dot_dimension_numbers<[1], [0], [0], [1], [0, 0, 1, 1], [], []>} : vector<16x64xf32>, vector<64x32xf32>, vector<16x32xf32> -> vector<16x32xf32>
    %c1_214 = arith.constant 1 : index
    %c0_215 = arith.constant 0 : index
    %c0_216 = arith.constant 0 : index
    %384 = vector.load %arg21[%c1_214, %c0_215, %c0_216] : memref<2x1x32xf32, #tpu.memory_space<vmem>>, vector<1x1x32xf32>
    %385 = vector.shape_cast %384 : vector<1x1x32xf32> to vector<1x32xf32>
    %386 = vector.broadcast %385 : vector<1x32xf32> to vector<16x32xf32>
    %387 = arith.addf %383, %386 : vector<16x32xf32>
    %c1_217 = arith.constant 1 : index
    %c0_218 = arith.constant 0 : index
    %c0_219 = arith.constant 0 : index
    %388 = vector.load %arg22[%c1_217, %c0_218, %c0_219] : memref<2x1x32xf32, #tpu.memory_space<vmem>>, vector<1x1x32xf32>
    %389 = vector.shape_cast %388 : vector<1x1x32xf32> to vector<1x32xf32>
    %c1_220 = arith.constant 1 : index
    %c0_221 = arith.constant 0 : index
    %c0_222 = arith.constant 0 : index
    %390 = vector.load %arg23[%c1_220, %c0_221, %c0_222] : memref<2x1x32xf32, #tpu.memory_space<vmem>>, vector<1x1x32xf32>
    %391 = vector.shape_cast %390 : vector<1x1x32xf32> to vector<1x32xf32>
    %392 = arith.addf %371, %387 : vector<16x32xf32>
    %393 = vector.extract_strided_slice %392 {offsets = [0, 0], sizes = [8, 32], strides = [1, 1]} : vector<16x32xf32> to vector<8x32xf32>
    %cst_223 = arith.constant dense<0.000000e+00> : vector<32xf32>
    %394 = vector.multi_reduction <add>, %393, %cst_223 [0] : vector<8x32xf32> to vector<32xf32>
    %395 = vector.shape_cast %394 : vector<32xf32> to vector<1x32xf32>
    %cst_224 = arith.constant 8.000000e+00 : f32
    %396 = vector.broadcast %cst_224 : f32 to vector<1x32xf32>
    %397 = arith.divf %395, %396 : vector<1x32xf32>
    %398 = vector.broadcast %397 : vector<1x32xf32> to vector<8x32xf32>
    %399 = arith.subf %393, %398 : vector<8x32xf32>
    %400 = arith.mulf %399, %399 : vector<8x32xf32>
    %cst_225 = arith.constant dense<0.000000e+00> : vector<32xf32>
    %401 = vector.multi_reduction <add>, %400, %cst_225 [0] : vector<8x32xf32> to vector<32xf32>
    %402 = vector.shape_cast %401 : vector<32xf32> to vector<1x32xf32>
    %cst_226 = arith.constant 8.000000e+00 : f32
    %403 = vector.broadcast %cst_226 : f32 to vector<1x32xf32>
    %404 = arith.divf %402, %403 : vector<1x32xf32>
    %cst_227 = arith.constant 9.99999974E-6 : f32
    %405 = vector.broadcast %cst_227 : f32 to vector<1x32xf32>
    %406 = arith.addf %404, %405 : vector<1x32xf32>
    %407 = math.rsqrt %406 : vector<1x32xf32>
    %408 = vector.broadcast %407 : vector<1x32xf32> to vector<8x32xf32>
    %409 = arith.mulf %399, %408 : vector<8x32xf32>
    %410 = vector.extract_strided_slice %392 {offsets = [8, 0], sizes = [8, 32], strides = [1, 1]} : vector<16x32xf32> to vector<8x32xf32>
    %cst_228 = arith.constant dense<0.000000e+00> : vector<32xf32>
    %411 = vector.multi_reduction <add>, %410, %cst_228 [0] : vector<8x32xf32> to vector<32xf32>
    %412 = vector.shape_cast %411 : vector<32xf32> to vector<1x32xf32>
    %cst_229 = arith.constant 8.000000e+00 : f32
    %413 = vector.broadcast %cst_229 : f32 to vector<1x32xf32>
    %414 = arith.divf %412, %413 : vector<1x32xf32>
    %415 = vector.broadcast %414 : vector<1x32xf32> to vector<8x32xf32>
    %416 = arith.subf %410, %415 : vector<8x32xf32>
    %417 = arith.mulf %416, %416 : vector<8x32xf32>
    %cst_230 = arith.constant dense<0.000000e+00> : vector<32xf32>
    %418 = vector.multi_reduction <add>, %417, %cst_230 [0] : vector<8x32xf32> to vector<32xf32>
    %419 = vector.shape_cast %418 : vector<32xf32> to vector<1x32xf32>
    %cst_231 = arith.constant 8.000000e+00 : f32
    %420 = vector.broadcast %cst_231 : f32 to vector<1x32xf32>
    %421 = arith.divf %419, %420 : vector<1x32xf32>
    %cst_232 = arith.constant 9.99999974E-6 : f32
    %422 = vector.broadcast %cst_232 : f32 to vector<1x32xf32>
    %423 = arith.addf %421, %422 : vector<1x32xf32>
    %424 = math.rsqrt %423 : vector<1x32xf32>
    %425 = vector.broadcast %424 : vector<1x32xf32> to vector<8x32xf32>
    %426 = arith.mulf %416, %425 : vector<8x32xf32>
    %427 = tpu.concatenate %409, %426 in 0 : vector<8x32xf32>, vector<8x32xf32> -> vector<16x32xf32>
    %428 = vector.broadcast %389 : vector<1x32xf32> to vector<16x32xf32>
    %429 = arith.mulf %427, %428 : vector<16x32xf32>
    %430 = vector.broadcast %391 : vector<1x32xf32> to vector<16x32xf32>
    %431 = arith.addf %429, %430 : vector<16x32xf32>
    %c1_233 = arith.constant 1 : index
    %c0_234 = arith.constant 0 : index
    %c0_235 = arith.constant 0 : index
    %432 = vector.load %arg24[%c1_233, %c0_234, %c0_235] : memref<2x16x32xf32, #tpu.memory_space<vmem>>, vector<1x16x32xf32>
    %433 = vector.shape_cast %432 : vector<1x16x32xf32> to vector<16x32xf32>
    %434 = vector.shape_cast %431 : vector<16x32xf32> to vector<1x16x32xf32>
    tpu.vector_store %arg24[%c1_233, %c0_234, %c0_235], %434 {strides = array<i32>} : memref<2x16x32xf32, #tpu.memory_space<vmem>>, vector<1x16x32xf32>,
    return
  }
}

</mosaic_0001>

<llo_original>
// kernel: tile.54
$region0: #{tile.54}
  %s0 = inlined_call_operand.vmem [shape: f32[2,4,8,8], index: 0, kind: input, shape index: {}]
  %s1 = inlined_call_operand.vmem [shape: f32[2,32,8], index: 1, kind: output, shape index: {}]
  $region1: #{tile.54} parent=0
    #allocation0 [shape = 'u8[65536]{0}', space=vmem, size = 0x10000, scoped, tag = 'scoped mem for input reshape']
    %s3 = sshll.u32 1, 4
    %s4 = ssub.s32 %s3, 1
    %s5 = smul.addr 4, 15
    %s6 = scalar_lea.vmem %s0, %s5
    %v7 = vld [vmem:[%s6] sm:%s4]
    %s8 = scalar_lea.vmem [#allocation0], 120
    %9 = vst [vmem:[%s8] sm:%s4] %v7
    %s10 = smul.addr 4, 14
    %s11 = scalar_lea.vmem %s0, %s10
    %v12 = vld [vmem:[%s11] sm:%s4]
    %s13 = scalar_lea.vmem [#allocation0], 112
    %14 = vst [vmem:[%s13] sm:%s4] %v12
    %s15 = smul.addr 4, 13
    %s16 = scalar_lea.vmem %s0, %s15
    %v17 = vld [vmem:[%s16] sm:%s4]
    %s18 = scalar_lea.vmem [#allocation0], 104
    %19 = vst [vmem:[%s18] sm:%s4] %v17
    %s20 = smul.addr 4, 12
    %s21 = scalar_lea.vmem %s0, %s20
    %v22 = vld [vmem:[%s21] sm:%s4]
    %s23 = scalar_lea.vmem [#allocation0], 96
    %24 = vst [vmem:[%s23] sm:%s4] %v22
    %s25 = smul.addr 4, 11
    %s26 = scalar_lea.vmem %s0, %s25
    %v27 = vld [vmem:[%s26] sm:%s4]
    %s28 = scalar_lea.vmem [#allocation0], 88
    %29 = vst [vmem:[%s28] sm:%s4] %v27
    %s30 = smul.addr 4, 10
    %s31 = scalar_lea.vmem %s0, %s30
    %v32 = vld [vmem:[%s31] sm:%s4]
    %s33 = scalar_lea.vmem [#allocation0], 80
    %34 = vst [vmem:[%s33] sm:%s4] %v32
    %s35 = smul.addr 4, 9
    %s36 = scalar_lea.vmem %s0, %s35
    %v37 = vld [vmem:[%s36] sm:%s4]
    %s38 = scalar_lea.vmem [#allocation0], 72
    %39 = vst [vmem:[%s38] sm:%s4] %v37
    %s40 = smul.addr 4, 8
    %s41 = scalar_lea.vmem %s0, %s40
    %v42 = vld [vmem:[%s41] sm:%s4]
    %s43 = scalar_lea.vmem [#allocation0], 64
    %44 = vst [vmem:[%s43] sm:%s4] %v42
    %s45 = smul.addr 4, 7
    %s46 = scalar_lea.vmem %s0, %s45
    %v47 = vld [vmem:[%s46] sm:%s4]
    %s48 = scalar_lea.vmem [#allocation0], 56
    %49 = vst [vmem:[%s48] sm:%s4] %v47
    %s50 = smul.addr 4, 6
    %s51 = scalar_lea.vmem %s0, %s50
    %v52 = vld [vmem:[%s51] sm:%s4]
    %s53 = scalar_lea.vmem [#allocation0], 48
    %54 = vst [vmem:[%s53] sm:%s4] %v52
    %s55 = smul.addr 4, 5
    %s56 = scalar_lea.vmem %s0, %s55
    %v57 = vld [vmem:[%s56] sm:%s4]
    %s58 = scalar_lea.vmem [#allocation0], 40
    %59 = vst [vmem:[%s58] sm:%s4] %v57
    %s60 = smul.addr 4, 4
    %s61 = scalar_lea.vmem %s0, %s60
    %v62 = vld [vmem:[%s61] sm:%s4]
    %s63 = scalar_lea.vmem [#allocation0], 32
    %64 = vst [vmem:[%s63] sm:%s4] %v62
    %s65 = smul.addr 4, 3
    %s66 = scalar_lea.vmem %s0, %s65
    %v67 = vld [vmem:[%s66] sm:%s4]
    %s68 = scalar_lea.vmem [#allocation0], 24
    %69 = vst [vmem:[%s68] sm:%s4] %v67
    %s70 = smul.addr 4, 2
    %s71 = scalar_lea.vmem %s0, %s70
    %v72 = vld [vmem:[%s71] sm:%s4]
    %s73 = scalar_lea.vmem [#allocation0], 16
    %74 = vst [vmem:[%s73] sm:%s4] %v72
    %s75 = scalar_lea.vmem %s0, 4
    %v76 = vld [vmem:[%s75] sm:%s4]
    %s77 = scalar_lea.vmem [#allocation0], 8
    %78 = vst [vmem:[%s77] sm:%s4] %v76
    %v79 = vld [vmem:[%s0] sm:%s4]
    %80 = vst [vmem:[#allocation0] sm:%s4] %v79
    %v81 = vld [vmem:[#allocation0] ss:$8 sm:$0xf]
    %v82 = vld [vmem:[#allocation0] ss:$8 sm:$0xf0]
    %vm83 = vcmask 1047556
    %v84 = vsel %vm83, %v82, %v81
    %vm85 = vcmask 64512
    %86 = vst.msk [vmem:[%s1] sm:$0xff] %vm85, %v84
    %s87 = scalar_lea.vmem [#allocation0], 64
    %v88 = vld [vmem:[%s87] ss:$8 sm:$0xf]
    %s89 = scalar_lea.vmem [#allocation0], 64
    %v90 = vld [vmem:[%s89] ss:$8 sm:$0xf0]
    %vm91 = vcmask 1047556
    %v92 = vsel %vm91, %v90, %v88
    %vm93 = vcmask 64512
    %s94 = scalar_lea.vmem %s1, 8
    %95 = vst.msk [vmem:[%s94] sm:$0xff] %vm93, %v92
    %s96 = scalar_lea.vmem [#allocation0], 3
    %v97 = vld [vmem:[%s96] ss:$8 sm:$0xf]
    %s98 = scalar_lea.vmem [#allocation0], 3
    %v99 = vld [vmem:[%s98] ss:$8 sm:$0xf0]
    %vm100 = vcmask 1047556
    %v101 = vsel %vm100, %v99, %v97
    %102 = vrot.lane.b32.xlu0 %v101, 24
    %v103 = vpop.permute.xlu0 %102
    %vm104 = vcmask 261312
    %105 = vst.msk [vmem:[%s1] sm:$0xff] %vm104, %v103
    %s106 = scalar_lea.vmem [#allocation0], 67
    %v107 = vld [vmem:[%s106] ss:$8 sm:$0xf]
    %s108 = scalar_lea.vmem [#allocation0], 67
    %v109 = vld [vmem:[%s108] ss:$8 sm:$0xf0]
    %vm110 = vcmask 1047556
    %v111 = vsel %vm110, %v109, %v107
    %112 = vrot.lane.b32.xlu0 %v111, 24
    %v113 = vpop.permute.xlu0 %112
    %vm114 = vcmask 261312
    %s115 = scalar_lea.vmem %s1, 8
    %116 = vst.msk [vmem:[%s115] sm:$0xff] %vm114, %v113
    %s117 = scalar_lea.vmem [#allocation0], 2
    %v118 = vld [vmem:[%s117] ss:$8 sm:$0xf]
    %s119 = scalar_lea.vmem [#allocation0], 2
    %v120 = vld [vmem:[%s119] ss:$8 sm:$0xf0]
    %vm121 = vcmask 1047556
    %v122 = vsel %vm121, %v120, %v118
    %123 = vrot.lane.b32.xlu0 %v122, 16
    %v124 = vpop.permute.xlu0 %123
    %vm125 = vcmask 195712
    %126 = vst.msk [vmem:[%s1] sm:$0xff] %vm125, %v124
    %s127 = scalar_lea.vmem [#allocation0], 66
    %v128 = vld [vmem:[%s127] ss:$8 sm:$0xf]
    %s129 = scalar_lea.vmem [#allocation0], 66
    %v130 = vld [vmem:[%s129] ss:$8 sm:$0xf0]
    %vm131 = vcmask 1047556
    %v132 = vsel %vm131, %v130, %v128
    %133 = vrot.lane.b32.xlu0 %v132, 16
    %v134 = vpop.permute.xlu0 %133
    %vm135 = vcmask 195712
    %s136 = scalar_lea.vmem %s1, 8
    %137 = vst.msk [vmem:[%s136] sm:$0xff] %vm135, %v134
    %s138 = scalar_lea.vmem [#allocation0], 1
    %v139 = vld [vmem:[%s138] ss:$8 sm:$0xf]
    %s140 = scalar_lea.vmem [#allocation0], 1
    %v141 = vld [vmem:[%s140] ss:$8 sm:$0xf0]
    %vm142 = vcmask 1047556
    %v143 = vsel %vm142, %v141, %v139
    %144 = vrot.lane.b32.xlu0 %v143, 8
    %v145 = vpop.permute.xlu0 %144
    %vm146 = vcmask 130112
    %147 = vst.msk [vmem:[%s1] sm:$0xff] %vm146, %v145
    %s148 = scalar_lea.vmem [#allocation0], 65
    %v149 = vld [vmem:[%s148] ss:$8 sm:$0xf]
    %s150 = scalar_lea.vmem [#allocation0], 65
    %v151 = vld [vmem:[%s150] ss:$8 sm:$0xf0]
    %vm152 = vcmask 1047556
    %v153 = vsel %vm152, %v151, %v149
    %154 = vrot.lane.b32.xlu0 %v153, 8
    %v155 = vpop.permute.xlu0 %154
    %vm156 = vcmask 130112
    %s157 = scalar_lea.vmem %s1, 8
    %158 = vst.msk [vmem:[%s157] sm:$0xff] %vm156, %v155

// kernel: eq.10
$region0: #{eq.10}
  %s0 = inlined_call_operand.vmem [shape: s32[4,8], index: 0, kind: input, shape index: {}]
  %s1 = inlined_call_operand.vmem [shape: s32[32], index: 1, kind: output, shape index: {}]
  $region1: #{eq.10} parent=0
    #allocation0 [shape = 'u8[4096]{0}', space=vmem, size = 0x1000, scoped, tag = 'scoped mem for output reshape']
    #allocation1 [shape = 'u8[4096]{0}', space=vmem, size = 0x1000, scoped, tag = 'scoped mem for input reshape']
    %s3 = sshll.u32 1, 4
    %s4 = ssub.s32 %s3, 1
    %v5 = vld [vmem:[%s0] sm:%s4]
    %6 = vst [vmem:[#allocation1] sm:%s4] %v5
    %v7 = vld [vmem:[#allocation1] sm:$0x1]
    %vm8 = vcmask 64512
    %9 = vst.msk [vmem:[#allocation0] sm:$0x1] %vm8, %v7
    %s10 = scalar_lea.vmem [#allocation1], 3
    %v11 = vld [vmem:[%s10] sm:$0x1]
    %12 = vrot.lane.b32.xlu0 %v11, 24
    %v13 = vpop.permute.xlu0 %12
    %vm14 = vcmask 261312
    %15 = vst.msk [vmem:[#allocation0] sm:$0x1] %vm14, %v13
    %s16 = scalar_lea.vmem [#allocation1], 2
    %v17 = vld [vmem:[%s16] sm:$0x1]
    %18 = vrot.lane.b32.xlu0 %v17, 16
    %v19 = vpop.permute.xlu0 %18
    %vm20 = vcmask 195712
    %21 = vst.msk [vmem:[#allocation0] sm:$0x1] %vm20, %v19
    %s22 = scalar_lea.vmem [#allocation1], 1
    %v23 = vld [vmem:[%s22] sm:$0x1]
    %24 = vrot.lane.b32.xlu0 %v23, 8
    %v25 = vpop.permute.xlu0 %24
    %vm26 = vcmask 130112
    %27 = vst.msk [vmem:[#allocation0] sm:$0x1] %vm26, %v25
    %s29 = sshll.u32 1, 1
    %s30 = ssub.s32 %s29, 1
    %v32 = vld [vmem:[#allocation0] sm:%s30]
    %s33 = sshll.u32 1, 1
    %s34 = ssub.s32 %s33, 1
    %35 = vst [vmem:[%s1] sm:%s34] %v32

// kernel: encoder_layer_forward.1
$region0: #{encoder_layer_forward.1}
  #allocation0 [shape = 'u32[]', space=smem, size = 0x4, offset = 0x4, fixed_abs, tag = 'smem constant byte address 0x4 - core index']
  #allocation1 [shape = 'u32[144,128]{1,0:T(1,128)}', space=vmem, size = 0x12000, scoped, tag = 'internal scratch']
  #allocation2 [shape = 'f32[2,16,32]{2,1,0:T(8,128)}', space=vmem, size = 0x4000, scoped, tag = 'scratch operand']
  %s0 = inlined_call_operand.vmem [shape: f32[16,32], index: 0, kind: input, shape index: {}]
  %s1 = inlined_call_operand.vmem [shape: f32[16,32], index: 1, kind: input, shape index: {}]
  %s2 = inlined_call_operand.vmem [shape: f32[2,2,32,128], index: 2, kind: input, shape index: {}]
  %s3 = inlined_call_operand.vmem [shape: f32[8,128], index: 3, kind: input, shape index: {}]
  %s4 = inlined_call_operand.vmem [shape: f32[128,8], index: 4, kind: input, shape index: {}]
  %s5 = inlined_call_operand.vmem [shape: f32[32,32], index: 5, kind: input, shape index: {}]
  %s6 = inlined_call_operand.vmem [shape: f32[2,32,32], index: 6, kind: input, shape index: {}]
  %s7 = inlined_call_operand.vmem [shape: f32[2,32,32], index: 7, kind: input, shape index: {}]
  %s8 = inlined_call_operand.vmem [shape: f32[2,32,32], index: 8, kind: input, shape index: {}]
  %s9 = inlined_call_operand.vmem [shape: f32[2,32,32], index: 9, kind: input, shape index: {}]
  %s10 = inlined_call_operand.vmem [shape: f32[2,1,32], index: 10, kind: input, shape index: {}]
  %s11 = inlined_call_operand.vmem [shape: f32[2,32,128], index: 11, kind: input, shape index: {}]
  %s12 = inlined_call_operand.vmem [shape: f32[2,32,128], index: 12, kind: input, shape index: {}]
  %s13 = inlined_call_operand.vmem [shape: f32[2,32,128], index: 13, kind: input, shape index: {}]
  %s14 = inlined_call_operand.vmem [shape: f32[2,32,128], index: 14, kind: input, shape index: {}]
  %s15 = inlined_call_operand.vmem [shape: f32[2,32,8], index: 15, kind: input, shape index: {}]
  %s16 = inlined_call_operand.vmem [shape: f32[2,1,32], index: 16, kind: input, shape index: {}]
  %s17 = inlined_call_operand.vmem [shape: f32[2,1,32], index: 17, kind: input, shape index: {}]
  %s18 = inlined_call_operand.vmem [shape: f32[2,32,64], index: 18, kind: input, shape index: {}]
  %s19 = inlined_call_operand.vmem [shape: f32[2,1,64], index: 19, kind: input, shape index: {}]
  %s20 = inlined_call_operand.vmem [shape: f32[2,64,32], index: 20, kind: input, shape index: {}]
  %s21 = inlined_call_operand.vmem [shape: f32[2,1,32], index: 21, kind: input, shape index: {}]
  %s22 = inlined_call_operand.vmem [shape: f32[2,1,32], index: 22, kind: input, shape index: {}]
  %s23 = inlined_call_operand.vmem [shape: f32[2,1,32], index: 23, kind: input, shape index: {}]
  %s24 = inlined_call_operand.vmem [shape: f32[2,16,32], index: 24, kind: output, shape index: {}]
  %s25 = sld [smem:[#allocation0]]
  $region106: #{encoder_layer_forward.1} parent=0
    _
  %s27 = ssub.s32 1, %s25
  %s28 = scalar_select 0, %s27, %s25
  // Predicated region
  $region2: #{encoder_layer_forward.1} parent=0 // pred_check
    _
  $region3: #{encoder_layer_forward.1} parent=0 // pred_check_branch
    %30 = sbr.rel (0) target = $region5
  $region4: #{encoder_layer_forward.1} parent=0 // pred_region
    _
  $region5: #{encoder_layer_forward.1} parent=0 // pred_fallthru
    _
  // Predicated region
  $region6: #{encoder_layer_forward.1} parent=0 // pred_check
    _
  $region7: #{encoder_layer_forward.1} parent=0 // pred_check_branch
    %32 = sbr.rel (0) target = $region9
  $region8: #{encoder_layer_forward.1} parent=0 // pred_region
    _
  $region9: #{encoder_layer_forward.1} parent=0 // pred_fallthru
    _
  // Predicated region
  $region10: #{encoder_layer_forward.1} parent=0 // pred_check
    _
  $region11: #{encoder_layer_forward.1} parent=0 // pred_check_branch
    %34 = sbr.rel (0) target = $region13
  $region12: #{encoder_layer_forward.1} parent=0 // pred_region
    _
  $region13: #{encoder_layer_forward.1} parent=0 // pred_fallthru
    _
  // Predicated region
  $region14: #{encoder_layer_forward.1} parent=0 // pred_check
    _
  $region15: #{encoder_layer_forward.1} parent=0 // pred_check_branch
    %36 = sbr.rel (0) target = $region17
  $region16: #{encoder_layer_forward.1} parent=0 // pred_region
    _
  $region17: #{encoder_layer_forward.1} parent=0 // pred_fallthru
    _
  // Predicated region
  $region18: #{encoder_layer_forward.1} parent=0 // pred_check
    _
  $region19: #{encoder_layer_forward.1} parent=0 // pred_check_branch
    %38 = sbr.rel (0) target = $region21
  $region20: #{encoder_layer_forward.1} parent=0 // pred_region
    _
  $region21: #{encoder_layer_forward.1} parent=0 // pred_fallthru
    _
  // Predicated region
  $region22: #{encoder_layer_forward.1} parent=0 // pred_check
    _
  $region23: #{encoder_layer_forward.1} parent=0 // pred_check_branch
    %40 = sbr.rel (0) target = $region25
  $region24: #{encoder_layer_forward.1} parent=0 // pred_region
    _
  $region25: #{encoder_layer_forward.1} parent=0 // pred_fallthru
    _
  // Predicated region
  $region26: #{encoder_layer_forward.1} parent=0 // pred_check
    _
  $region27: #{encoder_layer_forward.1} parent=0 // pred_check_branch
    %42 = sbr.rel (0) target = $region29
  $region28: #{encoder_layer_forward.1} parent=0 // pred_region
    _
  $region29: #{encoder_layer_forward.1} parent=0 // pred_fallthru
    _
  // Predicated region
  $region30: #{encoder_layer_forward.1} parent=0 // pred_check
    _
  $region31: #{encoder_layer_forward.1} parent=0 // pred_check_branch
    %44 = sbr.rel (0) target = $region33
  $region32: #{encoder_layer_forward.1} parent=0 // pred_region
    _
  $region33: #{encoder_layer_forward.1} parent=0 // pred_fallthru
    _
  // Predicated region
  $region34: #{encoder_layer_forward.1} parent=0 // pred_check
    _
  $region35: #{encoder_layer_forward.1} parent=0 // pred_check_branch
    %46 = sbr.rel (0) target = $region37
  $region36: #{encoder_layer_forward.1} parent=0 // pred_region
    _
  $region37: #{encoder_layer_forward.1} parent=0 // pred_fallthru
    _
  // Predicated region
  $region38: #{encoder_layer_forward.1} parent=0 // pred_check
    _
  $region39: #{encoder_layer_forward.1} parent=0 // pred_check_branch
    %48 = sbr.rel (0) target = $region41
  $region40: #{encoder_layer_forward.1} parent=0 // pred_region
    _
  $region41: #{encoder_layer_forward.1} parent=0 // pred_fallthru
    _
  // Predicated region
  $region42: #{encoder_layer_forward.1} parent=0 // pred_check
    _
  $region43: #{encoder_layer_forward.1} parent=0 // pred_check_branch
    %50 = sbr.rel (0) target = $region45
  $region44: #{encoder_layer_forward.1} parent=0 // pred_region
    _
  $region45: #{encoder_layer_forward.1} parent=0 // pred_fallthru
    _
  // Predicated region
  $region46: #{encoder_layer_forward.1} parent=0 // pred_check
    _
  $region47: #{encoder_layer_forward.1} parent=0 // pred_check_branch
    %52 = sbr.rel (0) target = $region49
  $region48: #{encoder_layer_forward.1} parent=0 // pred_region
    _
  $region49: #{encoder_layer_forward.1} parent=0 // pred_fallthru
    _
  // Predicated region
  $region50: #{encoder_layer_forward.1} parent=0 // pred_check
    _
  $region51: #{encoder_layer_forward.1} parent=0 // pred_check_branch
    %54 = sbr.rel (0) target = $region53
  $region52: #{encoder_layer_forward.1} parent=0 // pred_region
    _
  $region53: #{encoder_layer_forward.1} parent=0 // pred_fallthru
    _
  // Predicated region
  $region54: #{encoder_layer_forward.1} parent=0 // pred_check
    _
  $region55: #{encoder_layer_forward.1} parent=0 // pred_check_branch
    %56 = sbr.rel (0) target = $region57
  $region56: #{encoder_layer_forward.1} parent=0 // pred_region
    _
  $region57: #{encoder_layer_forward.1} parent=0 // pred_fallthru
    _
  // Predicated region
  $region58: #{encoder_layer_forward.1} parent=0 // pred_check
    _
  $region59: #{encoder_layer_forward.1} parent=0 // pred_check_branch
    %58 = sbr.rel (0) target = $region61
  $region60: #{encoder_layer_forward.1} parent=0 // pred_region
    _
  $region61: #{encoder_layer_forward.1} parent=0 // pred_fallthru
    _
  // Predicated region
  $region62: #{encoder_layer_forward.1} parent=0 // pred_check
    _
  $region63: #{encoder_layer_forward.1} parent=0 // pred_check_branch
    %60 = sbr.rel (0) target = $region65
  $region64: #{encoder_layer_forward.1} parent=0 // pred_region
    _
  $region65: #{encoder_layer_forward.1} parent=0 // pred_fallthru
    _
  // Predicated region
  $region66: #{encoder_layer_forward.1} parent=0 // pred_check
    _
  $region67: #{encoder_layer_forward.1} parent=0 // pred_check_branch
    %62 = sbr.rel (0) target = $region69
  $region68: #{encoder_layer_forward.1} parent=0 // pred_region
    _
  $region69: #{encoder_layer_forward.1} parent=0 // pred_fallthru
    _
  // Predicated region
  $region70: #{encoder_layer_forward.1} parent=0 // pred_check
    _
  $region71: #{encoder_layer_forward.1} parent=0 // pred_check_branch
    %64 = sbr.rel (0) target = $region73
  $region72: #{encoder_layer_forward.1} parent=0 // pred_region
    _
  $region73: #{encoder_layer_forward.1} parent=0 // pred_fallthru
    _
  // Predicated region
  $region74: #{encoder_layer_forward.1} parent=0 // pred_check
    _
  $region75: #{encoder_layer_forward.1} parent=0 // pred_check_branch
    %66 = sbr.rel (0) target = $region77
  $region76: #{encoder_layer_forward.1} parent=0 // pred_region
    _
  $region77: #{encoder_layer_forward.1} parent=0 // pred_fallthru
    _
  // Predicated region
  $region78: #{encoder_layer_forward.1} parent=0 // pred_check
    _
  $region79: #{encoder_layer_forward.1} parent=0 // pred_check_branch
    %68 = sbr.rel (0) target = $region81
  $region80: #{encoder_layer_forward.1} parent=0 // pred_region
    _
  $region81: #{encoder_layer_forward.1} parent=0 // pred_fallthru
    _
  // Predicated region
  $region82: #{encoder_layer_forward.1} parent=0 // pred_check
    _
  $region83: #{encoder_layer_forward.1} parent=0 // pred_check_branch
    %70 = sbr.rel (0) target = $region85
  $region84: #{encoder_layer_forward.1} parent=0 // pred_region
    _
  $region85: #{encoder_layer_forward.1} parent=0 // pred_fallthru
    _
  // Predicated region
  $region86: #{encoder_layer_forward.1} parent=0 // pred_check
    _
  $region87: #{encoder_layer_forward.1} parent=0 // pred_check_branch
    %72 = sbr.rel (0) target = $region89
  $region88: #{encoder_layer_forward.1} parent=0 // pred_region
    _
  $region89: #{encoder_layer_forward.1} parent=0 // pred_fallthru
    _
  // Predicated region
  $region90: #{encoder_layer_forward.1} parent=0 // pred_check
    _
  $region91: #{encoder_layer_forward.1} parent=0 // pred_check_branch
    %74 = sbr.rel (0) target = $region93
  $region92: #{encoder_layer_forward.1} parent=0 // pred_region
    _
  $region93: #{encoder_layer_forward.1} parent=0 // pred_fallthru
    _
  // Predicated region
  $region94: #{encoder_layer_forward.1} parent=0 // pred_check
    _
  $region95: #{encoder_layer_forward.1} parent=0 // pred_check_branch
    %76 = sbr.rel (0) target = $region97
  $region96: #{encoder_layer_forward.1} parent=0 // pred_region
    _
  $region97: #{encoder_layer_forward.1} parent=0 // pred_fallthru
    _
  %v77 = vld [vmem:[%s0] sm:$0xff]
  %v78 = vld [vmem:[%s0 + $0x8] sm:$0xff]
  %v79 = vld [vmem:[%s1] sm:$0xff]
  %v80 = vld [vmem:[%s1 + $0x8] sm:$0xff]
  %v81 = vld [vmem:[%s3] sm:$0xff]
  %v82 = vld [vmem:[%s4] sm:$0xff]
  %v83 = vld [vmem:[%s4 + $0x8] sm:$0xff]
  %v84 = vld [vmem:[%s4 + $0x10] sm:$0xff]
  %v85 = vld [vmem:[%s4 + $0x18] sm:$0xff]
  %v86 = vld [vmem:[%s4 + $0x20] sm:$0xff]
  %v87 = vld [vmem:[%s4 + $0x28] sm:$0xff]
  %v88 = vld [vmem:[%s4 + $0x30] sm:$0xff]
  %v89 = vld [vmem:[%s4 + $0x38] sm:$0xff]
  %v90 = vld [vmem:[%s4 + $0x40] sm:$0xff]
  %v91 = vld [vmem:[%s4 + $0x48] sm:$0xff]
  %v92 = vld [vmem:[%s4 + $0x50] sm:$0xff]
  %v93 = vld [vmem:[%s4 + $0x58] sm:$0xff]
  %v94 = vld [vmem:[%s4 + $0x60] sm:$0xff]
  %v95 = vld [vmem:[%s4 + $0x68] sm:$0xff]
  %v96 = vld [vmem:[%s4 + $0x70] sm:$0xff]
  %v97 = vld [vmem:[%s4 + $0x78] sm:$0xff]
  %v98 = vld [vmem:[%s5] sm:$0xff]
  %v99 = vld [vmem:[%s5 + $0x8] sm:$0xff]
  %v100 = vld [vmem:[%s5 + $0x10] sm:$0xff]
  %v101 = vld [vmem:[%s5 + $0x18] sm:$0xff]
  %v102 = vld [vmem:[%s6] sm:$0xff]
  %v103 = vld [vmem:[%s6 + $0x8] sm:$0xff]
  %v104 = vld [vmem:[%s6 + $0x10] sm:$0xff]
  %v105 = vld [vmem:[%s6 + $0x18] sm:$0xff]
  %v106 = vld [vmem:[%s7] sm:$0xff]
  %v107 = vld [vmem:[%s7 + $0x8] sm:$0xff]
  %v108 = vld [vmem:[%s7 + $0x10] sm:$0xff]
  %v109 = vld [vmem:[%s7 + $0x18] sm:$0xff]
  %v110 = vld [vmem:[%s8] sm:$0xff]
  %v111 = vld [vmem:[%s8 + $0x8] sm:$0xff]
  %v112 = vld [vmem:[%s8 + $0x10] sm:$0xff]
  %v113 = vld [vmem:[%s8 + $0x18] sm:$0xff]
  %v114 = vld [vmem:[%s9] sm:$0xff]
  %v115 = vld [vmem:[%s9 + $0x8] sm:$0xff]
  %v116 = vld [vmem:[%s9 + $0x10] sm:$0xff]
  %v117 = vld [vmem:[%s9 + $0x18] sm:$0xff]
  %v118 = vld [vmem:[%s10] sm:$0x1]
  %v119 = vld [vmem:[%s11] sm:$0xff]
  %v120 = vld [vmem:[%s11 + $0x8] sm:$0xff]
  %v121 = vld [vmem:[%s11 + $0x10] sm:$0xff]
  %v122 = vld [vmem:[%s11 + $0x18] sm:$0xff]
  %v123 = vld [vmem:[%s12] sm:$0xff]
  %v124 = vld [vmem:[%s12 + $0x8] sm:$0xff]
  %v125 = vld [vmem:[%s12 + $0x10] sm:$0xff]
  %v126 = vld [vmem:[%s12 + $0x18] sm:$0xff]
  %v127 = vld [vmem:[%s13] sm:$0xff]
  %v128 = vld [vmem:[%s13 + $0x8] sm:$0xff]
  %v129 = vld [vmem:[%s13 + $0x10] sm:$0xff]
  %v130 = vld [vmem:[%s13 + $0x18] sm:$0xff]
  %v131 = vld [vmem:[%s14] sm:$0xff]
  %v132 = vld [vmem:[%s14 + $0x8] sm:$0xff]
  %v133 = vld [vmem:[%s14 + $0x10] sm:$0xff]
  %v134 = vld [vmem:[%s14 + $0x18] sm:$0xff]
  %v135 = vld [vmem:[%s15] sm:$0xff]
  %v136 = vld [vmem:[%s15 + $0x8] sm:$0xff]
  %v137 = vld [vmem:[%s15 + $0x10] sm:$0xff]
  %v138 = vld [vmem:[%s15 + $0x18] sm:$0xff]
  %vm139 = vcmask 261120
  %v141 = vsel %vm139, %v77, 0
  %v144 = vsel %vm139, %v78, 0
  %146 = vmatprep.subr.mxu0 0.0
  %147 = vmatpush1.msra.mxu0 0.0
  %148 = vmatprep.subr.mxu0 0.0
  %149 = vmatpush1.msra.mxu0 0.0
  %150 = vmatprep.subr.mxu0 0.0
  %151 = vmatpush1.msra.mxu0 0.0
  %152 = vmatprep.subr.mxu0 0.0
  %153 = vmatpush1.msra.mxu0 0.0
  %154 = vmatprep.subr.mxu0 0.0
  %155 = vmatpush1.msra.mxu0 0.0
  %156 = vmatprep.subr.mxu0 0.0
  %157 = vmatpush1.msra.mxu0 0.0
  %158 = vmatprep.subr.mxu0 0.0
  %159 = vmatpush1.msra.mxu0 0.0
  %160 = vmatprep.subr.mxu0 0.0
  %161 = vmatpush1.msra.mxu0 0.0
  %162 = vmatprep.subr.mxu0 0.0
  %163 = vmatpush1.msra.mxu0 0.0
  %164 = vmatprep.subr.mxu0 0.0
  %165 = vmatpush1.msra.mxu0 0.0
  %166 = vmatprep.subr.mxu0 0.0
  %167 = vmatpush1.msra.mxu0 0.0
  %168 = vmatprep.subr.mxu0 0.0
  %169 = vmatpush1.msra.mxu0 0.0
  %170 = vmatprep.subr.mxu0 0.0
  %171 = vmatpush1.msra.mxu0 %v105
  %172 = vmatprep.subr.mxu0 0.0
  %173 = vmatpush1.msra.mxu0 %v104
  %174 = vmatprep.subr.mxu0 0.0
  %175 = vmatpush1.msra.mxu0 %v103
  %176 = vmatprep.subr.mxu0 0.0
  %177 = vmatpush1.msra.mxu0 %v102
  %178 = vmatprep.subr.mxu0 0.0
  %179 = vmatpush2.msra.mxu0 0.0
  %180 = vmatprep.subr.mxu0 0.0
  %181 = vmatpush2.msra.mxu0 0.0
  %182 = vmatprep.subr.mxu0 0.0
  %183 = vmatpush2.msra.mxu0 0.0
  %184 = vmatprep.subr.mxu0 0.0
  %185 = vmatpush2.msra.mxu0 0.0
  %186 = vmatprep.subr.mxu0 0.0
  %187 = vmatpush2.msra.mxu0 0.0
  %188 = vmatprep.subr.mxu0 0.0
  %189 = vmatpush2.msra.mxu0 0.0
  %190 = vmatprep.subr.mxu0 0.0
  %191 = vmatpush2.msra.mxu0 0.0
  %192 = vmatprep.subr.mxu0 0.0
  %193 = vmatpush2.msra.mxu0 0.0
  %194 = vmatprep.subr.mxu0 0.0
  %195 = vmatpush2.msra.mxu0 0.0
  %196 = vmatprep.subr.mxu0 0.0
  %197 = vmatpush2.msra.mxu0 0.0
  %198 = vmatprep.subr.mxu0 0.0
  %199 = vmatpush2.msra.mxu0 0.0
  %200 = vmatprep.subr.mxu0 0.0
  %201 = vmatpush2.msra.mxu0 0.0
  %202 = vmatprep.subr.mxu0 0.0
  %203 = vmatpush2.msra.mxu0 0.0
  %204 = vmatprep.subr.mxu0 0.0
  %205 = vmatpush2.msra.mxu0 0.0
  %206 = vmatprep.subr.mxu0 0.0
  %207 = vmatpush2.msra.mxu0 0.0
  %208 = vmatprep.subr.mxu0 0.0
  %209 = vmatpush2.msra.mxu0 0.0
  %210 = vmatprep.mubr.f32.mxu0 0.0
  %211 = vmatmul.mubr.f32.gmra.mxu0 %v141
  %v212 = vpop.f32.mrf.mxu0
  %v213 = vadd.f32 0.0, %v212
  %v214 = vpop.f32.mrf.mxu0
  %215 = vmatprep.mubr.f32.mxu0 0.0
  %216 = vmatmul.mubr.f32.gmra.mxu0 %v144
  %v217 = vpop.f32.mrf.mxu0
  %v218 = vadd.f32 0.0, %v217
  %v219 = vpop.f32.mrf.mxu0
  %220 = vdwg.mxu0
  %v222 = vsel %vm139, %v79, 0
  %v225 = vsel %vm139, %v80, 0
  %227 = vmatprep.subr.mxu0 0.0
  %228 = vmatpush1.msra.mxu0 0.0
  %229 = vmatprep.subr.mxu0 0.0
  %230 = vmatpush1.msra.mxu0 0.0
  %231 = vmatprep.subr.mxu0 0.0
  %232 = vmatpush1.msra.mxu0 0.0
  %233 = vmatprep.subr.mxu0 0.0
  %234 = vmatpush1.msra.mxu0 0.0
  %235 = vmatprep.subr.mxu0 0.0
  %236 = vmatpush1.msra.mxu0 0.0
  %237 = vmatprep.subr.mxu0 0.0
  %238 = vmatpush1.msra.mxu0 0.0
  %239 = vmatprep.subr.mxu0 0.0
  %240 = vmatpush1.msra.mxu0 0.0
  %241 = vmatprep.subr.mxu0 0.0
  %242 = vmatpush1.msra.mxu0 0.0
  %243 = vmatprep.subr.mxu0 0.0
  %244 = vmatpush1.msra.mxu0 0.0
  %245 = vmatprep.subr.mxu0 0.0
  %246 = vmatpush1.msra.mxu0 0.0
  %247 = vmatprep.subr.mxu0 0.0
  %248 = vmatpush1.msra.mxu0 0.0
  %249 = vmatprep.subr.mxu0 0.0
  %250 = vmatpush1.msra.mxu0 0.0
  %251 = vmatprep.subr.mxu0 0.0
  %252 = vmatpush1.msra.mxu0 %v109
  %253 = vmatprep.subr.mxu0 0.0
  %254 = vmatpush1.msra.mxu0 %v108
  %255 = vmatprep.subr.mxu0 0.0
  %256 = vmatpush1.msra.mxu0 %v107
  %257 = vmatprep.subr.mxu0 0.0
  %258 = vmatpush1.msra.mxu0 %v106
  %259 = vmatprep.subr.mxu0 0.0
  %260 = vmatpush2.msra.mxu0 0.0
  %261 = vmatprep.subr.mxu0 0.0
  %262 = vmatpush2.msra.mxu0 0.0
  %263 = vmatprep.subr.mxu0 0.0
  %264 = vmatpush2.msra.mxu0 0.0
  %265 = vmatprep.subr.mxu0 0.0
  %266 = vmatpush2.msra.mxu0 0.0
  %267 = vmatprep.subr.mxu0 0.0
  %268 = vmatpush2.msra.mxu0 0.0
  %269 = vmatprep.subr.mxu0 0.0
  %270 = vmatpush2.msra.mxu0 0.0
  %271 = vmatprep.subr.mxu0 0.0
  %272 = vmatpush2.msra.mxu0 0.0
  %273 = vmatprep.subr.mxu0 0.0
  %274 = vmatpush2.msra.mxu0 0.0
  %275 = vmatprep.subr.mxu0 0.0
  %276 = vmatpush2.msra.mxu0 0.0
  %277 = vmatprep.subr.mxu0 0.0
  %278 = vmatpush2.msra.mxu0 0.0
  %279 = vmatprep.subr.mxu0 0.0
  %280 = vmatpush2.msra.mxu0 0.0
  %281 = vmatprep.subr.mxu0 0.0
  %282 = vmatpush2.msra.mxu0 0.0
  %283 = vmatprep.subr.mxu0 0.0
  %284 = vmatpush2.msra.mxu0 0.0
  %285 = vmatprep.subr.mxu0 0.0
  %286 = vmatpush2.msra.mxu0 0.0
  %287 = vmatprep.subr.mxu0 0.0
  %288 = vmatpush2.msra.mxu0 0.0
  %289 = vmatprep.subr.mxu0 0.0
  %290 = vmatpush2.msra.mxu0 0.0
  %291 = vmatprep.mubr.f32.mxu0 0.0
  %292 = vmatmul.mubr.f32.gmra.mxu0 %v222
  %v293 = vpop.f32.mrf.mxu0
  %v294 = vadd.f32 0.0, %v293
  %v295 = vpop.f32.mrf.mxu0
  %296 = vmatprep.mubr.f32.mxu0 0.0
  %297 = vmatmul.mubr.f32.gmra.mxu0 %v225
  %v298 = vpop.f32.mrf.mxu0
  %v299 = vadd.f32 0.0, %v298
  %v300 = vpop.f32.mrf.mxu0
  %301 = vdwg.mxu0
  %302 = vmatprep.subr.mxu0 0.0
  %303 = vmatpush1.msra.mxu0 0.0
  %304 = vmatprep.subr.mxu0 0.0
  %305 = vmatpush1.msra.mxu0 0.0
  %306 = vmatprep.subr.mxu0 0.0
  %307 = vmatpush1.msra.mxu0 0.0
  %308 = vmatprep.subr.mxu0 0.0
  %309 = vmatpush1.msra.mxu0 0.0
  %310 = vmatprep.subr.mxu0 0.0
  %311 = vmatpush1.msra.mxu0 0.0
  %312 = vmatprep.subr.mxu0 0.0
  %313 = vmatpush1.msra.mxu0 0.0
  %314 = vmatprep.subr.mxu0 0.0
  %315 = vmatpush1.msra.mxu0 0.0
  %316 = vmatprep.subr.mxu0 0.0
  %317 = vmatpush1.msra.mxu0 0.0
  %318 = vmatprep.subr.mxu0 0.0
  %319 = vmatpush1.msra.mxu0 0.0
  %320 = vmatprep.subr.mxu0 0.0
  %321 = vmatpush1.msra.mxu0 0.0
  %322 = vmatprep.subr.mxu0 0.0
  %323 = vmatpush1.msra.mxu0 0.0
  %324 = vmatprep.subr.mxu0 0.0
  %325 = vmatpush1.msra.mxu0 0.0
  %326 = vmatprep.subr.mxu0 0.0
  %327 = vmatpush1.msra.mxu0 %v113
  %328 = vmatprep.subr.mxu0 0.0
  %329 = vmatpush1.msra.mxu0 %v112
  %330 = vmatprep.subr.mxu0 0.0
  %331 = vmatpush1.msra.mxu0 %v111
  %332 = vmatprep.subr.mxu0 0.0
  %333 = vmatpush1.msra.mxu0 %v110
  %334 = vmatprep.subr.mxu0 0.0
  %335 = vmatpush2.msra.mxu0 0.0
  %336 = vmatprep.subr.mxu0 0.0
  %337 = vmatpush2.msra.mxu0 0.0
  %338 = vmatprep.subr.mxu0 0.0
  %339 = vmatpush2.msra.mxu0 0.0
  %340 = vmatprep.subr.mxu0 0.0
  %341 = vmatpush2.msra.mxu0 0.0
  %342 = vmatprep.subr.mxu0 0.0
  %343 = vmatpush2.msra.mxu0 0.0
  %344 = vmatprep.subr.mxu0 0.0
  %345 = vmatpush2.msra.mxu0 0.0
  %346 = vmatprep.subr.mxu0 0.0
  %347 = vmatpush2.msra.mxu0 0.0
  %348 = vmatprep.subr.mxu0 0.0
  %349 = vmatpush2.msra.mxu0 0.0
  %350 = vmatprep.subr.mxu0 0.0
  %351 = vmatpush2.msra.mxu0 0.0
  %352 = vmatprep.subr.mxu0 0.0
  %353 = vmatpush2.msra.mxu0 0.0
  %354 = vmatprep.subr.mxu0 0.0
  %355 = vmatpush2.msra.mxu0 0.0
  %356 = vmatprep.subr.mxu0 0.0
  %357 = vmatpush2.msra.mxu0 0.0
  %358 = vmatprep.subr.mxu0 0.0
  %359 = vmatpush2.msra.mxu0 0.0
  %360 = vmatprep.subr.mxu0 0.0
  %361 = vmatpush2.msra.mxu0 0.0
  %362 = vmatprep.subr.mxu0 0.0
  %363 = vmatpush2.msra.mxu0 0.0
  %364 = vmatprep.subr.mxu0 0.0
  %365 = vmatpush2.msra.mxu0 0.0
  %366 = vmatprep.mubr.f32.mxu0 0.0
  %367 = vmatmul.mubr.f32.gmra.mxu0 %v222
  %v368 = vpop.f32.mrf.mxu0
  %v369 = vadd.f32 0.0, %v368
  %v370 = vpop.f32.mrf.mxu0
  %371 = vmatprep.mubr.f32.mxu0 0.0
  %372 = vmatmul.mubr.f32.gmra.mxu0 %v225
  %v373 = vpop.f32.mrf.mxu0
  %v374 = vadd.f32 0.0, %v373
  %v375 = vpop.f32.mrf.mxu0
  %376 = vdwg.mxu0
  %v377 = vmul.f32 %v213, %v98
  %v378 = vmul.f32 %v213, %v99
  %v379 = vmul.f32 %v213, %v100
  %v380 = vmul.f32 %v213, %v101
  %v382 = vsel %vm139, %v377, 0
  %v385 = vsel %vm139, %v378, 0
  %v388 = vsel %vm139, %v379, 0
  %v391 = vsel %vm139, %v380, 0
  %v394 = vsel %vm139, %v294, 0
  %396 = vmatprep.subr.mxu0 0.0
  %397 = vmatpush1.xpose.msra.mxu0 0.0
  %398 = vmatprep.subr.mxu0 0.0
  %399 = vmatpush1.xpose.msra.mxu0 0.0
  %400 = vmatprep.subr.mxu0 0.0
  %401 = vmatpush1.xpose.msra.mxu0 0.0
  %402 = vmatprep.subr.mxu0 0.0
  %403 = vmatpush1.xpose.msra.mxu0 0.0
  %404 = vmatprep.subr.mxu0 0.0
  %405 = vmatpush1.xpose.msra.mxu0 0.0
  %406 = vmatprep.subr.mxu0 0.0
  %407 = vmatpush1.xpose.msra.mxu0 0.0
  %408 = vmatprep.subr.mxu0 0.0
  %409 = vmatpush1.xpose.msra.mxu0 0.0
  %410 = vmatprep.subr.mxu0 0.0
  %411 = vmatpush1.xpose.msra.mxu0 0.0
  %412 = vmatprep.subr.mxu0 0.0
  %413 = vmatpush1.xpose.msra.mxu0 0.0
  %414 = vmatprep.subr.mxu0 0.0
  %415 = vmatpush1.xpose.msra.mxu0 0.0
  %416 = vmatprep.subr.mxu0 0.0
  %417 = vmatpush1.xpose.msra.mxu0 0.0
  %418 = vmatprep.subr.mxu0 0.0
  %419 = vmatpush1.xpose.msra.mxu0 0.0
  %420 = vmatprep.subr.mxu0 0.0
  %421 = vmatpush1.xpose.msra.mxu0 0.0
  %422 = vmatprep.subr.mxu0 0.0
  %423 = vmatpush1.xpose.msra.mxu0 0.0
  %424 = vmatprep.subr.mxu0 0.0
  %425 = vmatpush1.xpose.msra.mxu0 0.0
  %426 = vmatprep.subr.mxu0 0.0
  %427 = vmatpush1.xpose.msra.mxu0 %v394
  %428 = vmatprep.subr.mxu0 0.0
  %429 = vmatpush2.xpose.msra.mxu0 0.0
  %430 = vmatprep.subr.mxu0 0.0
  %431 = vmatpush2.xpose.msra.mxu0 0.0
  %432 = vmatprep.subr.mxu0 0.0
  %433 = vmatpush2.xpose.msra.mxu0 0.0
  %434 = vmatprep.subr.mxu0 0.0
  %435 = vmatpush2.xpose.msra.mxu0 0.0
  %436 = vmatprep.subr.mxu0 0.0
  %437 = vmatpush2.xpose.msra.mxu0 0.0
  %438 = vmatprep.subr.mxu0 0.0
  %439 = vmatpush2.xpose.msra.mxu0 0.0
  %440 = vmatprep.subr.mxu0 0.0
  %441 = vmatpush2.xpose.msra.mxu0 0.0
  %442 = vmatprep.subr.mxu0 0.0
  %443 = vmatpush2.xpose.msra.mxu0 0.0
  %444 = vmatprep.subr.mxu0 0.0
  %445 = vmatpush2.xpose.msra.mxu0 0.0
  %446 = vmatprep.subr.mxu0 0.0
  %447 = vmatpush2.xpose.msra.mxu0 0.0
  %448 = vmatprep.subr.mxu0 0.0
  %449 = vmatpush2.xpose.msra.mxu0 0.0
  %450 = vmatprep.subr.mxu0 0.0
  %451 = vmatpush2.xpose.msra.mxu0 0.0
  %452 = vmatprep.subr.mxu0 0.0
  %453 = vmatpush2.xpose.msra.mxu0 0.0
  %454 = vmatprep.subr.mxu0 0.0
  %455 = vmatpush2.xpose.msra.mxu0 0.0
  %456 = vmatprep.subr.mxu0 0.0
  %457 = vmatpush2.xpose.msra.mxu0 0.0
  %458 = vmatprep.subr.mxu0 0.0
  %459 = vmatpush2.xpose.msra.mxu0 0.0
  %460 = vmatprep.mubr.f32.mxu0 0.0
  %461 = vmatmul.mubr.f32.gmra.mxu0 %v382
  %v462 = vpop.f32.mrf.mxu0
  %v463 = vadd.f32 0.0, %v462
  %v464 = vpop.f32.mrf.mxu0
  %465 = vmatprep.mubr.f32.mxu0 0.0
  %466 = vmatmul.mubr.f32.gmra.mxu0 %v385
  %v467 = vpop.f32.mrf.mxu0
  %v468 = vadd.f32 0.0, %v467
  %v469 = vpop.f32.mrf.mxu0
  %470 = vmatprep.mubr.f32.mxu0 0.0
  %471 = vmatmul.mubr.f32.gmra.mxu0 %v388
  %v472 = vpop.f32.mrf.mxu0
  %v473 = vadd.f32 0.0, %v472
  %v474 = vpop.f32.mrf.mxu0
  %475 = vmatprep.mubr.f32.mxu0 0.0
  %476 = vmatmul.mubr.f32.gmra.mxu0 %v391
  %v477 = vpop.f32.mrf.mxu0
  %v478 = vadd.f32 0.0, %v477
  %v479 = vpop.f32.mrf.mxu0
  %480 = vdwg.mxu0
  %vm481 = vcmask 64512
  %v483 = vsel %vm481, %v463, 0
  %v486 = vsel %vm481, %v468, 0
  %v489 = vsel %vm481, %v473, 0
  %v492 = vsel %vm481, %v478, 0
  %494 = vmatprep.subr.mxu0 0.0
  %495 = vmatpush1.msra.mxu0 0.0
  %496 = vmatprep.subr.mxu0 0.0
  %497 = vmatpush1.msra.mxu0 0.0
  %498 = vmatprep.subr.mxu0 0.0
  %499 = vmatpush1.msra.mxu0 0.0
  %500 = vmatprep.subr.mxu0 0.0
  %501 = vmatpush1.msra.mxu0 0.0
  %502 = vmatprep.subr.mxu0 0.0
  %503 = vmatpush1.msra.mxu0 0.0
  %504 = vmatprep.subr.mxu0 0.0
  %505 = vmatpush1.msra.mxu0 0.0
  %506 = vmatprep.subr.mxu0 0.0
  %507 = vmatpush1.msra.mxu0 0.0
  %508 = vmatprep.subr.mxu0 0.0
  %509 = vmatpush1.msra.mxu0 0.0
  %510 = vmatprep.subr.mxu0 0.0
  %511 = vmatpush1.msra.mxu0 0.0
  %512 = vmatprep.subr.mxu0 0.0
  %513 = vmatpush1.msra.mxu0 0.0
  %514 = vmatprep.subr.mxu0 0.0
  %515 = vmatpush1.msra.mxu0 0.0
  %516 = vmatprep.subr.mxu0 0.0
  %517 = vmatpush1.msra.mxu0 0.0
  %518 = vmatprep.subr.mxu0 0.0
  %519 = vmatpush1.msra.mxu0 0.0
  %520 = vmatprep.subr.mxu0 0.0
  %521 = vmatpush1.msra.mxu0 0.0
  %522 = vmatprep.subr.mxu0 0.0
  %523 = vmatpush1.msra.mxu0 0.0
  %524 = vmatprep.subr.mxu0 0.0
  %525 = vmatpush1.msra.mxu0 %v81
  %526 = vmatprep.subr.mxu0 0.0
  %527 = vmatpush2.msra.mxu0 0.0
  %528 = vmatprep.subr.mxu0 0.0
  %529 = vmatpush2.msra.mxu0 0.0
  %530 = vmatprep.subr.mxu0 0.0
  %531 = vmatpush2.msra.mxu0 0.0
  %532 = vmatprep.subr.mxu0 0.0
  %533 = vmatpush2.msra.mxu0 0.0
  %534 = vmatprep.subr.mxu0 0.0
  %535 = vmatpush2.msra.mxu0 0.0
  %536 = vmatprep.subr.mxu0 0.0
  %537 = vmatpush2.msra.mxu0 0.0
  %538 = vmatprep.subr.mxu0 0.0
  %539 = vmatpush2.msra.mxu0 0.0
  %540 = vmatprep.subr.mxu0 0.0
  %541 = vmatpush2.msra.mxu0 0.0
  %542 = vmatprep.subr.mxu0 0.0
  %543 = vmatpush2.msra.mxu0 0.0
  %544 = vmatprep.subr.mxu0 0.0
  %545 = vmatpush2.msra.mxu0 0.0
  %546 = vmatprep.subr.mxu0 0.0
  %547 = vmatpush2.msra.mxu0 0.0
  %548 = vmatprep.subr.mxu0 0.0
  %549 = vmatpush2.msra.mxu0 0.0
  %550 = vmatprep.subr.mxu0 0.0
  %551 = vmatpush2.msra.mxu0 0.0
  %552 = vmatprep.subr.mxu0 0.0
  %553 = vmatpush2.msra.mxu0 0.0
  %554 = vmatprep.subr.mxu0 0.0
  %555 = vmatpush2.msra.mxu0 0.0
  %556 = vmatprep.subr.mxu0 0.0
  %557 = vmatpush2.msra.mxu0 0.0
  %558 = vmatprep.mubr.f32.mxu0 0.0
  %559 = vmatmul.mubr.f32.gmra.mxu0 %v483
  %v560 = vpop.f32.mrf.mxu0
  %v561 = vadd.f32 0.0, %v560
  %v562 = vpop.f32.mrf.mxu0
  %563 = vmatprep.mubr.f32.mxu0 0.0
  %564 = vmatmul.mubr.f32.gmra.mxu0 %v486
  %v565 = vpop.f32.mrf.mxu0
  %v566 = vadd.f32 0.0, %v565
  %v567 = vpop.f32.mrf.mxu0
  %568 = vmatprep.mubr.f32.mxu0 0.0
  %569 = vmatmul.mubr.f32.gmra.mxu0 %v489
  %v570 = vpop.f32.mrf.mxu0
  %v571 = vadd.f32 0.0, %v570
  %v572 = vpop.f32.mrf.mxu0
  %573 = vmatprep.mubr.f32.mxu0 0.0
  %574 = vmatmul.mubr.f32.gmra.mxu0 %v492
  %v575 = vpop.f32.mrf.mxu0
  %v576 = vadd.f32 0.0, %v575
  %v577 = vpop.f32.mrf.mxu0
  %578 = vdwg.mxu0
  %v579 = vmul.f32 %v561, %v119
  %v580 = vmul.f32 %v566, %v120
  %v581 = vmul.f32 %v571, %v121
  %v582 = vmul.f32 %v576, %v122
  %v583 = vld [vmem:[%s2] sm:$0xff]
  %v584 = vld [vmem:[%s2 + $0x8] sm:$0xff]
  %v585 = vld [vmem:[%s2 + $0x10] sm:$0xff]
  %v586 = vld [vmem:[%s2 + $0x18] sm:$0xff]
  %v587 = vmul.f32 %v583, %v123
  %v588 = vmul.f32 %v584, %v124
  %v589 = vmul.f32 %v585, %v125
  %v590 = vmul.f32 %v586, %v126
  %v591 = vadd.f32 %v579, %v587
  %v592 = vadd.f32 %v580, %v588
  %v593 = vadd.f32 %v581, %v589
  %v594 = vadd.f32 %v582, %v590
  %v595 = vadd.f32 %v591, %v127
  %v596 = vadd.f32 %v592, %v128
  %v597 = vadd.f32 %v593, %v129
  %v598 = vadd.f32 %v594, %v130
  %v599 = vmax.f32 %v595, 0.0
  %v600 = vmax.f32 %v596, 0.0
  %v601 = vmax.f32 %v597, 0.0
  %v602 = vmax.f32 %v598, 0.0
  %v603 = vmul.f32 %v599, %v131
  %v604 = vmul.f32 %v600, %v132
  %v605 = vmul.f32 %v601, %v133
  %v606 = vmul.f32 %v602, %v134
  %607 = vmatprep.subr.mxu0 0.0
  %608 = vmatpush1.msra.mxu0 %v97
  %609 = vmatprep.subr.mxu0 0.0
  %610 = vmatpush1.msra.mxu0 %v96
  %611 = vmatprep.subr.mxu0 0.0
  %612 = vmatpush1.msra.mxu0 %v95
  %613 = vmatprep.subr.mxu0 0.0
  %614 = vmatpush1.msra.mxu0 %v94
  %615 = vmatprep.subr.mxu0 0.0
  %616 = vmatpush1.msra.mxu0 %v93
  %617 = vmatprep.subr.mxu0 0.0
  %618 = vmatpush1.msra.mxu0 %v92
  %619 = vmatprep.subr.mxu0 0.0
  %620 = vmatpush1.msra.mxu0 %v91
  %621 = vmatprep.subr.mxu0 0.0
  %622 = vmatpush1.msra.mxu0 %v90
  %623 = vmatprep.subr.mxu0 0.0
  %624 = vmatpush1.msra.mxu0 %v89
  %625 = vmatprep.subr.mxu0 0.0
  %626 = vmatpush1.msra.mxu0 %v88
  %627 = vmatprep.subr.mxu0 0.0
  %628 = vmatpush1.msra.mxu0 %v87
  %629 = vmatprep.subr.mxu0 0.0
  %630 = vmatpush1.msra.mxu0 %v86
  %631 = vmatprep.subr.mxu0 0.0
  %632 = vmatpush1.msra.mxu0 %v85
  %633 = vmatprep.subr.mxu0 0.0
  %634 = vmatpush1.msra.mxu0 %v84
  %635 = vmatprep.subr.mxu0 0.0
  %636 = vmatpush1.msra.mxu0 %v83
  %637 = vmatprep.subr.mxu0 0.0
  %638 = vmatpush1.msra.mxu0 %v82
  %639 = vmatprep.subr.mxu0 0.0
  %640 = vmatpush2.msra.mxu0 0.0
  %641 = vmatprep.subr.mxu0 0.0
  %642 = vmatpush2.msra.mxu0 0.0
  %643 = vmatprep.subr.mxu0 0.0
  %644 = vmatpush2.msra.mxu0 0.0
  %645 = vmatprep.subr.mxu0 0.0
  %646 = vmatpush2.msra.mxu0 0.0
  %647 = vmatprep.subr.mxu0 0.0
  %648 = vmatpush2.msra.mxu0 0.0
  %649 = vmatprep.subr.mxu0 0.0
  %650 = vmatpush2.msra.mxu0 0.0
  %651 = vmatprep.subr.mxu0 0.0
  %652 = vmatpush2.msra.mxu0 0.0
  %653 = vmatprep.subr.mxu0 0.0
  %654 = vmatpush2.msra.mxu0 0.0
  %655 = vmatprep.subr.mxu0 0.0
  %656 = vmatpush2.msra.mxu0 0.0
  %657 = vmatprep.subr.mxu0 0.0
  %658 = vmatpush2.msra.mxu0 0.0
  %659 = vmatprep.subr.mxu0 0.0
  %660 = vmatpush2.msra.mxu0 0.0
  %661 = vmatprep.subr.mxu0 0.0
  %662 = vmatpush2.msra.mxu0 0.0
  %663 = vmatprep.subr.mxu0 0.0
  %664 = vmatpush2.msra.mxu0 0.0
  %665 = vmatprep.subr.mxu0 0.0
  %666 = vmatpush2.msra.mxu0 0.0
  %667 = vmatprep.subr.mxu0 0.0
  %668 = vmatpush2.msra.mxu0 0.0
  %669 = vmatprep.subr.mxu0 0.0
  %670 = vmatpush2.msra.mxu0 0.0
  %671 = vmatprep.mubr.f32.mxu0 0.0
  %672 = vmatmul.mubr.f32.gmra.mxu0 %v603
  %v673 = vpop.f32.mrf.mxu0
  %v674 = vadd.f32 %v135, %v673
  %v675 = vpop.f32.mrf.mxu0
  %676 = vmatprep.mubr.f32.mxu0 0.0
  %677 = vmatmul.mubr.f32.gmra.mxu0 %v604
  %v678 = vpop.f32.mrf.mxu0
  %v679 = vadd.f32 %v136, %v678
  %v680 = vpop.f32.mrf.mxu0
  %681 = vmatprep.mubr.f32.mxu0 0.0
  %682 = vmatmul.mubr.f32.gmra.mxu0 %v605
  %v683 = vpop.f32.mrf.mxu0
  %v684 = vadd.f32 %v137, %v683
  %v685 = vpop.f32.mrf.mxu0
  %686 = vmatprep.mubr.f32.mxu0 0.0
  %687 = vmatmul.mubr.f32.gmra.mxu0 %v606
  %v688 = vpop.f32.mrf.mxu0
  %v689 = vadd.f32 %v138, %v688
  %v690 = vpop.f32.mrf.mxu0
  %691 = vdwg.mxu0
  %v692 = vsel %vm481, %v674, -inf
  %693 = vmax.xlane.f32.xlu0 %v692
  %v694 = vpop.xlane.xlu0 %693
  %v695 = vsel %vm481, %v679, -inf
  %696 = vmax.xlane.f32.xlu0 %v695
  %v697 = vpop.xlane.xlu0 %696
  %v698 = vsel %vm481, %v684, -inf
  %699 = vmax.xlane.f32.xlu0 %v698
  %v700 = vpop.xlane.xlu0 %699
  %v701 = vsel %vm481, %v689, -inf
  %702 = vmax.xlane.f32.xlu0 %v701
  %v703 = vpop.xlane.xlu0 %702
  %v704 = vsub.f32 %v674, %v694
  %v705 = vsub.f32 %v679, %v697
  %v706 = vsub.f32 %v684, %v700
  %v707 = vsub.f32 %v689, %v703
  %v708 = vmul.f32 %v704, 1.442695
  %v709 = vpow.pop %v708
  %v710 = vmul.f32 %v705, 1.442695
  %v711 = vpow.pop %v710
  %v712 = vmul.f32 %v706, 1.442695
  %v713 = vpow.pop %v712
  %v714 = vmul.f32 %v707, 1.442695
  %v715 = vpow.pop %v714
  %v716 = vsel %vm481, %v709, 0.0
  %717 = vadd.xlane.f32.xlu0 %v716
  %v718 = vpop.xlane.xlu0 %717
  %v719 = vsel %vm481, %v711, 0.0
  %720 = vadd.xlane.f32.xlu0 %v719
  %v721 = vpop.xlane.xlu0 %720
  %v722 = vsel %vm481, %v713, 0.0
  %723 = vadd.xlane.f32.xlu0 %v722
  %v724 = vpop.xlane.xlu0 %723
  %v725 = vsel %vm481, %v715, 0.0
  %726 = vadd.xlane.f32.xlu0 %v725
  %v727 = vpop.xlane.xlu0 %726
  %v728 = vrcp.pop %v718
  %v729 = vrcp.pop %v721
  %v730 = vrcp.pop %v724
  %v731 = vrcp.pop %v727
  %v732 = vmul.f32 %v709, %v728
  %v733 = vmul.f32 %v711, %v729
  %v734 = vmul.f32 %v713, %v730
  %v735 = vmul.f32 %v715, %v731
  %v737 = vsel %vm481, %v732, 0
  %v740 = vsel %vm481, %v733, 0
  %v743 = vsel %vm481, %v734, 0
  %v746 = vsel %vm481, %v735, 0
  %748 = vmatprep.subr.mxu0 0.0
  %749 = vmatpush1.msra.mxu0 0.0
  %750 = vmatprep.subr.mxu0 0.0
  %751 = vmatpush1.msra.mxu0 0.0
  %752 = vmatprep.subr.mxu0 0.0
  %753 = vmatpush1.msra.mxu0 0.0
  %754 = vmatprep.subr.mxu0 0.0
  %755 = vmatpush1.msra.mxu0 0.0
  %756 = vmatprep.subr.mxu0 0.0
  %757 = vmatpush1.msra.mxu0 0.0
  %758 = vmatprep.subr.mxu0 0.0
  %759 = vmatpush1.msra.mxu0 0.0
  %760 = vmatprep.subr.mxu0 0.0
  %761 = vmatpush1.msra.mxu0 0.0
  %762 = vmatprep.subr.mxu0 0.0
  %763 = vmatpush1.msra.mxu0 0.0
  %764 = vmatprep.subr.mxu0 0.0
  %765 = vmatpush1.msra.mxu0 0.0
  %766 = vmatprep.subr.mxu0 0.0
  %767 = vmatpush1.msra.mxu0 0.0
  %768 = vmatprep.subr.mxu0 0.0
  %769 = vmatpush1.msra.mxu0 0.0
  %770 = vmatprep.subr.mxu0 0.0
  %771 = vmatpush1.msra.mxu0 0.0
  %772 = vmatprep.subr.mxu0 0.0
  %773 = vmatpush1.msra.mxu0 0.0
  %774 = vmatprep.subr.mxu0 0.0
  %775 = vmatpush1.msra.mxu0 0.0
  %776 = vmatprep.subr.mxu0 0.0
  %777 = vmatpush1.msra.mxu0 0.0
  %778 = vmatprep.subr.mxu0 0.0
  %779 = vmatpush1.msra.mxu0 %v369
  %780 = vmatprep.subr.mxu0 0.0
  %781 = vmatpush2.msra.mxu0 0.0
  %782 = vmatprep.subr.mxu0 0.0
  %783 = vmatpush2.msra.mxu0 0.0
  %784 = vmatprep.subr.mxu0 0.0
  %785 = vmatpush2.msra.mxu0 0.0
  %786 = vmatprep.subr.mxu0 0.0
  %787 = vmatpush2.msra.mxu0 0.0
  %788 = vmatprep.subr.mxu0 0.0
  %789 = vmatpush2.msra.mxu0 0.0
  %790 = vmatprep.subr.mxu0 0.0
  %791 = vmatpush2.msra.mxu0 0.0
  %792 = vmatprep.subr.mxu0 0.0
  %793 = vmatpush2.msra.mxu0 0.0
  %794 = vmatprep.subr.mxu0 0.0
  %795 = vmatpush2.msra.mxu0 0.0
  %796 = vmatprep.subr.mxu0 0.0
  %797 = vmatpush2.msra.mxu0 0.0
  %798 = vmatprep.subr.mxu0 0.0
  %799 = vmatpush2.msra.mxu0 0.0
  %800 = vmatprep.subr.mxu0 0.0
  %801 = vmatpush2.msra.mxu0 0.0
  %802 = vmatprep.subr.mxu0 0.0
  %803 = vmatpush2.msra.mxu0 0.0
  %804 = vmatprep.subr.mxu0 0.0
  %805 = vmatpush2.msra.mxu0 0.0
  %806 = vmatprep.subr.mxu0 0.0
  %807 = vmatpush2.msra.mxu0 0.0
  %808 = vmatprep.subr.mxu0 0.0
  %809 = vmatpush2.msra.mxu0 0.0
  %810 = vmatprep.subr.mxu0 0.0
  %811 = vmatpush2.msra.mxu0 0.0
  %812 = vmatprep.mubr.f32.mxu0 0.0
  %813 = vmatmul.mubr.f32.gmra.mxu0 %v737
  %v814 = vpop.f32.mrf.mxu0
  %v815 = vadd.f32 0.0, %v814
  %v816 = vpop.f32.mrf.mxu0
  %817 = vmatprep.mubr.f32.mxu0 0.0
  %818 = vmatmul.mubr.f32.gmra.mxu0 %v740
  %v819 = vpop.f32.mrf.mxu0
  %v820 = vadd.f32 0.0, %v819
  %v821 = vpop.f32.mrf.mxu0
  %822 = vmatprep.mubr.f32.mxu0 0.0
  %823 = vmatmul.mubr.f32.gmra.mxu0 %v743
  %v824 = vpop.f32.mrf.mxu0
  %v825 = vadd.f32 0.0, %v824
  %v826 = vpop.f32.mrf.mxu0
  %827 = vmatprep.mubr.f32.mxu0 0.0
  %828 = vmatmul.mubr.f32.gmra.mxu0 %v746
  %v829 = vpop.f32.mrf.mxu0
  %v830 = vadd.f32 0.0, %v829
  %v831 = vpop.f32.mrf.mxu0
  %832 = vdwg.mxu0
  %v833 = vmul.f32 %v815, %v98
  %v834 = vmul.f32 %v820, %v99
  %v835 = vmul.f32 %v825, %v100
  %v836 = vmul.f32 %v830, %v101
  %v837 = vadd.f32 %v833, %v834
  %v838 = vadd.f32 %v837, %v835
  %v839 = vadd.f32 %v838, %v836
  %840 = vst.msk [vmem:[#allocation2] sm:$0xff] %vm139, %v839
  %v841 = vmul.f32 %v218, %v98
  %v842 = vmul.f32 %v218, %v99
  %v843 = vmul.f32 %v218, %v100
  %v844 = vmul.f32 %v218, %v101
  %v846 = vsel %vm139, %v841, 0
  %v849 = vsel %vm139, %v842, 0
  %v852 = vsel %vm139, %v843, 0
  %v855 = vsel %vm139, %v844, 0
  %v858 = vsel %vm139, %v299, 0
  %860 = vmatprep.subr.mxu0 0.0
  %861 = vmatpush1.xpose.msra.mxu0 0.0
  %862 = vmatprep.subr.mxu0 0.0
  %863 = vmatpush1.xpose.msra.mxu0 0.0
  %864 = vmatprep.subr.mxu0 0.0
  %865 = vmatpush1.xpose.msra.mxu0 0.0
  %866 = vmatprep.subr.mxu0 0.0
  %867 = vmatpush1.xpose.msra.mxu0 0.0
  %868 = vmatprep.subr.mxu0 0.0
  %869 = vmatpush1.xpose.msra.mxu0 0.0
  %870 = vmatprep.subr.mxu0 0.0
  %871 = vmatpush1.xpose.msra.mxu0 0.0
  %872 = vmatprep.subr.mxu0 0.0
  %873 = vmatpush1.xpose.msra.mxu0 0.0
  %874 = vmatprep.subr.mxu0 0.0
  %875 = vmatpush1.xpose.msra.mxu0 0.0
  %876 = vmatprep.subr.mxu0 0.0
  %877 = vmatpush1.xpose.msra.mxu0 0.0
  %878 = vmatprep.subr.mxu0 0.0
  %879 = vmatpush1.xpose.msra.mxu0 0.0
  %880 = vmatprep.subr.mxu0 0.0
  %881 = vmatpush1.xpose.msra.mxu0 0.0
  %882 = vmatprep.subr.mxu0 0.0
  %883 = vmatpush1.xpose.msra.mxu0 0.0
  %884 = vmatprep.subr.mxu0 0.0
  %885 = vmatpush1.xpose.msra.mxu0 0.0
  %886 = vmatprep.subr.mxu0 0.0
  %887 = vmatpush1.xpose.msra.mxu0 0.0
  %888 = vmatprep.subr.mxu0 0.0
  %889 = vmatpush1.xpose.msra.mxu0 0.0
  %890 = vmatprep.subr.mxu0 0.0
  %891 = vmatpush1.xpose.msra.mxu0 %v858
  %892 = vmatprep.subr.mxu0 0.0
  %893 = vmatpush2.xpose.msra.mxu0 0.0
  %894 = vmatprep.subr.mxu0 0.0
  %895 = vmatpush2.xpose.msra.mxu0 0.0
  %896 = vmatprep.subr.mxu0 0.0
  %897 = vmatpush2.xpose.msra.mxu0 0.0
  %898 = vmatprep.subr.mxu0 0.0
  %899 = vmatpush2.xpose.msra.mxu0 0.0
  %900 = vmatprep.subr.mxu0 0.0
  %901 = vmatpush2.xpose.msra.mxu0 0.0
  %902 = vmatprep.subr.mxu0 0.0
  %903 = vmatpush2.xpose.msra.mxu0 0.0
  %904 = vmatprep.subr.mxu0 0.0
  %905 = vmatpush2.xpose.msra.mxu0 0.0
  %906 = vmatprep.subr.mxu0 0.0
  %907 = vmatpush2.xpose.msra.mxu0 0.0
  %908 = vmatprep.subr.mxu0 0.0
  %909 = vmatpush2.xpose.msra.mxu0 0.0
  %910 = vmatprep.subr.mxu0 0.0
  %911 = vmatpush2.xpose.msra.mxu0 0.0
  %912 = vmatprep.subr.mxu0 0.0
  %913 = vmatpush2.xpose.msra.mxu0 0.0
  %914 = vmatprep.subr.mxu0 0.0
  %915 = vmatpush2.xpose.msra.mxu0 0.0
  %916 = vmatprep.subr.mxu0 0.0
  %917 = vmatpush2.xpose.msra.mxu0 0.0
  %918 = vmatprep.subr.mxu0 0.0
  %919 = vmatpush2.xpose.msra.mxu0 0.0
  %920 = vmatprep.subr.mxu0 0.0
  %921 = vmatpush2.xpose.msra.mxu0 0.0
  %922 = vmatprep.subr.mxu0 0.0
  %923 = vmatpush2.xpose.msra.mxu0 0.0
  %924 = vmatprep.mubr.f32.mxu0 0.0
  %925 = vmatmul.mubr.f32.gmra.mxu0 %v846
  %v926 = vpop.f32.mrf.mxu0
  %v927 = vadd.f32 0.0, %v926
  %v928 = vpop.f32.mrf.mxu0
  %929 = vmatprep.mubr.f32.mxu0 0.0
  %930 = vmatmul.mubr.f32.gmra.mxu0 %v849
  %v931 = vpop.f32.mrf.mxu0
  %v932 = vadd.f32 0.0, %v931
  %v933 = vpop.f32.mrf.mxu0
  %934 = vmatprep.mubr.f32.mxu0 0.0
  %935 = vmatmul.mubr.f32.gmra.mxu0 %v852
  %v936 = vpop.f32.mrf.mxu0
  %v937 = vadd.f32 0.0, %v936
  %v938 = vpop.f32.mrf.mxu0
  %939 = vmatprep.mubr.f32.mxu0 0.0
  %940 = vmatmul.mubr.f32.gmra.mxu0 %v855
  %v941 = vpop.f32.mrf.mxu0
  %v942 = vadd.f32 0.0, %v941
  %v943 = vpop.f32.mrf.mxu0
  %944 = vdwg.mxu0
  %v946 = vsel %vm481, %v927, 0
  %v949 = vsel %vm481, %v932, 0
  %v952 = vsel %vm481, %v937, 0
  %v955 = vsel %vm481, %v942, 0
  %957 = vmatprep.subr.mxu0 0.0
  %958 = vmatpush1.msra.mxu0 0.0
  %959 = vmatprep.subr.mxu0 0.0
  %960 = vmatpush1.msra.mxu0 0.0
  %961 = vmatprep.subr.mxu0 0.0
  %962 = vmatpush1.msra.mxu0 0.0
  %963 = vmatprep.subr.mxu0 0.0
  %964 = vmatpush1.msra.mxu0 0.0
  %965 = vmatprep.subr.mxu0 0.0
  %966 = vmatpush1.msra.mxu0 0.0
  %967 = vmatprep.subr.mxu0 0.0
  %968 = vmatpush1.msra.mxu0 0.0
  %969 = vmatprep.subr.mxu0 0.0
  %970 = vmatpush1.msra.mxu0 0.0
  %971 = vmatprep.subr.mxu0 0.0
  %972 = vmatpush1.msra.mxu0 0.0
  %973 = vmatprep.subr.mxu0 0.0
  %974 = vmatpush1.msra.mxu0 0.0
  %975 = vmatprep.subr.mxu0 0.0
  %976 = vmatpush1.msra.mxu0 0.0
  %977 = vmatprep.subr.mxu0 0.0
  %978 = vmatpush1.msra.mxu0 0.0
  %979 = vmatprep.subr.mxu0 0.0
  %980 = vmatpush1.msra.mxu0 0.0
  %981 = vmatprep.subr.mxu0 0.0
  %982 = vmatpush1.msra.mxu0 0.0
  %983 = vmatprep.subr.mxu0 0.0
  %984 = vmatpush1.msra.mxu0 0.0
  %985 = vmatprep.subr.mxu0 0.0
  %986 = vmatpush1.msra.mxu0 0.0
  %987 = vmatprep.subr.mxu0 0.0
  %988 = vmatpush1.msra.mxu0 %v81
  %989 = vmatprep.subr.mxu0 0.0
  %990 = vmatpush2.msra.mxu0 0.0
  %991 = vmatprep.subr.mxu0 0.0
  %992 = vmatpush2.msra.mxu0 0.0
  %993 = vmatprep.subr.mxu0 0.0
  %994 = vmatpush2.msra.mxu0 0.0
  %995 = vmatprep.subr.mxu0 0.0
  %996 = vmatpush2.msra.mxu0 0.0
  %997 = vmatprep.subr.mxu0 0.0
  %998 = vmatpush2.msra.mxu0 0.0
  %999 = vmatprep.subr.mxu0 0.0
  %1000 = vmatpush2.msra.mxu0 0.0
  %1001 = vmatprep.subr.mxu0 0.0
  %1002 = vmatpush2.msra.mxu0 0.0
  %1003 = vmatprep.subr.mxu0 0.0
  %1004 = vmatpush2.msra.mxu0 0.0
  %1005 = vmatprep.subr.mxu0 0.0
  %1006 = vmatpush2.msra.mxu0 0.0
  %1007 = vmatprep.subr.mxu0 0.0
  %1008 = vmatpush2.msra.mxu0 0.0
  %1009 = vmatprep.subr.mxu0 0.0
  %1010 = vmatpush2.msra.mxu0 0.0
  %1011 = vmatprep.subr.mxu0 0.0
  %1012 = vmatpush2.msra.mxu0 0.0
  %1013 = vmatprep.subr.mxu0 0.0
  %1014 = vmatpush2.msra.mxu0 0.0
  %1015 = vmatprep.subr.mxu0 0.0
  %1016 = vmatpush2.msra.mxu0 0.0
  %1017 = vmatprep.subr.mxu0 0.0
  %1018 = vmatpush2.msra.mxu0 0.0
  %1019 = vmatprep.subr.mxu0 0.0
  %1020 = vmatpush2.msra.mxu0 0.0
  %1021 = vmatprep.mubr.f32.mxu0 0.0
  %1022 = vmatmul.mubr.f32.gmra.mxu0 %v946
  %v1023 = vpop.f32.mrf.mxu0
  %v1024 = vadd.f32 0.0, %v1023
  %v1025 = vpop.f32.mrf.mxu0
  %1026 = vmatprep.mubr.f32.mxu0 0.0
  %1027 = vmatmul.mubr.f32.gmra.mxu0 %v949
  %v1028 = vpop.f32.mrf.mxu0
  %v1029 = vadd.f32 0.0, %v1028
  %v1030 = vpop.f32.mrf.mxu0
  %1031 = vmatprep.mubr.f32.mxu0 0.0
  %1032 = vmatmul.mubr.f32.gmra.mxu0 %v952
  %v1033 = vpop.f32.mrf.mxu0
  %v1034 = vadd.f32 0.0, %v1033
  %v1035 = vpop.f32.mrf.mxu0
  %1036 = vmatprep.mubr.f32.mxu0 0.0
  %1037 = vmatmul.mubr.f32.gmra.mxu0 %v955
  %v1038 = vpop.f32.mrf.mxu0
  %v1039 = vadd.f32 0.0, %v1038
  %v1040 = vpop.f32.mrf.mxu0
  %1041 = vdwg.mxu0
  %v1042 = vmul.f32 %v1024, %v119
  %v1043 = vmul.f32 %v1029, %v120
  %v1044 = vmul.f32 %v1034, %v121
  %v1045 = vmul.f32 %v1039, %v122
  %s1046 = scalar_lea.vmem %s2, 32
  %v1047 = vld [vmem:[%s1046] sm:$0xff]
  %v1048 = vld [vmem:[%s1046 + $0x8] sm:$0xff]
  %v1049 = vld [vmem:[%s1046 + $0x10] sm:$0xff]
  %v1050 = vld [vmem:[%s1046 + $0x18] sm:$0xff]
  %v1051 = vmul.f32 %v1047, %v123
  %v1052 = vmul.f32 %v1048, %v124
  %v1053 = vmul.f32 %v1049, %v125
  %v1054 = vmul.f32 %v1050, %v126
  %v1055 = vadd.f32 %v1042, %v1051
  %v1056 = vadd.f32 %v1043, %v1052
  %v1057 = vadd.f32 %v1044, %v1053
  %v1058 = vadd.f32 %v1045, %v1054
  %v1059 = vadd.f32 %v1055, %v127
  %v1060 = vadd.f32 %v1056, %v128
  %v1061 = vadd.f32 %v1057, %v129
  %v1062 = vadd.f32 %v1058, %v130
  %v1063 = vmax.f32 %v1059, 0.0
  %v1064 = vmax.f32 %v1060, 0.0
  %v1065 = vmax.f32 %v1061, 0.0
  %v1066 = vmax.f32 %v1062, 0.0
  %v1067 = vmul.f32 %v1063, %v131
  %v1068 = vmul.f32 %v1064, %v132
  %v1069 = vmul.f32 %v1065, %v133
  %v1070 = vmul.f32 %v1066, %v134
  %1071 = vmatprep.subr.mxu0 0.0
  %1072 = vmatpush1.msra.mxu0 %v97
  %1073 = vmatprep.subr.mxu0 0.0
  %1074 = vmatpush1.msra.mxu0 %v96
  %1075 = vmatprep.subr.mxu0 0.0
  %1076 = vmatpush1.msra.mxu0 %v95
  %1077 = vmatprep.subr.mxu0 0.0
  %1078 = vmatpush1.msra.mxu0 %v94
  %1079 = vmatprep.subr.mxu0 0.0
  %1080 = vmatpush1.msra.mxu0 %v93
  %1081 = vmatprep.subr.mxu0 0.0
  %1082 = vmatpush1.msra.mxu0 %v92
  %1083 = vmatprep.subr.mxu0 0.0
  %1084 = vmatpush1.msra.mxu0 %v91
  %1085 = vmatprep.subr.mxu0 0.0
  %1086 = vmatpush1.msra.mxu0 %v90
  %1087 = vmatprep.subr.mxu0 0.0
  %1088 = vmatpush1.msra.mxu0 %v89
  %1089 = vmatprep.subr.mxu0 0.0
  %1090 = vmatpush1.msra.mxu0 %v88
  %1091 = vmatprep.subr.mxu0 0.0
  %1092 = vmatpush1.msra.mxu0 %v87
  %1093 = vmatprep.subr.mxu0 0.0
  %1094 = vmatpush1.msra.mxu0 %v86
  %1095 = vmatprep.subr.mxu0 0.0
  %1096 = vmatpush1.msra.mxu0 %v85
  %1097 = vmatprep.subr.mxu0 0.0
  %1098 = vmatpush1.msra.mxu0 %v84
  %1099 = vmatprep.subr.mxu0 0.0
  %1100 = vmatpush1.msra.mxu0 %v83
  %1101 = vmatprep.subr.mxu0 0.0
  %1102 = vmatpush1.msra.mxu0 %v82
  %1103 = vmatprep.subr.mxu0 0.0
  %1104 = vmatpush2.msra.mxu0 0.0
  %1105 = vmatprep.subr.mxu0 0.0
  %1106 = vmatpush2.msra.mxu0 0.0
  %1107 = vmatprep.subr.mxu0 0.0
  %1108 = vmatpush2.msra.mxu0 0.0
  %1109 = vmatprep.subr.mxu0 0.0
  %1110 = vmatpush2.msra.mxu0 0.0
  %1111 = vmatprep.subr.mxu0 0.0
  %1112 = vmatpush2.msra.mxu0 0.0
  %1113 = vmatprep.subr.mxu0 0.0
  %1114 = vmatpush2.msra.mxu0 0.0
  %1115 = vmatprep.subr.mxu0 0.0
  %1116 = vmatpush2.msra.mxu0 0.0
  %1117 = vmatprep.subr.mxu0 0.0
  %1118 = vmatpush2.msra.mxu0 0.0
  %1119 = vmatprep.subr.mxu0 0.0
  %1120 = vmatpush2.msra.mxu0 0.0
  %1121 = vmatprep.subr.mxu0 0.0
  %1122 = vmatpush2.msra.mxu0 0.0
  %1123 = vmatprep.subr.mxu0 0.0
  %1124 = vmatpush2.msra.mxu0 0.0
  %1125 = vmatprep.subr.mxu0 0.0
  %1126 = vmatpush2.msra.mxu0 0.0
  %1127 = vmatprep.subr.mxu0 0.0
  %1128 = vmatpush2.msra.mxu0 0.0
  %1129 = vmatprep.subr.mxu0 0.0
  %1130 = vmatpush2.msra.mxu0 0.0
  %1131 = vmatprep.subr.mxu0 0.0
  %1132 = vmatpush2.msra.mxu0 0.0
  %1133 = vmatprep.subr.mxu0 0.0
  %1134 = vmatpush2.msra.mxu0 0.0
  %1135 = vmatprep.mubr.f32.mxu0 0.0
  %1136 = vmatmul.mubr.f32.gmra.mxu0 %v1067
  %v1137 = vpop.f32.mrf.mxu0
  %v1138 = vadd.f32 %v135, %v1137
  %v1139 = vpop.f32.mrf.mxu0
  %1140 = vmatprep.mubr.f32.mxu0 0.0
  %1141 = vmatmul.mubr.f32.gmra.mxu0 %v1068
  %v1142 = vpop.f32.mrf.mxu0
  %v1143 = vadd.f32 %v136, %v1142
  %v1144 = vpop.f32.mrf.mxu0
  %1145 = vmatprep.mubr.f32.mxu0 0.0
  %1146 = vmatmul.mubr.f32.gmra.mxu0 %v1069
  %v1147 = vpop.f32.mrf.mxu0
  %v1148 = vadd.f32 %v137, %v1147
  %v1149 = vpop.f32.mrf.mxu0
  %1150 = vmatprep.mubr.f32.mxu0 0.0
  %1151 = vmatmul.mubr.f32.gmra.mxu0 %v1070
  %v1152 = vpop.f32.mrf.mxu0
  %v1153 = vadd.f32 %v138, %v1152
  %v1154 = vpop.f32.mrf.mxu0
  %1155 = vdwg.mxu0
  %v1156 = vsel %vm481, %v1138, -inf
  %1157 = vmax.xlane.f32.xlu0 %v1156
  %v1158 = vpop.xlane.xlu0 %1157
  %v1159 = vsel %vm481, %v1143, -inf
  %1160 = vmax.xlane.f32.xlu0 %v1159
  %v1161 = vpop.xlane.xlu0 %1160
  %v1162 = vsel %vm481, %v1148, -inf
  %1163 = vmax.xlane.f32.xlu0 %v1162
  %v1164 = vpop.xlane.xlu0 %1163
  %v1165 = vsel %vm481, %v1153, -inf
  %1166 = vmax.xlane.f32.xlu0 %v1165
  %v1167 = vpop.xlane.xlu0 %1166
  %v1168 = vsub.f32 %v1138, %v1158
  %v1169 = vsub.f32 %v1143, %v1161
  %v1170 = vsub.f32 %v1148, %v1164
  %v1171 = vsub.f32 %v1153, %v1167
  %v1172 = vmul.f32 %v1168, 1.442695
  %v1173 = vpow.pop %v1172
  %v1174 = vmul.f32 %v1169, 1.442695
  %v1175 = vpow.pop %v1174
  %v1176 = vmul.f32 %v1170, 1.442695
  %v1177 = vpow.pop %v1176
  %v1178 = vmul.f32 %v1171, 1.442695
  %v1179 = vpow.pop %v1178
  %v1180 = vsel %vm481, %v1173, 0.0
  %1181 = vadd.xlane.f32.xlu0 %v1180
  %v1182 = vpop.xlane.xlu0 %1181
  %v1183 = vsel %vm481, %v1175, 0.0
  %1184 = vadd.xlane.f32.xlu0 %v1183
  %v1185 = vpop.xlane.xlu0 %1184
  %v1186 = vsel %vm481, %v1177, 0.0
  %1187 = vadd.xlane.f32.xlu0 %v1186
  %v1188 = vpop.xlane.xlu0 %1187
  %v1189 = vsel %vm481, %v1179, 0.0
  %1190 = vadd.xlane.f32.xlu0 %v1189
  %v1191 = vpop.xlane.xlu0 %1190
  %v1192 = vrcp.pop %v1182
  %v1193 = vrcp.pop %v1185
  %v1194 = vrcp.pop %v1188
  %v1195 = vrcp.pop %v1191
  %v1196 = vmul.f32 %v1173, %v1192
  %v1197 = vmul.f32 %v1175, %v1193
  %v1198 = vmul.f32 %v1177, %v1194
  %v1199 = vmul.f32 %v1179, %v1195
  %v1201 = vsel %vm481, %v1196, 0
  %v1204 = vsel %vm481, %v1197, 0
  %v1207 = vsel %vm481, %v1198, 0
  %v1210 = vsel %vm481, %v1199, 0
  %1212 = vmatprep.subr.mxu0 0.0
  %1213 = vmatpush1.msra.mxu0 0.0
  %1214 = vmatprep.subr.mxu0 0.0
  %1215 = vmatpush1.msra.mxu0 0.0
  %1216 = vmatprep.subr.mxu0 0.0
  %1217 = vmatpush1.msra.mxu0 0.0
  %1218 = vmatprep.subr.mxu0 0.0
  %1219 = vmatpush1.msra.mxu0 0.0
  %1220 = vmatprep.subr.mxu0 0.0
  %1221 = vmatpush1.msra.mxu0 0.0
  %1222 = vmatprep.subr.mxu0 0.0
  %1223 = vmatpush1.msra.mxu0 0.0
  %1224 = vmatprep.subr.mxu0 0.0
  %1225 = vmatpush1.msra.mxu0 0.0
  %1226 = vmatprep.subr.mxu0 0.0
  %1227 = vmatpush1.msra.mxu0 0.0
  %1228 = vmatprep.subr.mxu0 0.0
  %1229 = vmatpush1.msra.mxu0 0.0
  %1230 = vmatprep.subr.mxu0 0.0
  %1231 = vmatpush1.msra.mxu0 0.0
  %1232 = vmatprep.subr.mxu0 0.0
  %1233 = vmatpush1.msra.mxu0 0.0
  %1234 = vmatprep.subr.mxu0 0.0
  %1235 = vmatpush1.msra.mxu0 0.0
  %1236 = vmatprep.subr.mxu0 0.0
  %1237 = vmatpush1.msra.mxu0 0.0
  %1238 = vmatprep.subr.mxu0 0.0
  %1239 = vmatpush1.msra.mxu0 0.0
  %1240 = vmatprep.subr.mxu0 0.0
  %1241 = vmatpush1.msra.mxu0 0.0
  %1242 = vmatprep.subr.mxu0 0.0
  %1243 = vmatpush1.msra.mxu0 %v374
  %1244 = vmatprep.subr.mxu0 0.0
  %1245 = vmatpush2.msra.mxu0 0.0
  %1246 = vmatprep.subr.mxu0 0.0
  %1247 = vmatpush2.msra.mxu0 0.0
  %1248 = vmatprep.subr.mxu0 0.0
  %1249 = vmatpush2.msra.mxu0 0.0
  %1250 = vmatprep.subr.mxu0 0.0
  %1251 = vmatpush2.msra.mxu0 0.0
  %1252 = vmatprep.subr.mxu0 0.0
  %1253 = vmatpush2.msra.mxu0 0.0
  %1254 = vmatprep.subr.mxu0 0.0
  %1255 = vmatpush2.msra.mxu0 0.0
  %1256 = vmatprep.subr.mxu0 0.0
  %1257 = vmatpush2.msra.mxu0 0.0
  %1258 = vmatprep.subr.mxu0 0.0
  %1259 = vmatpush2.msra.mxu0 0.0
  %1260 = vmatprep.subr.mxu0 0.0
  %1261 = vmatpush2.msra.mxu0 0.0
  %1262 = vmatprep.subr.mxu0 0.0
  %1263 = vmatpush2.msra.mxu0 0.0
  %1264 = vmatprep.subr.mxu0 0.0
  %1265 = vmatpush2.msra.mxu0 0.0
  %1266 = vmatprep.subr.mxu0 0.0
  %1267 = vmatpush2.msra.mxu0 0.0
  %1268 = vmatprep.subr.mxu0 0.0
  %1269 = vmatpush2.msra.mxu0 0.0
  %1270 = vmatprep.subr.mxu0 0.0
  %1271 = vmatpush2.msra.mxu0 0.0
  %1272 = vmatprep.subr.mxu0 0.0
  %1273 = vmatpush2.msra.mxu0 0.0
  %1274 = vmatprep.subr.mxu0 0.0
  %1275 = vmatpush2.msra.mxu0 0.0
  %1276 = vmatprep.mubr.f32.mxu0 0.0
  %1277 = vmatmul.mubr.f32.gmra.mxu0 %v1201
  %v1278 = vpop.f32.mrf.mxu0
  %v1279 = vadd.f32 0.0, %v1278
  %v1280 = vpop.f32.mrf.mxu0
  %1281 = vmatprep.mubr.f32.mxu0 0.0
  %1282 = vmatmul.mubr.f32.gmra.mxu0 %v1204
  %v1283 = vpop.f32.mrf.mxu0
  %v1284 = vadd.f32 0.0, %v1283
  %v1285 = vpop.f32.mrf.mxu0
  %1286 = vmatprep.mubr.f32.mxu0 0.0
  %1287 = vmatmul.mubr.f32.gmra.mxu0 %v1207
  %v1288 = vpop.f32.mrf.mxu0
  %v1289 = vadd.f32 0.0, %v1288
  %v1290 = vpop.f32.mrf.mxu0
  %1291 = vmatprep.mubr.f32.mxu0 0.0
  %1292 = vmatmul.mubr.f32.gmra.mxu0 %v1210
  %v1293 = vpop.f32.mrf.mxu0
  %v1294 = vadd.f32 0.0, %v1293
  %v1295 = vpop.f32.mrf.mxu0
  %1296 = vdwg.mxu0
  %v1297 = vmul.f32 %v1279, %v98
  %v1298 = vmul.f32 %v1284, %v99
  %v1299 = vmul.f32 %v1289, %v100
  %v1300 = vmul.f32 %v1294, %v101
  %v1301 = vadd.f32 %v1297, %v1298
  %v1302 = vadd.f32 %v1301, %v1299
  %v1303 = vadd.f32 %v1302, %v1300
  %1304 = vst.msk [vmem:[#allocation2 + $0x8] sm:$0xff] %vm139, %v1303
  %v1305 = vld [vmem:[#allocation2] sm:$0xff]
  %v1306 = vld [vmem:[#allocation2 + $0x8] sm:$0xff]
  %v1308 = vlaneseq
  %v1309 = vshrl.u32 %v1308, 7
  %v1310 = vsub.s32 0, %v1309
  %v1311 = vrot.slane %v118, %v1310
  %v1314 = vsel %vm139, %v1305, 0
  %v1317 = vsel %vm139, %v1306, 0
  %1319 = vmatprep.subr.mxu0 0.0
  %1320 = vmatpush1.msra.mxu0 0.0
  %1321 = vmatprep.subr.mxu0 0.0
  %1322 = vmatpush1.msra.mxu0 0.0
  %1323 = vmatprep.subr.mxu0 0.0
  %1324 = vmatpush1.msra.mxu0 0.0
  %1325 = vmatprep.subr.mxu0 0.0
  %1326 = vmatpush1.msra.mxu0 0.0
  %1327 = vmatprep.subr.mxu0 0.0
  %1328 = vmatpush1.msra.mxu0 0.0
  %1329 = vmatprep.subr.mxu0 0.0
  %1330 = vmatpush1.msra.mxu0 0.0
  %1331 = vmatprep.subr.mxu0 0.0
  %1332 = vmatpush1.msra.mxu0 0.0
  %1333 = vmatprep.subr.mxu0 0.0
  %1334 = vmatpush1.msra.mxu0 0.0
  %1335 = vmatprep.subr.mxu0 0.0
  %1336 = vmatpush1.msra.mxu0 0.0
  %1337 = vmatprep.subr.mxu0 0.0
  %1338 = vmatpush1.msra.mxu0 0.0
  %1339 = vmatprep.subr.mxu0 0.0
  %1340 = vmatpush1.msra.mxu0 0.0
  %1341 = vmatprep.subr.mxu0 0.0
  %1342 = vmatpush1.msra.mxu0 0.0
  %1343 = vmatprep.subr.mxu0 0.0
  %1344 = vmatpush1.msra.mxu0 %v117
  %1345 = vmatprep.subr.mxu0 0.0
  %1346 = vmatpush1.msra.mxu0 %v116
  %1347 = vmatprep.subr.mxu0 0.0
  %1348 = vmatpush1.msra.mxu0 %v115
  %1349 = vmatprep.subr.mxu0 0.0
  %1350 = vmatpush1.msra.mxu0 %v114
  %1351 = vmatprep.subr.mxu0 0.0
  %1352 = vmatpush2.msra.mxu0 0.0
  %1353 = vmatprep.subr.mxu0 0.0
  %1354 = vmatpush2.msra.mxu0 0.0
  %1355 = vmatprep.subr.mxu0 0.0
  %1356 = vmatpush2.msra.mxu0 0.0
  %1357 = vmatprep.subr.mxu0 0.0
  %1358 = vmatpush2.msra.mxu0 0.0
  %1359 = vmatprep.subr.mxu0 0.0
  %1360 = vmatpush2.msra.mxu0 0.0
  %1361 = vmatprep.subr.mxu0 0.0
  %1362 = vmatpush2.msra.mxu0 0.0
  %1363 = vmatprep.subr.mxu0 0.0
  %1364 = vmatpush2.msra.mxu0 0.0
  %1365 = vmatprep.subr.mxu0 0.0
  %1366 = vmatpush2.msra.mxu0 0.0
  %1367 = vmatprep.subr.mxu0 0.0
  %1368 = vmatpush2.msra.mxu0 0.0
  %1369 = vmatprep.subr.mxu0 0.0
  %1370 = vmatpush2.msra.mxu0 0.0
  %1371 = vmatprep.subr.mxu0 0.0
  %1372 = vmatpush2.msra.mxu0 0.0
  %1373 = vmatprep.subr.mxu0 0.0
  %1374 = vmatpush2.msra.mxu0 0.0
  %1375 = vmatprep.subr.mxu0 0.0
  %1376 = vmatpush2.msra.mxu0 0.0
  %1377 = vmatprep.subr.mxu0 0.0
  %1378 = vmatpush2.msra.mxu0 0.0
  %1379 = vmatprep.subr.mxu0 0.0
  %1380 = vmatpush2.msra.mxu0 0.0
  %1381 = vmatprep.subr.mxu0 0.0
  %1382 = vmatpush2.msra.mxu0 0.0
  %1383 = vmatprep.mubr.f32.mxu0 0.0
  %1384 = vmatmul.mubr.f32.gmra.mxu0 %v1314
  %v1385 = vpop.f32.mrf.mxu0
  %v1386 = vadd.f32 %v1311, %v1385
  %v1387 = vpop.f32.mrf.mxu0
  %1388 = vmatprep.mubr.f32.mxu0 0.0
  %1389 = vmatmul.mubr.f32.gmra.mxu0 %v1317
  %v1390 = vpop.f32.mrf.mxu0
  %v1391 = vadd.f32 %v1311, %v1390
  %v1392 = vpop.f32.mrf.mxu0
  %1393 = vdwg.mxu0
  %v1394 = vld [vmem:[%s16] sm:$0x1]
  %v1395 = vld [vmem:[%s17] sm:$0x1]
  %v1396 = vadd.f32 %v77, %v1386
  %v1397 = vadd.f32 %v78, %v1391
  %v1398 = vsel %vm139, %v1396, 0.0
  %v1399 = vrot.slane %v1398, 4
  %v1400 = vadd.f32 %v1398, %v1399
  %v1401 = vrot.slane %v1400, 2
  %v1402 = vadd.f32 %v1400, %v1401
  %v1403 = vrot.slane %v1402, 1
  %v1404 = vadd.f32 %v1402, %v1403
  %v1405 = vrcp.pop 8.0
  %v1406 = vmul.f32 %v1404, %v1405
  %v1407 = vsub.f32 %v1396, %v1406
  %v1408 = vmul.f32 %v1407, %v1407
  %v1409 = vsel %vm139, %v1408, 0.0
  %v1410 = vrot.slane %v1409, 4
  %v1411 = vadd.f32 %v1409, %v1410
  %v1412 = vrot.slane %v1411, 2
  %v1413 = vadd.f32 %v1411, %v1412
  %v1414 = vrot.slane %v1413, 1
  %v1415 = vadd.f32 %v1413, %v1414
  %v1416 = vmul.f32 %v1415, %v1405
  %v1417 = vadd.f32 %v1416, 1e-05
  %v1418 = vrsqrt.pop %v1417
  %v1419 = vmul.f32 %v1407, %v1418
  %v1420 = vsel %vm139, %v1397, 0.0
  %v1421 = vrot.slane %v1420, 4
  %v1422 = vadd.f32 %v1420, %v1421
  %v1423 = vrot.slane %v1422, 2
  %v1424 = vadd.f32 %v1422, %v1423
  %v1425 = vrot.slane %v1424, 1
  %v1426 = vadd.f32 %v1424, %v1425
  %v1427 = vmul.f32 %v1426, %v1405
  %v1428 = vsub.f32 %v1397, %v1427
  %v1429 = vmul.f32 %v1428, %v1428
  %v1430 = vsel %vm139, %v1429, 0.0
  %v1431 = vrot.slane %v1430, 4
  %v1432 = vadd.f32 %v1430, %v1431
  %v1433 = vrot.slane %v1432, 2
  %v1434 = vadd.f32 %v1432, %v1433
  %v1435 = vrot.slane %v1434, 1
  %v1436 = vadd.f32 %v1434, %v1435
  %v1437 = vmul.f32 %v1436, %v1405
  %v1438 = vadd.f32 %v1437, 1e-05
  %v1439 = vrsqrt.pop %v1438
  %v1440 = vmul.f32 %v1428, %v1439
  %v1442 = vlaneseq
  %v1443 = vshrl.u32 %v1442, 7
  %v1444 = vsub.s32 0, %v1443
  %v1445 = vrot.slane %v1394, %v1444
  %v1447 = vmul.f32 %v1419, %v1445
  %v1448 = vmul.f32 %v1440, %v1445
  %v1450 = vlaneseq
  %v1451 = vshrl.u32 %v1450, 7
  %v1452 = vsub.s32 0, %v1451
  %v1453 = vrot.slane %v1395, %v1452
  %v1455 = vadd.f32 %v1447, %v1453
  %v1456 = vadd.f32 %v1448, %v1453
  %v1457 = vld [vmem:[%s18] sm:$0xff]
  %v1458 = vld [vmem:[%s18 + $0x8] sm:$0xff]
  %v1459 = vld [vmem:[%s18 + $0x10] sm:$0xff]
  %v1460 = vld [vmem:[%s18 + $0x18] sm:$0xff]
  %v1461 = vld [vmem:[%s19] sm:$0x1]
  %v1463 = vlaneseq
  %v1464 = vshrl.u32 %v1463, 7
  %v1465 = vsub.s32 0, %v1464
  %v1466 = vrot.slane %v1461, %v1465
  %v1469 = vsel %vm139, %v1455, 0
  %v1472 = vsel %vm139, %v1456, 0
  %1474 = vmatprep.subr.mxu0 0.0
  %1475 = vmatpush1.msra.mxu0 0.0
  %1476 = vmatprep.subr.mxu0 0.0
  %1477 = vmatpush1.msra.mxu0 0.0
  %1478 = vmatprep.subr.mxu0 0.0
  %1479 = vmatpush1.msra.mxu0 0.0
  %1480 = vmatprep.subr.mxu0 0.0
  %1481 = vmatpush1.msra.mxu0 0.0
  %1482 = vmatprep.subr.mxu0 0.0
  %1483 = vmatpush1.msra.mxu0 0.0
  %1484 = vmatprep.subr.mxu0 0.0
  %1485 = vmatpush1.msra.mxu0 0.0
  %1486 = vmatprep.subr.mxu0 0.0
  %1487 = vmatpush1.msra.mxu0 0.0
  %1488 = vmatprep.subr.mxu0 0.0
  %1489 = vmatpush1.msra.mxu0 0.0
  %1490 = vmatprep.subr.mxu0 0.0
  %1491 = vmatpush1.msra.mxu0 0.0
  %1492 = vmatprep.subr.mxu0 0.0
  %1493 = vmatpush1.msra.mxu0 0.0
  %1494 = vmatprep.subr.mxu0 0.0
  %1495 = vmatpush1.msra.mxu0 0.0
  %1496 = vmatprep.subr.mxu0 0.0
  %1497 = vmatpush1.msra.mxu0 0.0
  %1498 = vmatprep.subr.mxu0 0.0
  %1499 = vmatpush1.msra.mxu0 %v1460
  %1500 = vmatprep.subr.mxu0 0.0
  %1501 = vmatpush1.msra.mxu0 %v1459
  %1502 = vmatprep.subr.mxu0 0.0
  %1503 = vmatpush1.msra.mxu0 %v1458
  %1504 = vmatprep.subr.mxu0 0.0
  %1505 = vmatpush1.msra.mxu0 %v1457
  %1506 = vmatprep.subr.mxu0 0.0
  %1507 = vmatpush2.msra.mxu0 0.0
  %1508 = vmatprep.subr.mxu0 0.0
  %1509 = vmatpush2.msra.mxu0 0.0
  %1510 = vmatprep.subr.mxu0 0.0
  %1511 = vmatpush2.msra.mxu0 0.0
  %1512 = vmatprep.subr.mxu0 0.0
  %1513 = vmatpush2.msra.mxu0 0.0
  %1514 = vmatprep.subr.mxu0 0.0
  %1515 = vmatpush2.msra.mxu0 0.0
  %1516 = vmatprep.subr.mxu0 0.0
  %1517 = vmatpush2.msra.mxu0 0.0
  %1518 = vmatprep.subr.mxu0 0.0
  %1519 = vmatpush2.msra.mxu0 0.0
  %1520 = vmatprep.subr.mxu0 0.0
  %1521 = vmatpush2.msra.mxu0 0.0
  %1522 = vmatprep.subr.mxu0 0.0
  %1523 = vmatpush2.msra.mxu0 0.0
  %1524 = vmatprep.subr.mxu0 0.0
  %1525 = vmatpush2.msra.mxu0 0.0
  %1526 = vmatprep.subr.mxu0 0.0
  %1527 = vmatpush2.msra.mxu0 0.0
  %1528 = vmatprep.subr.mxu0 0.0
  %1529 = vmatpush2.msra.mxu0 0.0
  %1530 = vmatprep.subr.mxu0 0.0
  %1531 = vmatpush2.msra.mxu0 0.0
  %1532 = vmatprep.subr.mxu0 0.0
  %1533 = vmatpush2.msra.mxu0 0.0
  %1534 = vmatprep.subr.mxu0 0.0
  %1535 = vmatpush2.msra.mxu0 0.0
  %1536 = vmatprep.subr.mxu0 0.0
  %1537 = vmatpush2.msra.mxu0 0.0
  %1538 = vmatprep.mubr.f32.mxu0 0.0
  %1539 = vmatmul.mubr.f32.gmra.mxu0 %v1469
  %v1540 = vpop.f32.mrf.mxu0
  %v1541 = vadd.f32 %v1466, %v1540
  %v1542 = vpop.f32.mrf.mxu0
  %1543 = vmatprep.mubr.f32.mxu0 0.0
  %1544 = vmatmul.mubr.f32.gmra.mxu0 %v1472
  %v1545 = vpop.f32.mrf.mxu0
  %v1546 = vadd.f32 %v1466, %v1545
  %v1547 = vpop.f32.mrf.mxu0
  %1548 = vdwg.mxu0
  %v1549 = vmax.f32 %v1541, 0.0
  %v1550 = vmax.f32 %v1546, 0.0
  %v1551 = vld [vmem:[%s20] sm:$0xff]
  %v1552 = vld [vmem:[%s20 + $0x8] sm:$0xff]
  %v1553 = vld [vmem:[%s20 + $0x10] sm:$0xff]
  %v1554 = vld [vmem:[%s20 + $0x18] sm:$0xff]
  %v1555 = vld [vmem:[%s20 + $0x20] sm:$0xff]
  %v1556 = vld [vmem:[%s20 + $0x28] sm:$0xff]
  %v1557 = vld [vmem:[%s20 + $0x30] sm:$0xff]
  %v1558 = vld [vmem:[%s20 + $0x38] sm:$0xff]
  %v1559 = vld [vmem:[%s21] sm:$0x1]
  %v1561 = vlaneseq
  %v1562 = vshrl.u32 %v1561, 7
  %v1563 = vsub.s32 0, %v1562
  %v1564 = vrot.slane %v1559, %v1563
  %vm1566 = vcmask 523264
  %v1568 = vsel %vm1566, %v1549, 0
  %v1571 = vsel %vm1566, %v1550, 0
  %1573 = vmatprep.subr.mxu0 0.0
  %1574 = vmatpush1.msra.mxu0 0.0
  %1575 = vmatprep.subr.mxu0 0.0
  %1576 = vmatpush1.msra.mxu0 0.0
  %1577 = vmatprep.subr.mxu0 0.0
  %1578 = vmatpush1.msra.mxu0 0.0
  %1579 = vmatprep.subr.mxu0 0.0
  %1580 = vmatpush1.msra.mxu0 0.0
  %1581 = vmatprep.subr.mxu0 0.0
  %1582 = vmatpush1.msra.mxu0 0.0
  %1583 = vmatprep.subr.mxu0 0.0
  %1584 = vmatpush1.msra.mxu0 0.0
  %1585 = vmatprep.subr.mxu0 0.0
  %1586 = vmatpush1.msra.mxu0 0.0
  %1587 = vmatprep.subr.mxu0 0.0
  %1588 = vmatpush1.msra.mxu0 0.0
  %1589 = vmatprep.subr.mxu0 0.0
  %1590 = vmatpush1.msra.mxu0 %v1558
  %1591 = vmatprep.subr.mxu0 0.0
  %1592 = vmatpush1.msra.mxu0 %v1557
  %1593 = vmatprep.subr.mxu0 0.0
  %1594 = vmatpush1.msra.mxu0 %v1556
  %1595 = vmatprep.subr.mxu0 0.0
  %1596 = vmatpush1.msra.mxu0 %v1555
  %1597 = vmatprep.subr.mxu0 0.0
  %1598 = vmatpush1.msra.mxu0 %v1554
  %1599 = vmatprep.subr.mxu0 0.0
  %1600 = vmatpush1.msra.mxu0 %v1553
  %1601 = vmatprep.subr.mxu0 0.0
  %1602 = vmatpush1.msra.mxu0 %v1552
  %1603 = vmatprep.subr.mxu0 0.0
  %1604 = vmatpush1.msra.mxu0 %v1551
  %1605 = vmatprep.subr.mxu0 0.0
  %1606 = vmatpush2.msra.mxu0 0.0
  %1607 = vmatprep.subr.mxu0 0.0
  %1608 = vmatpush2.msra.mxu0 0.0
  %1609 = vmatprep.subr.mxu0 0.0
  %1610 = vmatpush2.msra.mxu0 0.0
  %1611 = vmatprep.subr.mxu0 0.0
  %1612 = vmatpush2.msra.mxu0 0.0
  %1613 = vmatprep.subr.mxu0 0.0
  %1614 = vmatpush2.msra.mxu0 0.0
  %1615 = vmatprep.subr.mxu0 0.0
  %1616 = vmatpush2.msra.mxu0 0.0
  %1617 = vmatprep.subr.mxu0 0.0
  %1618 = vmatpush2.msra.mxu0 0.0
  %1619 = vmatprep.subr.mxu0 0.0
  %1620 = vmatpush2.msra.mxu0 0.0
  %1621 = vmatprep.subr.mxu0 0.0
  %1622 = vmatpush2.msra.mxu0 0.0
  %1623 = vmatprep.subr.mxu0 0.0
  %1624 = vmatpush2.msra.mxu0 0.0
  %1625 = vmatprep.subr.mxu0 0.0
  %1626 = vmatpush2.msra.mxu0 0.0
  %1627 = vmatprep.subr.mxu0 0.0
  %1628 = vmatpush2.msra.mxu0 0.0
  %1629 = vmatprep.subr.mxu0 0.0
  %1630 = vmatpush2.msra.mxu0 0.0
  %1631 = vmatprep.subr.mxu0 0.0
  %1632 = vmatpush2.msra.mxu0 0.0
  %1633 = vmatprep.subr.mxu0 0.0
  %1634 = vmatpush2.msra.mxu0 0.0
  %1635 = vmatprep.subr.mxu0 0.0
  %1636 = vmatpush2.msra.mxu0 0.0
  %1637 = vmatprep.mubr.f32.mxu0 0.0
  %1638 = vmatmul.mubr.f32.gmra.mxu0 %v1568
  %v1639 = vpop.f32.mrf.mxu0
  %v1640 = vadd.f32 %v1564, %v1639
  %v1641 = vpop.f32.mrf.mxu0
  %1642 = vmatprep.mubr.f32.mxu0 0.0
  %1643 = vmatmul.mubr.f32.gmra.mxu0 %v1571
  %v1644 = vpop.f32.mrf.mxu0
  %v1645 = vadd.f32 %v1564, %v1644
  %v1646 = vpop.f32.mrf.mxu0
  %1647 = vdwg.mxu0
  %v1648 = vld [vmem:[%s22] sm:$0x1]
  %v1649 = vld [vmem:[%s23] sm:$0x1]
  %v1650 = vadd.f32 %v1455, %v1640
  %v1651 = vadd.f32 %v1456, %v1645
  %v1652 = vsel %vm139, %v1650, 0.0
  %v1653 = vrot.slane %v1652, 4
  %v1654 = vadd.f32 %v1652, %v1653
  %v1655 = vrot.slane %v1654, 2
  %v1656 = vadd.f32 %v1654, %v1655
  %v1657 = vrot.slane %v1656, 1
  %v1658 = vadd.f32 %v1656, %v1657
  %v1659 = vmul.f32 %v1658, %v1405
  %v1660 = vsub.f32 %v1650, %v1659
  %v1661 = vmul.f32 %v1660, %v1660
  %v1662 = vsel %vm139, %v1661, 0.0
  %v1663 = vrot.slane %v1662, 4
  %v1664 = vadd.f32 %v1662, %v1663
  %v1665 = vrot.slane %v1664, 2
  %v1666 = vadd.f32 %v1664, %v1665
  %v1667 = vrot.slane %v1666, 1
  %v1668 = vadd.f32 %v1666, %v1667
  %v1669 = vmul.f32 %v1668, %v1405
  %v1670 = vadd.f32 %v1669, 1e-05
  %v1671 = vrsqrt.pop %v1670
  %v1672 = vmul.f32 %v1660, %v1671
  %v1673 = vsel %vm139, %v1651, 0.0
  %v1674 = vrot.slane %v1673, 4
  %v1675 = vadd.f32 %v1673, %v1674
  %v1676 = vrot.slane %v1675, 2
  %v1677 = vadd.f32 %v1675, %v1676
  %v1678 = vrot.slane %v1677, 1
  %v1679 = vadd.f32 %v1677, %v1678
  %v1680 = vmul.f32 %v1679, %v1405
  %v1681 = vsub.f32 %v1651, %v1680
  %v1682 = vmul.f32 %v1681, %v1681
  %v1683 = vsel %vm139, %v1682, 0.0
  %v1684 = vrot.slane %v1683, 4
  %v1685 = vadd.f32 %v1683, %v1684
  %v1686 = vrot.slane %v1685, 2
  %v1687 = vadd.f32 %v1685, %v1686
  %v1688 = vrot.slane %v1687, 1
  %v1689 = vadd.f32 %v1687, %v1688
  %v1690 = vmul.f32 %v1689, %v1405
  %v1691 = vadd.f32 %v1690, 1e-05
  %v1692 = vrsqrt.pop %v1691
  %v1693 = vmul.f32 %v1681, %v1692
  %v1695 = vlaneseq
  %v1696 = vshrl.u32 %v1695, 7
  %v1697 = vsub.s32 0, %v1696
  %v1698 = vrot.slane %v1648, %v1697
  %v1700 = vmul.f32 %v1672, %v1698
  %v1701 = vmul.f32 %v1693, %v1698
  %v1703 = vlaneseq
  %v1704 = vshrl.u32 %v1703, 7
  %v1705 = vsub.s32 0, %v1704
  %v1706 = vrot.slane %v1649, %v1705
  %v1708 = vadd.f32 %v1700, %v1706
  %v1709 = vadd.f32 %v1701, %v1706
  %1710 = vst.msk [vmem:[%s24] sm:$0xff] %vm139, %v1708
  %1711 = vst.msk [vmem:[%s24 + $0x8] sm:$0xff] %vm139, %v1709
  %s1712 = scalar_lea.vmem %s6, 32
  %v1713 = vld [vmem:[%s1712] sm:$0xff]
  %v1714 = vld [vmem:[%s1712 + $0x8] sm:$0xff]
  %v1715 = vld [vmem:[%s1712 + $0x10] sm:$0xff]
  %v1716 = vld [vmem:[%s1712 + $0x18] sm:$0xff]
  %s1717 = scalar_lea.vmem %s7, 32
  %v1718 = vld [vmem:[%s1717] sm:$0xff]
  %v1719 = vld [vmem:[%s1717 + $0x8] sm:$0xff]
  %v1720 = vld [vmem:[%s1717 + $0x10] sm:$0xff]
  %v1721 = vld [vmem:[%s1717 + $0x18] sm:$0xff]
  %s1722 = scalar_lea.vmem %s8, 32
  %v1723 = vld [vmem:[%s1722] sm:$0xff]
  %v1724 = vld [vmem:[%s1722 + $0x8] sm:$0xff]
  %v1725 = vld [vmem:[%s1722 + $0x10] sm:$0xff]
  %v1726 = vld [vmem:[%s1722 + $0x18] sm:$0xff]
  %s1727 = scalar_lea.vmem %s9, 32
  %v1728 = vld [vmem:[%s1727] sm:$0xff]
  %v1729 = vld [vmem:[%s1727 + $0x8] sm:$0xff]
  %v1730 = vld [vmem:[%s1727 + $0x10] sm:$0xff]
  %v1731 = vld [vmem:[%s1727 + $0x18] sm:$0xff]
  %s1732 = scalar_lea.vmem %s10, 1
  %v1733 = vld [vmem:[%s1732] sm:$0x1]
  %s1734 = scalar_lea.vmem %s11, 32
  %v1735 = vld [vmem:[%s1734] sm:$0xff]
  %v1736 = vld [vmem:[%s1734 + $0x8] sm:$0xff]
  %v1737 = vld [vmem:[%s1734 + $0x10] sm:$0xff]
  %v1738 = vld [vmem:[%s1734 + $0x18] sm:$0xff]
  %s1739 = scalar_lea.vmem %s12, 32
  %v1740 = vld [vmem:[%s1739] sm:$0xff]
  %v1741 = vld [vmem:[%s1739 + $0x8] sm:$0xff]
  %v1742 = vld [vmem:[%s1739 + $0x10] sm:$0xff]
  %v1743 = vld [vmem:[%s1739 + $0x18] sm:$0xff]
  %s1744 = scalar_lea.vmem %s13, 32
  %v1745 = vld [vmem:[%s1744] sm:$0xff]
  %v1746 = vld [vmem:[%s1744 + $0x8] sm:$0xff]
  %v1747 = vld [vmem:[%s1744 + $0x10] sm:$0xff]
  %v1748 = vld [vmem:[%s1744 + $0x18] sm:$0xff]
  %s1749 = scalar_lea.vmem %s14, 32
  %v1750 = vld [vmem:[%s1749] sm:$0xff]
  %v1751 = vld [vmem:[%s1749 + $0x8] sm:$0xff]
  %v1752 = vld [vmem:[%s1749 + $0x10] sm:$0xff]
  %v1753 = vld [vmem:[%s1749 + $0x18] sm:$0xff]
  %s1754 = scalar_lea.vmem %s15, 32
  %v1755 = vld [vmem:[%s1754] sm:$0xff]
  %v1756 = vld [vmem:[%s1754 + $0x8] sm:$0xff]
  %v1757 = vld [vmem:[%s1754 + $0x10] sm:$0xff]
  %v1758 = vld [vmem:[%s1754 + $0x18] sm:$0xff]
  %1759 = vmatprep.subr.mxu0 0.0
  %1760 = vmatpush1.msra.mxu0 0.0
  %1761 = vmatprep.subr.mxu0 0.0
  %1762 = vmatpush1.msra.mxu0 0.0
  %1763 = vmatprep.subr.mxu0 0.0
  %1764 = vmatpush1.msra.mxu0 0.0
  %1765 = vmatprep.subr.mxu0 0.0
  %1766 = vmatpush1.msra.mxu0 0.0
  %1767 = vmatprep.subr.mxu0 0.0
  %1768 = vmatpush1.msra.mxu0 0.0
  %1769 = vmatprep.subr.mxu0 0.0
  %1770 = vmatpush1.msra.mxu0 0.0
  %1771 = vmatprep.subr.mxu0 0.0
  %1772 = vmatpush1.msra.mxu0 0.0
  %1773 = vmatprep.subr.mxu0 0.0
  %1774 = vmatpush1.msra.mxu0 0.0
  %1775 = vmatprep.subr.mxu0 0.0
  %1776 = vmatpush1.msra.mxu0 0.0
  %1777 = vmatprep.subr.mxu0 0.0
  %1778 = vmatpush1.msra.mxu0 0.0
  %1779 = vmatprep.subr.mxu0 0.0
  %1780 = vmatpush1.msra.mxu0 0.0
  %1781 = vmatprep.subr.mxu0 0.0
  %1782 = vmatpush1.msra.mxu0 0.0
  %1783 = vmatprep.subr.mxu0 0.0
  %1784 = vmatpush1.msra.mxu0 %v1716
  %1785 = vmatprep.subr.mxu0 0.0
  %1786 = vmatpush1.msra.mxu0 %v1715
  %1787 = vmatprep.subr.mxu0 0.0
  %1788 = vmatpush1.msra.mxu0 %v1714
  %1789 = vmatprep.subr.mxu0 0.0
  %1790 = vmatpush1.msra.mxu0 %v1713
  %1791 = vmatprep.subr.mxu0 0.0
  %1792 = vmatpush2.msra.mxu0 0.0
  %1793 = vmatprep.subr.mxu0 0.0
  %1794 = vmatpush2.msra.mxu0 0.0
  %1795 = vmatprep.subr.mxu0 0.0
  %1796 = vmatpush2.msra.mxu0 0.0
  %1797 = vmatprep.subr.mxu0 0.0
  %1798 = vmatpush2.msra.mxu0 0.0
  %1799 = vmatprep.subr.mxu0 0.0
  %1800 = vmatpush2.msra.mxu0 0.0
  %1801 = vmatprep.subr.mxu0 0.0
  %1802 = vmatpush2.msra.mxu0 0.0
  %1803 = vmatprep.subr.mxu0 0.0
  %1804 = vmatpush2.msra.mxu0 0.0
  %1805 = vmatprep.subr.mxu0 0.0
  %1806 = vmatpush2.msra.mxu0 0.0
  %1807 = vmatprep.subr.mxu0 0.0
  %1808 = vmatpush2.msra.mxu0 0.0
  %1809 = vmatprep.subr.mxu0 0.0
  %1810 = vmatpush2.msra.mxu0 0.0
  %1811 = vmatprep.subr.mxu0 0.0
  %1812 = vmatpush2.msra.mxu0 0.0
  %1813 = vmatprep.subr.mxu0 0.0
  %1814 = vmatpush2.msra.mxu0 0.0
  %1815 = vmatprep.subr.mxu0 0.0
  %1816 = vmatpush2.msra.mxu0 0.0
  %1817 = vmatprep.subr.mxu0 0.0
  %1818 = vmatpush2.msra.mxu0 0.0
  %1819 = vmatprep.subr.mxu0 0.0
  %1820 = vmatpush2.msra.mxu0 0.0
  %1821 = vmatprep.subr.mxu0 0.0
  %1822 = vmatpush2.msra.mxu0 0.0
  %1823 = vmatprep.mubr.f32.mxu0 0.0
  %1824 = vmatmul.mubr.f32.gmra.mxu0 %v222
  %v1825 = vpop.f32.mrf.mxu0
  %v1826 = vadd.f32 0.0, %v1825
  %v1827 = vpop.f32.mrf.mxu0
  %1828 = vmatprep.mubr.f32.mxu0 0.0
  %1829 = vmatmul.mubr.f32.gmra.mxu0 %v225
  %v1830 = vpop.f32.mrf.mxu0
  %v1831 = vadd.f32 0.0, %v1830
  %v1832 = vpop.f32.mrf.mxu0
  %1833 = vdwg.mxu0
  %1834 = vmatprep.subr.mxu0 0.0
  %1835 = vmatpush1.msra.mxu0 0.0
  %1836 = vmatprep.subr.mxu0 0.0
  %1837 = vmatpush1.msra.mxu0 0.0
  %1838 = vmatprep.subr.mxu0 0.0
  %1839 = vmatpush1.msra.mxu0 0.0
  %1840 = vmatprep.subr.mxu0 0.0
  %1841 = vmatpush1.msra.mxu0 0.0
  %1842 = vmatprep.subr.mxu0 0.0
  %1843 = vmatpush1.msra.mxu0 0.0
  %1844 = vmatprep.subr.mxu0 0.0
  %1845 = vmatpush1.msra.mxu0 0.0
  %1846 = vmatprep.subr.mxu0 0.0
  %1847 = vmatpush1.msra.mxu0 0.0
  %1848 = vmatprep.subr.mxu0 0.0
  %1849 = vmatpush1.msra.mxu0 0.0
  %1850 = vmatprep.subr.mxu0 0.0
  %1851 = vmatpush1.msra.mxu0 0.0
  %1852 = vmatprep.subr.mxu0 0.0
  %1853 = vmatpush1.msra.mxu0 0.0
  %1854 = vmatprep.subr.mxu0 0.0
  %1855 = vmatpush1.msra.mxu0 0.0
  %1856 = vmatprep.subr.mxu0 0.0
  %1857 = vmatpush1.msra.mxu0 0.0
  %1858 = vmatprep.subr.mxu0 0.0
  %1859 = vmatpush1.msra.mxu0 %v1721
  %1860 = vmatprep.subr.mxu0 0.0
  %1861 = vmatpush1.msra.mxu0 %v1720
  %1862 = vmatprep.subr.mxu0 0.0
  %1863 = vmatpush1.msra.mxu0 %v1719
  %1864 = vmatprep.subr.mxu0 0.0
  %1865 = vmatpush1.msra.mxu0 %v1718
  %1866 = vmatprep.subr.mxu0 0.0
  %1867 = vmatpush2.msra.mxu0 0.0
  %1868 = vmatprep.subr.mxu0 0.0
  %1869 = vmatpush2.msra.mxu0 0.0
  %1870 = vmatprep.subr.mxu0 0.0
  %1871 = vmatpush2.msra.mxu0 0.0
  %1872 = vmatprep.subr.mxu0 0.0
  %1873 = vmatpush2.msra.mxu0 0.0
  %1874 = vmatprep.subr.mxu0 0.0
  %1875 = vmatpush2.msra.mxu0 0.0
  %1876 = vmatprep.subr.mxu0 0.0
  %1877 = vmatpush2.msra.mxu0 0.0
  %1878 = vmatprep.subr.mxu0 0.0
  %1879 = vmatpush2.msra.mxu0 0.0
  %1880 = vmatprep.subr.mxu0 0.0
  %1881 = vmatpush2.msra.mxu0 0.0
  %1882 = vmatprep.subr.mxu0 0.0
  %1883 = vmatpush2.msra.mxu0 0.0
  %1884 = vmatprep.subr.mxu0 0.0
  %1885 = vmatpush2.msra.mxu0 0.0
  %1886 = vmatprep.subr.mxu0 0.0
  %1887 = vmatpush2.msra.mxu0 0.0
  %1888 = vmatprep.subr.mxu0 0.0
  %1889 = vmatpush2.msra.mxu0 0.0
  %1890 = vmatprep.subr.mxu0 0.0
  %1891 = vmatpush2.msra.mxu0 0.0
  %1892 = vmatprep.subr.mxu0 0.0
  %1893 = vmatpush2.msra.mxu0 0.0
  %1894 = vmatprep.subr.mxu0 0.0
  %1895 = vmatpush2.msra.mxu0 0.0
  %1896 = vmatprep.subr.mxu0 0.0
  %1897 = vmatpush2.msra.mxu0 0.0
  %1898 = vmatprep.mubr.f32.mxu0 0.0
  %1899 = vmatmul.mubr.f32.gmra.mxu0 %v141
  %v1900 = vpop.f32.mrf.mxu0
  %v1901 = vadd.f32 0.0, %v1900
  %v1902 = vpop.f32.mrf.mxu0
  %1903 = vmatprep.mubr.f32.mxu0 0.0
  %1904 = vmatmul.mubr.f32.gmra.mxu0 %v144
  %v1905 = vpop.f32.mrf.mxu0
  %v1906 = vadd.f32 0.0, %v1905
  %v1907 = vpop.f32.mrf.mxu0
  %1908 = vdwg.mxu0
  %1909 = vmatprep.subr.mxu0 0.0
  %1910 = vmatpush1.msra.mxu0 0.0
  %1911 = vmatprep.subr.mxu0 0.0
  %1912 = vmatpush1.msra.mxu0 0.0
  %1913 = vmatprep.subr.mxu0 0.0
  %1914 = vmatpush1.msra.mxu0 0.0
  %1915 = vmatprep.subr.mxu0 0.0
  %1916 = vmatpush1.msra.mxu0 0.0
  %1917 = vmatprep.subr.mxu0 0.0
  %1918 = vmatpush1.msra.mxu0 0.0
  %1919 = vmatprep.subr.mxu0 0.0
  %1920 = vmatpush1.msra.mxu0 0.0
  %1921 = vmatprep.subr.mxu0 0.0
  %1922 = vmatpush1.msra.mxu0 0.0
  %1923 = vmatprep.subr.mxu0 0.0
  %1924 = vmatpush1.msra.mxu0 0.0
  %1925 = vmatprep.subr.mxu0 0.0
  %1926 = vmatpush1.msra.mxu0 0.0
  %1927 = vmatprep.subr.mxu0 0.0
  %1928 = vmatpush1.msra.mxu0 0.0
  %1929 = vmatprep.subr.mxu0 0.0
  %1930 = vmatpush1.msra.mxu0 0.0
  %1931 = vmatprep.subr.mxu0 0.0
  %1932 = vmatpush1.msra.mxu0 0.0
  %1933 = vmatprep.subr.mxu0 0.0
  %1934 = vmatpush1.msra.mxu0 %v1726
  %1935 = vmatprep.subr.mxu0 0.0
  %1936 = vmatpush1.msra.mxu0 %v1725
  %1937 = vmatprep.subr.mxu0 0.0
  %1938 = vmatpush1.msra.mxu0 %v1724
  %1939 = vmatprep.subr.mxu0 0.0
  %1940 = vmatpush1.msra.mxu0 %v1723
  %1941 = vmatprep.subr.mxu0 0.0
  %1942 = vmatpush2.msra.mxu0 0.0
  %1943 = vmatprep.subr.mxu0 0.0
  %1944 = vmatpush2.msra.mxu0 0.0
  %1945 = vmatprep.subr.mxu0 0.0
  %1946 = vmatpush2.msra.mxu0 0.0
  %1947 = vmatprep.subr.mxu0 0.0
  %1948 = vmatpush2.msra.mxu0 0.0
  %1949 = vmatprep.subr.mxu0 0.0
  %1950 = vmatpush2.msra.mxu0 0.0
  %1951 = vmatprep.subr.mxu0 0.0
  %1952 = vmatpush2.msra.mxu0 0.0
  %1953 = vmatprep.subr.mxu0 0.0
  %1954 = vmatpush2.msra.mxu0 0.0
  %1955 = vmatprep.subr.mxu0 0.0
  %1956 = vmatpush2.msra.mxu0 0.0
  %1957 = vmatprep.subr.mxu0 0.0
  %1958 = vmatpush2.msra.mxu0 0.0
  %1959 = vmatprep.subr.mxu0 0.0
  %1960 = vmatpush2.msra.mxu0 0.0
  %1961 = vmatprep.subr.mxu0 0.0
  %1962 = vmatpush2.msra.mxu0 0.0
  %1963 = vmatprep.subr.mxu0 0.0
  %1964 = vmatpush2.msra.mxu0 0.0
  %1965 = vmatprep.subr.mxu0 0.0
  %1966 = vmatpush2.msra.mxu0 0.0
  %1967 = vmatprep.subr.mxu0 0.0
  %1968 = vmatpush2.msra.mxu0 0.0
  %1969 = vmatprep.subr.mxu0 0.0
  %1970 = vmatpush2.msra.mxu0 0.0
  %1971 = vmatprep.subr.mxu0 0.0
  %1972 = vmatpush2.msra.mxu0 0.0
  %1973 = vmatprep.mubr.f32.mxu0 0.0
  %1974 = vmatmul.mubr.f32.gmra.mxu0 %v141
  %v1975 = vpop.f32.mrf.mxu0
  %v1976 = vadd.f32 0.0, %v1975
  %v1977 = vpop.f32.mrf.mxu0
  %1978 = vmatprep.mubr.f32.mxu0 0.0
  %1979 = vmatmul.mubr.f32.gmra.mxu0 %v144
  %v1980 = vpop.f32.mrf.mxu0
  %v1981 = vadd.f32 0.0, %v1980
  %v1982 = vpop.f32.mrf.mxu0
  %1983 = vdwg.mxu0
  %v1984 = vmul.f32 %v1826, %v98
  %v1985 = vmul.f32 %v1826, %v99
  %v1986 = vmul.f32 %v1826, %v100
  %v1987 = vmul.f32 %v1826, %v101
  %v1989 = vsel %vm139, %v1984, 0
  %v1992 = vsel %vm139, %v1985, 0
  %v1995 = vsel %vm139, %v1986, 0
  %v1998 = vsel %vm139, %v1987, 0
  %v2001 = vsel %vm139, %v1901, 0
  %2003 = vmatprep.subr.mxu0 0.0
  %2004 = vmatpush1.xpose.msra.mxu0 0.0
  %2005 = vmatprep.subr.mxu0 0.0
  %2006 = vmatpush1.xpose.msra.mxu0 0.0
  %2007 = vmatprep.subr.mxu0 0.0
  %2008 = vmatpush1.xpose.msra.mxu0 0.0
  %2009 = vmatprep.subr.mxu0 0.0
  %2010 = vmatpush1.xpose.msra.mxu0 0.0
  %2011 = vmatprep.subr.mxu0 0.0
  %2012 = vmatpush1.xpose.msra.mxu0 0.0
  %2013 = vmatprep.subr.mxu0 0.0
  %2014 = vmatpush1.xpose.msra.mxu0 0.0
  %2015 = vmatprep.subr.mxu0 0.0
  %2016 = vmatpush1.xpose.msra.mxu0 0.0
  %2017 = vmatprep.subr.mxu0 0.0
  %2018 = vmatpush1.xpose.msra.mxu0 0.0
  %2019 = vmatprep.subr.mxu0 0.0
  %2020 = vmatpush1.xpose.msra.mxu0 0.0
  %2021 = vmatprep.subr.mxu0 0.0
  %2022 = vmatpush1.xpose.msra.mxu0 0.0
  %2023 = vmatprep.subr.mxu0 0.0
  %2024 = vmatpush1.xpose.msra.mxu0 0.0
  %2025 = vmatprep.subr.mxu0 0.0
  %2026 = vmatpush1.xpose.msra.mxu0 0.0
  %2027 = vmatprep.subr.mxu0 0.0
  %2028 = vmatpush1.xpose.msra.mxu0 0.0
  %2029 = vmatprep.subr.mxu0 0.0
  %2030 = vmatpush1.xpose.msra.mxu0 0.0
  %2031 = vmatprep.subr.mxu0 0.0
  %2032 = vmatpush1.xpose.msra.mxu0 0.0
  %2033 = vmatprep.subr.mxu0 0.0
  %2034 = vmatpush1.xpose.msra.mxu0 %v2001
  %2035 = vmatprep.subr.mxu0 0.0
  %2036 = vmatpush2.xpose.msra.mxu0 0.0
  %2037 = vmatprep.subr.mxu0 0.0
  %2038 = vmatpush2.xpose.msra.mxu0 0.0
  %2039 = vmatprep.subr.mxu0 0.0
  %2040 = vmatpush2.xpose.msra.mxu0 0.0
  %2041 = vmatprep.subr.mxu0 0.0
  %2042 = vmatpush2.xpose.msra.mxu0 0.0
  %2043 = vmatprep.subr.mxu0 0.0
  %2044 = vmatpush2.xpose.msra.mxu0 0.0
  %2045 = vmatprep.subr.mxu0 0.0
  %2046 = vmatpush2.xpose.msra.mxu0 0.0
  %2047 = vmatprep.subr.mxu0 0.0
  %2048 = vmatpush2.xpose.msra.mxu0 0.0
  %2049 = vmatprep.subr.mxu0 0.0
  %2050 = vmatpush2.xpose.msra.mxu0 0.0
  %2051 = vmatprep.subr.mxu0 0.0
  %2052 = vmatpush2.xpose.msra.mxu0 0.0
  %2053 = vmatprep.subr.mxu0 0.0
  %2054 = vmatpush2.xpose.msra.mxu0 0.0
  %2055 = vmatprep.subr.mxu0 0.0
  %2056 = vmatpush2.xpose.msra.mxu0 0.0
  %2057 = vmatprep.subr.mxu0 0.0
  %2058 = vmatpush2.xpose.msra.mxu0 0.0
  %2059 = vmatprep.subr.mxu0 0.0
  %2060 = vmatpush2.xpose.msra.mxu0 0.0
  %2061 = vmatprep.subr.mxu0 0.0
  %2062 = vmatpush2.xpose.msra.mxu0 0.0
  %2063 = vmatprep.subr.mxu0 0.0
  %2064 = vmatpush2.xpose.msra.mxu0 0.0
  %2065 = vmatprep.subr.mxu0 0.0
  %2066 = vmatpush2.xpose.msra.mxu0 0.0
  %2067 = vmatprep.mubr.f32.mxu0 0.0
  %2068 = vmatmul.mubr.f32.gmra.mxu0 %v1989
  %v2069 = vpop.f32.mrf.mxu0
  %v2070 = vadd.f32 0.0, %v2069
  %v2071 = vpop.f32.mrf.mxu0
  %2072 = vmatprep.mubr.f32.mxu0 0.0
  %2073 = vmatmul.mubr.f32.gmra.mxu0 %v1992
  %v2074 = vpop.f32.mrf.mxu0
  %v2075 = vadd.f32 0.0, %v2074
  %v2076 = vpop.f32.mrf.mxu0
  %2077 = vmatprep.mubr.f32.mxu0 0.0
  %2078 = vmatmul.mubr.f32.gmra.mxu0 %v1995
  %v2079 = vpop.f32.mrf.mxu0
  %v2080 = vadd.f32 0.0, %v2079
  %v2081 = vpop.f32.mrf.mxu0
  %2082 = vmatprep.mubr.f32.mxu0 0.0
  %2083 = vmatmul.mubr.f32.gmra.mxu0 %v1998
  %v2084 = vpop.f32.mrf.mxu0
  %v2085 = vadd.f32 0.0, %v2084
  %v2086 = vpop.f32.mrf.mxu0
  %2087 = vdwg.mxu0
  %v2089 = vsel %vm481, %v2070, 0
  %v2092 = vsel %vm481, %v2075, 0
  %v2095 = vsel %vm481, %v2080, 0
  %v2098 = vsel %vm481, %v2085, 0
  %2100 = vmatprep.subr.mxu0 0.0
  %2101 = vmatpush1.msra.mxu0 0.0
  %2102 = vmatprep.subr.mxu0 0.0
  %2103 = vmatpush1.msra.mxu0 0.0
  %2104 = vmatprep.subr.mxu0 0.0
  %2105 = vmatpush1.msra.mxu0 0.0
  %2106 = vmatprep.subr.mxu0 0.0
  %2107 = vmatpush1.msra.mxu0 0.0
  %2108 = vmatprep.subr.mxu0 0.0
  %2109 = vmatpush1.msra.mxu0 0.0
  %2110 = vmatprep.subr.mxu0 0.0
  %2111 = vmatpush1.msra.mxu0 0.0
  %2112 = vmatprep.subr.mxu0 0.0
  %2113 = vmatpush1.msra.mxu0 0.0
  %2114 = vmatprep.subr.mxu0 0.0
  %2115 = vmatpush1.msra.mxu0 0.0
  %2116 = vmatprep.subr.mxu0 0.0
  %2117 = vmatpush1.msra.mxu0 0.0
  %2118 = vmatprep.subr.mxu0 0.0
  %2119 = vmatpush1.msra.mxu0 0.0
  %2120 = vmatprep.subr.mxu0 0.0
  %2121 = vmatpush1.msra.mxu0 0.0
  %2122 = vmatprep.subr.mxu0 0.0
  %2123 = vmatpush1.msra.mxu0 0.0
  %2124 = vmatprep.subr.mxu0 0.0
  %2125 = vmatpush1.msra.mxu0 0.0
  %2126 = vmatprep.subr.mxu0 0.0
  %2127 = vmatpush1.msra.mxu0 0.0
  %2128 = vmatprep.subr.mxu0 0.0
  %2129 = vmatpush1.msra.mxu0 0.0
  %2130 = vmatprep.subr.mxu0 0.0
  %2131 = vmatpush1.msra.mxu0 %v81
  %2132 = vmatprep.subr.mxu0 0.0
  %2133 = vmatpush2.msra.mxu0 0.0
  %2134 = vmatprep.subr.mxu0 0.0
  %2135 = vmatpush2.msra.mxu0 0.0
  %2136 = vmatprep.subr.mxu0 0.0
  %2137 = vmatpush2.msra.mxu0 0.0
  %2138 = vmatprep.subr.mxu0 0.0
  %2139 = vmatpush2.msra.mxu0 0.0
  %2140 = vmatprep.subr.mxu0 0.0
  %2141 = vmatpush2.msra.mxu0 0.0
  %2142 = vmatprep.subr.mxu0 0.0
  %2143 = vmatpush2.msra.mxu0 0.0
  %2144 = vmatprep.subr.mxu0 0.0
  %2145 = vmatpush2.msra.mxu0 0.0
  %2146 = vmatprep.subr.mxu0 0.0
  %2147 = vmatpush2.msra.mxu0 0.0
  %2148 = vmatprep.subr.mxu0 0.0
  %2149 = vmatpush2.msra.mxu0 0.0
  %2150 = vmatprep.subr.mxu0 0.0
  %2151 = vmatpush2.msra.mxu0 0.0
  %2152 = vmatprep.subr.mxu0 0.0
  %2153 = vmatpush2.msra.mxu0 0.0
  %2154 = vmatprep.subr.mxu0 0.0
  %2155 = vmatpush2.msra.mxu0 0.0
  %2156 = vmatprep.subr.mxu0 0.0
  %2157 = vmatpush2.msra.mxu0 0.0
  %2158 = vmatprep.subr.mxu0 0.0
  %2159 = vmatpush2.msra.mxu0 0.0
  %2160 = vmatprep.subr.mxu0 0.0
  %2161 = vmatpush2.msra.mxu0 0.0
  %2162 = vmatprep.subr.mxu0 0.0
  %2163 = vmatpush2.msra.mxu0 0.0
  %2164 = vmatprep.mubr.f32.mxu0 0.0
  %2165 = vmatmul.mubr.f32.gmra.mxu0 %v2089
  %v2166 = vpop.f32.mrf.mxu0
  %v2167 = vadd.f32 0.0, %v2166
  %v2168 = vpop.f32.mrf.mxu0
  %2169 = vmatprep.mubr.f32.mxu0 0.0
  %2170 = vmatmul.mubr.f32.gmra.mxu0 %v2092
  %v2171 = vpop.f32.mrf.mxu0
  %v2172 = vadd.f32 0.0, %v2171
  %v2173 = vpop.f32.mrf.mxu0
  %2174 = vmatprep.mubr.f32.mxu0 0.0
  %2175 = vmatmul.mubr.f32.gmra.mxu0 %v2095
  %v2176 = vpop.f32.mrf.mxu0
  %v2177 = vadd.f32 0.0, %v2176
  %v2178 = vpop.f32.mrf.mxu0
  %2179 = vmatprep.mubr.f32.mxu0 0.0
  %2180 = vmatmul.mubr.f32.gmra.mxu0 %v2098
  %v2181 = vpop.f32.mrf.mxu0
  %v2182 = vadd.f32 0.0, %v2181
  %v2183 = vpop.f32.mrf.mxu0
  %2184 = vdwg.mxu0
  %v2185 = vmul.f32 %v2167, %v1735
  %v2186 = vmul.f32 %v2172, %v1736
  %v2187 = vmul.f32 %v2177, %v1737
  %v2188 = vmul.f32 %v2182, %v1738
  %s2189 = scalar_lea.vmem %s2, 64
  %v2190 = vld [vmem:[%s2189] sm:$0xff]
  %v2191 = vld [vmem:[%s2189 + $0x8] sm:$0xff]
  %v2192 = vld [vmem:[%s2189 + $0x10] sm:$0xff]
  %v2193 = vld [vmem:[%s2189 + $0x18] sm:$0xff]
  %v2194 = vmul.f32 %v2190, %v1740
  %v2195 = vmul.f32 %v2191, %v1741
  %v2196 = vmul.f32 %v2192, %v1742
  %v2197 = vmul.f32 %v2193, %v1743
  %v2198 = vadd.f32 %v2185, %v2194
  %v2199 = vadd.f32 %v2186, %v2195
  %v2200 = vadd.f32 %v2187, %v2196
  %v2201 = vadd.f32 %v2188, %v2197
  %v2202 = vadd.f32 %v2198, %v1745
  %v2203 = vadd.f32 %v2199, %v1746
  %v2204 = vadd.f32 %v2200, %v1747
  %v2205 = vadd.f32 %v2201, %v1748
  %v2206 = vmax.f32 %v2202, 0.0
  %v2207 = vmax.f32 %v2203, 0.0
  %v2208 = vmax.f32 %v2204, 0.0
  %v2209 = vmax.f32 %v2205, 0.0
  %v2210 = vmul.f32 %v2206, %v1750
  %v2211 = vmul.f32 %v2207, %v1751
  %v2212 = vmul.f32 %v2208, %v1752
  %v2213 = vmul.f32 %v2209, %v1753
  %2214 = vmatprep.subr.mxu0 0.0
  %2215 = vmatpush1.msra.mxu0 %v97
  %2216 = vmatprep.subr.mxu0 0.0
  %2217 = vmatpush1.msra.mxu0 %v96
  %2218 = vmatprep.subr.mxu0 0.0
  %2219 = vmatpush1.msra.mxu0 %v95
  %2220 = vmatprep.subr.mxu0 0.0
  %2221 = vmatpush1.msra.mxu0 %v94
  %2222 = vmatprep.subr.mxu0 0.0
  %2223 = vmatpush1.msra.mxu0 %v93
  %2224 = vmatprep.subr.mxu0 0.0
  %2225 = vmatpush1.msra.mxu0 %v92
  %2226 = vmatprep.subr.mxu0 0.0
  %2227 = vmatpush1.msra.mxu0 %v91
  %2228 = vmatprep.subr.mxu0 0.0
  %2229 = vmatpush1.msra.mxu0 %v90
  %2230 = vmatprep.subr.mxu0 0.0
  %2231 = vmatpush1.msra.mxu0 %v89
  %2232 = vmatprep.subr.mxu0 0.0
  %2233 = vmatpush1.msra.mxu0 %v88
  %2234 = vmatprep.subr.mxu0 0.0
  %2235 = vmatpush1.msra.mxu0 %v87
  %2236 = vmatprep.subr.mxu0 0.0
  %2237 = vmatpush1.msra.mxu0 %v86
  %2238 = vmatprep.subr.mxu0 0.0
  %2239 = vmatpush1.msra.mxu0 %v85
  %2240 = vmatprep.subr.mxu0 0.0
  %2241 = vmatpush1.msra.mxu0 %v84
  %2242 = vmatprep.subr.mxu0 0.0
  %2243 = vmatpush1.msra.mxu0 %v83
  %2244 = vmatprep.subr.mxu0 0.0
  %2245 = vmatpush1.msra.mxu0 %v82
  %2246 = vmatprep.subr.mxu0 0.0
  %2247 = vmatpush2.msra.mxu0 0.0
  %2248 = vmatprep.subr.mxu0 0.0
  %2249 = vmatpush2.msra.mxu0 0.0
  %2250 = vmatprep.subr.mxu0 0.0
  %2251 = vmatpush2.msra.mxu0 0.0
  %2252 = vmatprep.subr.mxu0 0.0
  %2253 = vmatpush2.msra.mxu0 0.0
  %2254 = vmatprep.subr.mxu0 0.0
  %2255 = vmatpush2.msra.mxu0 0.0
  %2256 = vmatprep.subr.mxu0 0.0
  %2257 = vmatpush2.msra.mxu0 0.0
  %2258 = vmatprep.subr.mxu0 0.0
  %2259 = vmatpush2.msra.mxu0 0.0
  %2260 = vmatprep.subr.mxu0 0.0
  %2261 = vmatpush2.msra.mxu0 0.0
  %2262 = vmatprep.subr.mxu0 0.0
  %2263 = vmatpush2.msra.mxu0 0.0
  %2264 = vmatprep.subr.mxu0 0.0
  %2265 = vmatpush2.msra.mxu0 0.0
  %2266 = vmatprep.subr.mxu0 0.0
  %2267 = vmatpush2.msra.mxu0 0.0
  %2268 = vmatprep.subr.mxu0 0.0
  %2269 = vmatpush2.msra.mxu0 0.0
  %2270 = vmatprep.subr.mxu0 0.0
  %2271 = vmatpush2.msra.mxu0 0.0
  %2272 = vmatprep.subr.mxu0 0.0
  %2273 = vmatpush2.msra.mxu0 0.0
  %2274 = vmatprep.subr.mxu0 0.0
  %2275 = vmatpush2.msra.mxu0 0.0
  %2276 = vmatprep.subr.mxu0 0.0
  %2277 = vmatpush2.msra.mxu0 0.0
  %2278 = vmatprep.mubr.f32.mxu0 0.0
  %2279 = vmatmul.mubr.f32.gmra.mxu0 %v2210
  %v2280 = vpop.f32.mrf.mxu0
  %v2281 = vadd.f32 %v1755, %v2280
  %v2282 = vpop.f32.mrf.mxu0
  %2283 = vmatprep.mubr.f32.mxu0 0.0
  %2284 = vmatmul.mubr.f32.gmra.mxu0 %v2211
  %v2285 = vpop.f32.mrf.mxu0
  %v2286 = vadd.f32 %v1756, %v2285
  %v2287 = vpop.f32.mrf.mxu0
  %2288 = vmatprep.mubr.f32.mxu0 0.0
  %2289 = vmatmul.mubr.f32.gmra.mxu0 %v2212
  %v2290 = vpop.f32.mrf.mxu0
  %v2291 = vadd.f32 %v1757, %v2290
  %v2292 = vpop.f32.mrf.mxu0
  %2293 = vmatprep.mubr.f32.mxu0 0.0
  %2294 = vmatmul.mubr.f32.gmra.mxu0 %v2213
  %v2295 = vpop.f32.mrf.mxu0
  %v2296 = vadd.f32 %v1758, %v2295
  %v2297 = vpop.f32.mrf.mxu0
  %2298 = vdwg.mxu0
  %v2299 = vsel %vm481, %v2281, -inf
  %2300 = vmax.xlane.f32.xlu0 %v2299
  %v2301 = vpop.xlane.xlu0 %2300
  %v2302 = vsel %vm481, %v2286, -inf
  %2303 = vmax.xlane.f32.xlu0 %v2302
  %v2304 = vpop.xlane.xlu0 %2303
  %v2305 = vsel %vm481, %v2291, -inf
  %2306 = vmax.xlane.f32.xlu0 %v2305
  %v2307 = vpop.xlane.xlu0 %2306
  %v2308 = vsel %vm481, %v2296, -inf
  %2309 = vmax.xlane.f32.xlu0 %v2308
  %v2310 = vpop.xlane.xlu0 %2309
  %v2311 = vsub.f32 %v2281, %v2301
  %v2312 = vsub.f32 %v2286, %v2304
  %v2313 = vsub.f32 %v2291, %v2307
  %v2314 = vsub.f32 %v2296, %v2310
  %v2315 = vmul.f32 %v2311, 1.442695
  %v2316 = vpow.pop %v2315
  %v2317 = vmul.f32 %v2312, 1.442695
  %v2318 = vpow.pop %v2317
  %v2319 = vmul.f32 %v2313, 1.442695
  %v2320 = vpow.pop %v2319
  %v2321 = vmul.f32 %v2314, 1.442695
  %v2322 = vpow.pop %v2321
  %v2323 = vsel %vm481, %v2316, 0.0
  %2324 = vadd.xlane.f32.xlu0 %v2323
  %v2325 = vpop.xlane.xlu0 %2324
  %v2326 = vsel %vm481, %v2318, 0.0
  %2327 = vadd.xlane.f32.xlu0 %v2326
  %v2328 = vpop.xlane.xlu0 %2327
  %v2329 = vsel %vm481, %v2320, 0.0
  %2330 = vadd.xlane.f32.xlu0 %v2329
  %v2331 = vpop.xlane.xlu0 %2330
  %v2332 = vsel %vm481, %v2322, 0.0
  %2333 = vadd.xlane.f32.xlu0 %v2332
  %v2334 = vpop.xlane.xlu0 %2333
  %v2335 = vrcp.pop %v2325
  %v2336 = vrcp.pop %v2328
  %v2337 = vrcp.pop %v2331
  %v2338 = vrcp.pop %v2334
  %v2339 = vmul.f32 %v2316, %v2335
  %v2340 = vmul.f32 %v2318, %v2336
  %v2341 = vmul.f32 %v2320, %v2337
  %v2342 = vmul.f32 %v2322, %v2338
  %v2344 = vsel %vm481, %v2339, 0
  %v2347 = vsel %vm481, %v2340, 0
  %v2350 = vsel %vm481, %v2341, 0
  %v2353 = vsel %vm481, %v2342, 0
  %2355 = vmatprep.subr.mxu0 0.0
  %2356 = vmatpush1.msra.mxu0 0.0
  %2357 = vmatprep.subr.mxu0 0.0
  %2358 = vmatpush1.msra.mxu0 0.0
  %2359 = vmatprep.subr.mxu0 0.0
  %2360 = vmatpush1.msra.mxu0 0.0
  %2361 = vmatprep.subr.mxu0 0.0
  %2362 = vmatpush1.msra.mxu0 0.0
  %2363 = vmatprep.subr.mxu0 0.0
  %2364 = vmatpush1.msra.mxu0 0.0
  %2365 = vmatprep.subr.mxu0 0.0
  %2366 = vmatpush1.msra.mxu0 0.0
  %2367 = vmatprep.subr.mxu0 0.0
  %2368 = vmatpush1.msra.mxu0 0.0
  %2369 = vmatprep.subr.mxu0 0.0
  %2370 = vmatpush1.msra.mxu0 0.0
  %2371 = vmatprep.subr.mxu0 0.0
  %2372 = vmatpush1.msra.mxu0 0.0
  %2373 = vmatprep.subr.mxu0 0.0
  %2374 = vmatpush1.msra.mxu0 0.0
  %2375 = vmatprep.subr.mxu0 0.0
  %2376 = vmatpush1.msra.mxu0 0.0
  %2377 = vmatprep.subr.mxu0 0.0
  %2378 = vmatpush1.msra.mxu0 0.0
  %2379 = vmatprep.subr.mxu0 0.0
  %2380 = vmatpush1.msra.mxu0 0.0
  %2381 = vmatprep.subr.mxu0 0.0
  %2382 = vmatpush1.msra.mxu0 0.0
  %2383 = vmatprep.subr.mxu0 0.0
  %2384 = vmatpush1.msra.mxu0 0.0
  %2385 = vmatprep.subr.mxu0 0.0
  %2386 = vmatpush1.msra.mxu0 %v1976
  %2387 = vmatprep.subr.mxu0 0.0
  %2388 = vmatpush2.msra.mxu0 0.0
  %2389 = vmatprep.subr.mxu0 0.0
  %2390 = vmatpush2.msra.mxu0 0.0
  %2391 = vmatprep.subr.mxu0 0.0
  %2392 = vmatpush2.msra.mxu0 0.0
  %2393 = vmatprep.subr.mxu0 0.0
  %2394 = vmatpush2.msra.mxu0 0.0
  %2395 = vmatprep.subr.mxu0 0.0
  %2396 = vmatpush2.msra.mxu0 0.0
  %2397 = vmatprep.subr.mxu0 0.0
  %2398 = vmatpush2.msra.mxu0 0.0
  %2399 = vmatprep.subr.mxu0 0.0
  %2400 = vmatpush2.msra.mxu0 0.0
  %2401 = vmatprep.subr.mxu0 0.0
  %2402 = vmatpush2.msra.mxu0 0.0
  %2403 = vmatprep.subr.mxu0 0.0
  %2404 = vmatpush2.msra.mxu0 0.0
  %2405 = vmatprep.subr.mxu0 0.0
  %2406 = vmatpush2.msra.mxu0 0.0
  %2407 = vmatprep.subr.mxu0 0.0
  %2408 = vmatpush2.msra.mxu0 0.0
  %2409 = vmatprep.subr.mxu0 0.0
  %2410 = vmatpush2.msra.mxu0 0.0
  %2411 = vmatprep.subr.mxu0 0.0
  %2412 = vmatpush2.msra.mxu0 0.0
  %2413 = vmatprep.subr.mxu0 0.0
  %2414 = vmatpush2.msra.mxu0 0.0
  %2415 = vmatprep.subr.mxu0 0.0
  %2416 = vmatpush2.msra.mxu0 0.0
  %2417 = vmatprep.subr.mxu0 0.0
  %2418 = vmatpush2.msra.mxu0 0.0
  %2419 = vmatprep.mubr.f32.mxu0 0.0
  %2420 = vmatmul.mubr.f32.gmra.mxu0 %v2344
  %v2421 = vpop.f32.mrf.mxu0
  %v2422 = vadd.f32 0.0, %v2421
  %v2423 = vpop.f32.mrf.mxu0
  %2424 = vmatprep.mubr.f32.mxu0 0.0
  %2425 = vmatmul.mubr.f32.gmra.mxu0 %v2347
  %v2426 = vpop.f32.mrf.mxu0
  %v2427 = vadd.f32 0.0, %v2426
  %v2428 = vpop.f32.mrf.mxu0
  %2429 = vmatprep.mubr.f32.mxu0 0.0
  %2430 = vmatmul.mubr.f32.gmra.mxu0 %v2350
  %v2431 = vpop.f32.mrf.mxu0
  %v2432 = vadd.f32 0.0, %v2431
  %v2433 = vpop.f32.mrf.mxu0
  %2434 = vmatprep.mubr.f32.mxu0 0.0
  %2435 = vmatmul.mubr.f32.gmra.mxu0 %v2353
  %v2436 = vpop.f32.mrf.mxu0
  %v2437 = vadd.f32 0.0, %v2436
  %v2438 = vpop.f32.mrf.mxu0
  %2439 = vdwg.mxu0
  %v2440 = vmul.f32 %v2422, %v98
  %v2441 = vmul.f32 %v2427, %v99
  %v2442 = vmul.f32 %v2432, %v100
  %v2443 = vmul.f32 %v2437, %v101
  %v2444 = vadd.f32 %v2440, %v2441
  %v2445 = vadd.f32 %v2444, %v2442
  %v2446 = vadd.f32 %v2445, %v2443
  %s2447 = scalar_lea.vmem [#allocation2], 16
  %2448 = vst.msk [vmem:[%s2447] sm:$0xff] %vm139, %v2446
  %v2449 = vmul.f32 %v1831, %v98
  %v2450 = vmul.f32 %v1831, %v99
  %v2451 = vmul.f32 %v1831, %v100
  %v2452 = vmul.f32 %v1831, %v101
  %v2454 = vsel %vm139, %v2449, 0
  %v2457 = vsel %vm139, %v2450, 0
  %v2460 = vsel %vm139, %v2451, 0
  %v2463 = vsel %vm139, %v2452, 0
  %v2466 = vsel %vm139, %v1906, 0
  %2468 = vmatprep.subr.mxu0 0.0
  %2469 = vmatpush1.xpose.msra.mxu0 0.0
  %2470 = vmatprep.subr.mxu0 0.0
  %2471 = vmatpush1.xpose.msra.mxu0 0.0
  %2472 = vmatprep.subr.mxu0 0.0
  %2473 = vmatpush1.xpose.msra.mxu0 0.0
  %2474 = vmatprep.subr.mxu0 0.0
  %2475 = vmatpush1.xpose.msra.mxu0 0.0
  %2476 = vmatprep.subr.mxu0 0.0
  %2477 = vmatpush1.xpose.msra.mxu0 0.0
  %2478 = vmatprep.subr.mxu0 0.0
  %2479 = vmatpush1.xpose.msra.mxu0 0.0
  %2480 = vmatprep.subr.mxu0 0.0
  %2481 = vmatpush1.xpose.msra.mxu0 0.0
  %2482 = vmatprep.subr.mxu0 0.0
  %2483 = vmatpush1.xpose.msra.mxu0 0.0
  %2484 = vmatprep.subr.mxu0 0.0
  %2485 = vmatpush1.xpose.msra.mxu0 0.0
  %2486 = vmatprep.subr.mxu0 0.0
  %2487 = vmatpush1.xpose.msra.mxu0 0.0
  %2488 = vmatprep.subr.mxu0 0.0
  %2489 = vmatpush1.xpose.msra.mxu0 0.0
  %2490 = vmatprep.subr.mxu0 0.0
  %2491 = vmatpush1.xpose.msra.mxu0 0.0
  %2492 = vmatprep.subr.mxu0 0.0
  %2493 = vmatpush1.xpose.msra.mxu0 0.0
  %2494 = vmatprep.subr.mxu0 0.0
  %2495 = vmatpush1.xpose.msra.mxu0 0.0
  %2496 = vmatprep.subr.mxu0 0.0
  %2497 = vmatpush1.xpose.msra.mxu0 0.0
  %2498 = vmatprep.subr.mxu0 0.0
  %2499 = vmatpush1.xpose.msra.mxu0 %v2466
  %2500 = vmatprep.subr.mxu0 0.0
  %2501 = vmatpush2.xpose.msra.mxu0 0.0
  %2502 = vmatprep.subr.mxu0 0.0
  %2503 = vmatpush2.xpose.msra.mxu0 0.0
  %2504 = vmatprep.subr.mxu0 0.0
  %2505 = vmatpush2.xpose.msra.mxu0 0.0
  %2506 = vmatprep.subr.mxu0 0.0
  %2507 = vmatpush2.xpose.msra.mxu0 0.0
  %2508 = vmatprep.subr.mxu0 0.0
  %2509 = vmatpush2.xpose.msra.mxu0 0.0
  %2510 = vmatprep.subr.mxu0 0.0
  %2511 = vmatpush2.xpose.msra.mxu0 0.0
  %2512 = vmatprep.subr.mxu0 0.0
  %2513 = vmatpush2.xpose.msra.mxu0 0.0
  %2514 = vmatprep.subr.mxu0 0.0
  %2515 = vmatpush2.xpose.msra.mxu0 0.0
  %2516 = vmatprep.subr.mxu0 0.0
  %2517 = vmatpush2.xpose.msra.mxu0 0.0
  %2518 = vmatprep.subr.mxu0 0.0
  %2519 = vmatpush2.xpose.msra.mxu0 0.0
  %2520 = vmatprep.subr.mxu0 0.0
  %2521 = vmatpush2.xpose.msra.mxu0 0.0
  %2522 = vmatprep.subr.mxu0 0.0
  %2523 = vmatpush2.xpose.msra.mxu0 0.0
  %2524 = vmatprep.subr.mxu0 0.0
  %2525 = vmatpush2.xpose.msra.mxu0 0.0
  %2526 = vmatprep.subr.mxu0 0.0
  %2527 = vmatpush2.xpose.msra.mxu0 0.0
  %2528 = vmatprep.subr.mxu0 0.0
  %2529 = vmatpush2.xpose.msra.mxu0 0.0
  %2530 = vmatprep.subr.mxu0 0.0
  %2531 = vmatpush2.xpose.msra.mxu0 0.0
  %2532 = vmatprep.mubr.f32.mxu0 0.0
  %2533 = vmatmul.mubr.f32.gmra.mxu0 %v2454
  %v2534 = vpop.f32.mrf.mxu0
  %v2535 = vadd.f32 0.0, %v2534
  %v2536 = vpop.f32.mrf.mxu0
  %2537 = vmatprep.mubr.f32.mxu0 0.0
  %2538 = vmatmul.mubr.f32.gmra.mxu0 %v2457
  %v2539 = vpop.f32.mrf.mxu0
  %v2540 = vadd.f32 0.0, %v2539
  %v2541 = vpop.f32.mrf.mxu0
  %2542 = vmatprep.mubr.f32.mxu0 0.0
  %2543 = vmatmul.mubr.f32.gmra.mxu0 %v2460
  %v2544 = vpop.f32.mrf.mxu0
  %v2545 = vadd.f32 0.0, %v2544
  %v2546 = vpop.f32.mrf.mxu0
  %2547 = vmatprep.mubr.f32.mxu0 0.0
  %2548 = vmatmul.mubr.f32.gmra.mxu0 %v2463
  %v2549 = vpop.f32.mrf.mxu0
  %v2550 = vadd.f32 0.0, %v2549
  %v2551 = vpop.f32.mrf.mxu0
  %2552 = vdwg.mxu0
  %v2554 = vsel %vm481, %v2535, 0
  %v2557 = vsel %vm481, %v2540, 0
  %v2560 = vsel %vm481, %v2545, 0
  %v2563 = vsel %vm481, %v2550, 0
  %2565 = vmatprep.subr.mxu0 0.0
  %2566 = vmatpush1.msra.mxu0 0.0
  %2567 = vmatprep.subr.mxu0 0.0
  %2568 = vmatpush1.msra.mxu0 0.0
  %2569 = vmatprep.subr.mxu0 0.0
  %2570 = vmatpush1.msra.mxu0 0.0
  %2571 = vmatprep.subr.mxu0 0.0
  %2572 = vmatpush1.msra.mxu0 0.0
  %2573 = vmatprep.subr.mxu0 0.0
  %2574 = vmatpush1.msra.mxu0 0.0
  %2575 = vmatprep.subr.mxu0 0.0
  %2576 = vmatpush1.msra.mxu0 0.0
  %2577 = vmatprep.subr.mxu0 0.0
  %2578 = vmatpush1.msra.mxu0 0.0
  %2579 = vmatprep.subr.mxu0 0.0
  %2580 = vmatpush1.msra.mxu0 0.0
  %2581 = vmatprep.subr.mxu0 0.0
  %2582 = vmatpush1.msra.mxu0 0.0
  %2583 = vmatprep.subr.mxu0 0.0
  %2584 = vmatpush1.msra.mxu0 0.0
  %2585 = vmatprep.subr.mxu0 0.0
  %2586 = vmatpush1.msra.mxu0 0.0
  %2587 = vmatprep.subr.mxu0 0.0
  %2588 = vmatpush1.msra.mxu0 0.0
  %2589 = vmatprep.subr.mxu0 0.0
  %2590 = vmatpush1.msra.mxu0 0.0
  %2591 = vmatprep.subr.mxu0 0.0
  %2592 = vmatpush1.msra.mxu0 0.0
  %2593 = vmatprep.subr.mxu0 0.0
  %2594 = vmatpush1.msra.mxu0 0.0
  %2595 = vmatprep.subr.mxu0 0.0
  %2596 = vmatpush1.msra.mxu0 %v81
  %2597 = vmatprep.subr.mxu0 0.0
  %2598 = vmatpush2.msra.mxu0 0.0
  %2599 = vmatprep.subr.mxu0 0.0
  %2600 = vmatpush2.msra.mxu0 0.0
  %2601 = vmatprep.subr.mxu0 0.0
  %2602 = vmatpush2.msra.mxu0 0.0
  %2603 = vmatprep.subr.mxu0 0.0
  %2604 = vmatpush2.msra.mxu0 0.0
  %2605 = vmatprep.subr.mxu0 0.0
  %2606 = vmatpush2.msra.mxu0 0.0
  %2607 = vmatprep.subr.mxu0 0.0
  %2608 = vmatpush2.msra.mxu0 0.0
  %2609 = vmatprep.subr.mxu0 0.0
  %2610 = vmatpush2.msra.mxu0 0.0
  %2611 = vmatprep.subr.mxu0 0.0
  %2612 = vmatpush2.msra.mxu0 0.0
  %2613 = vmatprep.subr.mxu0 0.0
  %2614 = vmatpush2.msra.mxu0 0.0
  %2615 = vmatprep.subr.mxu0 0.0
  %2616 = vmatpush2.msra.mxu0 0.0
  %2617 = vmatprep.subr.mxu0 0.0
  %2618 = vmatpush2.msra.mxu0 0.0
  %2619 = vmatprep.subr.mxu0 0.0
  %2620 = vmatpush2.msra.mxu0 0.0
  %2621 = vmatprep.subr.mxu0 0.0
  %2622 = vmatpush2.msra.mxu0 0.0
  %2623 = vmatprep.subr.mxu0 0.0
  %2624 = vmatpush2.msra.mxu0 0.0
  %2625 = vmatprep.subr.mxu0 0.0
  %2626 = vmatpush2.msra.mxu0 0.0
  %2627 = vmatprep.subr.mxu0 0.0
  %2628 = vmatpush2.msra.mxu0 0.0
  %2629 = vmatprep.mubr.f32.mxu0 0.0
  %2630 = vmatmul.mubr.f32.gmra.mxu0 %v2554
  %v2631 = vpop.f32.mrf.mxu0
  %v2632 = vadd.f32 0.0, %v2631
  %v2633 = vpop.f32.mrf.mxu0
  %2634 = vmatprep.mubr.f32.mxu0 0.0
  %2635 = vmatmul.mubr.f32.gmra.mxu0 %v2557
  %v2636 = vpop.f32.mrf.mxu0
  %v2637 = vadd.f32 0.0, %v2636
  %v2638 = vpop.f32.mrf.mxu0
  %2639 = vmatprep.mubr.f32.mxu0 0.0
  %2640 = vmatmul.mubr.f32.gmra.mxu0 %v2560
  %v2641 = vpop.f32.mrf.mxu0
  %v2642 = vadd.f32 0.0, %v2641
  %v2643 = vpop.f32.mrf.mxu0
  %2644 = vmatprep.mubr.f32.mxu0 0.0
  %2645 = vmatmul.mubr.f32.gmra.mxu0 %v2563
  %v2646 = vpop.f32.mrf.mxu0
  %v2647 = vadd.f32 0.0, %v2646
  %v2648 = vpop.f32.mrf.mxu0
  %2649 = vdwg.mxu0
  %v2650 = vmul.f32 %v2632, %v1735
  %v2651 = vmul.f32 %v2637, %v1736
  %v2652 = vmul.f32 %v2642, %v1737
  %v2653 = vmul.f32 %v2647, %v1738
  %s2654 = scalar_lea.vmem %s2, 96
  %v2655 = vld [vmem:[%s2654] sm:$0xff]
  %v2656 = vld [vmem:[%s2654 + $0x8] sm:$0xff]
  %v2657 = vld [vmem:[%s2654 + $0x10] sm:$0xff]
  %v2658 = vld [vmem:[%s2654 + $0x18] sm:$0xff]
  %v2659 = vmul.f32 %v2655, %v1740
  %v2660 = vmul.f32 %v2656, %v1741
  %v2661 = vmul.f32 %v2657, %v1742
  %v2662 = vmul.f32 %v2658, %v1743
  %v2663 = vadd.f32 %v2650, %v2659
  %v2664 = vadd.f32 %v2651, %v2660
  %v2665 = vadd.f32 %v2652, %v2661
  %v2666 = vadd.f32 %v2653, %v2662
  %v2667 = vadd.f32 %v2663, %v1745
  %v2668 = vadd.f32 %v2664, %v1746
  %v2669 = vadd.f32 %v2665, %v1747
  %v2670 = vadd.f32 %v2666, %v1748
  %v2671 = vmax.f32 %v2667, 0.0
  %v2672 = vmax.f32 %v2668, 0.0
  %v2673 = vmax.f32 %v2669, 0.0
  %v2674 = vmax.f32 %v2670, 0.0
  %v2675 = vmul.f32 %v2671, %v1750
  %v2676 = vmul.f32 %v2672, %v1751
  %v2677 = vmul.f32 %v2673, %v1752
  %v2678 = vmul.f32 %v2674, %v1753
  %2679 = vmatprep.subr.mxu0 0.0
  %2680 = vmatpush1.msra.mxu0 %v97
  %2681 = vmatprep.subr.mxu0 0.0
  %2682 = vmatpush1.msra.mxu0 %v96
  %2683 = vmatprep.subr.mxu0 0.0
  %2684 = vmatpush1.msra.mxu0 %v95
  %2685 = vmatprep.subr.mxu0 0.0
  %2686 = vmatpush1.msra.mxu0 %v94
  %2687 = vmatprep.subr.mxu0 0.0
  %2688 = vmatpush1.msra.mxu0 %v93
  %2689 = vmatprep.subr.mxu0 0.0
  %2690 = vmatpush1.msra.mxu0 %v92
  %2691 = vmatprep.subr.mxu0 0.0
  %2692 = vmatpush1.msra.mxu0 %v91
  %2693 = vmatprep.subr.mxu0 0.0
  %2694 = vmatpush1.msra.mxu0 %v90
  %2695 = vmatprep.subr.mxu0 0.0
  %2696 = vmatpush1.msra.mxu0 %v89
  %2697 = vmatprep.subr.mxu0 0.0
  %2698 = vmatpush1.msra.mxu0 %v88
  %2699 = vmatprep.subr.mxu0 0.0
  %2700 = vmatpush1.msra.mxu0 %v87
  %2701 = vmatprep.subr.mxu0 0.0
  %2702 = vmatpush1.msra.mxu0 %v86
  %2703 = vmatprep.subr.mxu0 0.0
  %2704 = vmatpush1.msra.mxu0 %v85
  %2705 = vmatprep.subr.mxu0 0.0
  %2706 = vmatpush1.msra.mxu0 %v84
  %2707 = vmatprep.subr.mxu0 0.0
  %2708 = vmatpush1.msra.mxu0 %v83
  %2709 = vmatprep.subr.mxu0 0.0
  %2710 = vmatpush1.msra.mxu0 %v82
  %2711 = vmatprep.subr.mxu0 0.0
  %2712 = vmatpush2.msra.mxu0 0.0
  %2713 = vmatprep.subr.mxu0 0.0
  %2714 = vmatpush2.msra.mxu0 0.0
  %2715 = vmatprep.subr.mxu0 0.0
  %2716 = vmatpush2.msra.mxu0 0.0
  %2717 = vmatprep.subr.mxu0 0.0
  %2718 = vmatpush2.msra.mxu0 0.0
  %2719 = vmatprep.subr.mxu0 0.0
  %2720 = vmatpush2.msra.mxu0 0.0
  %2721 = vmatprep.subr.mxu0 0.0
  %2722 = vmatpush2.msra.mxu0 0.0
  %2723 = vmatprep.subr.mxu0 0.0
  %2724 = vmatpush2.msra.mxu0 0.0
  %2725 = vmatprep.subr.mxu0 0.0
  %2726 = vmatpush2.msra.mxu0 0.0
  %2727 = vmatprep.subr.mxu0 0.0
  %2728 = vmatpush2.msra.mxu0 0.0
  %2729 = vmatprep.subr.mxu0 0.0
  %2730 = vmatpush2.msra.mxu0 0.0
  %2731 = vmatprep.subr.mxu0 0.0
  %2732 = vmatpush2.msra.mxu0 0.0
  %2733 = vmatprep.subr.mxu0 0.0
  %2734 = vmatpush2.msra.mxu0 0.0
  %2735 = vmatprep.subr.mxu0 0.0
  %2736 = vmatpush2.msra.mxu0 0.0
  %2737 = vmatprep.subr.mxu0 0.0
  %2738 = vmatpush2.msra.mxu0 0.0
  %2739 = vmatprep.subr.mxu0 0.0
  %2740 = vmatpush2.msra.mxu0 0.0
  %2741 = vmatprep.subr.mxu0 0.0
  %2742 = vmatpush2.msra.mxu0 0.0
  %2743 = vmatprep.mubr.f32.mxu0 0.0
  %2744 = vmatmul.mubr.f32.gmra.mxu0 %v2675
  %v2745 = vpop.f32.mrf.mxu0
  %v2746 = vadd.f32 %v1755, %v2745
  %v2747 = vpop.f32.mrf.mxu0
  %2748 = vmatprep.mubr.f32.mxu0 0.0
  %2749 = vmatmul.mubr.f32.gmra.mxu0 %v2676
  %v2750 = vpop.f32.mrf.mxu0
  %v2751 = vadd.f32 %v1756, %v2750
  %v2752 = vpop.f32.mrf.mxu0
  %2753 = vmatprep.mubr.f32.mxu0 0.0
  %2754 = vmatmul.mubr.f32.gmra.mxu0 %v2677
  %v2755 = vpop.f32.mrf.mxu0
  %v2756 = vadd.f32 %v1757, %v2755
  %v2757 = vpop.f32.mrf.mxu0
  %2758 = vmatprep.mubr.f32.mxu0 0.0
  %2759 = vmatmul.mubr.f32.gmra.mxu0 %v2678
  %v2760 = vpop.f32.mrf.mxu0
  %v2761 = vadd.f32 %v1758, %v2760
  %v2762 = vpop.f32.mrf.mxu0
  %2763 = vdwg.mxu0
  %v2764 = vsel %vm481, %v2746, -inf
  %2765 = vmax.xlane.f32.xlu0 %v2764
  %v2766 = vpop.xlane.xlu0 %2765
  %v2767 = vsel %vm481, %v2751, -inf
  %2768 = vmax.xlane.f32.xlu0 %v2767
  %v2769 = vpop.xlane.xlu0 %2768
  %v2770 = vsel %vm481, %v2756, -inf
  %2771 = vmax.xlane.f32.xlu0 %v2770
  %v2772 = vpop.xlane.xlu0 %2771
  %v2773 = vsel %vm481, %v2761, -inf
  %2774 = vmax.xlane.f32.xlu0 %v2773
  %v2775 = vpop.xlane.xlu0 %2774
  %v2776 = vsub.f32 %v2746, %v2766
  %v2777 = vsub.f32 %v2751, %v2769
  %v2778 = vsub.f32 %v2756, %v2772
  %v2779 = vsub.f32 %v2761, %v2775
  %v2780 = vmul.f32 %v2776, 1.442695
  %v2781 = vpow.pop %v2780
  %v2782 = vmul.f32 %v2777, 1.442695
  %v2783 = vpow.pop %v2782
  %v2784 = vmul.f32 %v2778, 1.442695
  %v2785 = vpow.pop %v2784
  %v2786 = vmul.f32 %v2779, 1.442695
  %v2787 = vpow.pop %v2786
  %v2788 = vsel %vm481, %v2781, 0.0
  %2789 = vadd.xlane.f32.xlu0 %v2788
  %v2790 = vpop.xlane.xlu0 %2789
  %v2791 = vsel %vm481, %v2783, 0.0
  %2792 = vadd.xlane.f32.xlu0 %v2791
  %v2793 = vpop.xlane.xlu0 %2792
  %v2794 = vsel %vm481, %v2785, 0.0
  %2795 = vadd.xlane.f32.xlu0 %v2794
  %v2796 = vpop.xlane.xlu0 %2795
  %v2797 = vsel %vm481, %v2787, 0.0
  %2798 = vadd.xlane.f32.xlu0 %v2797
  %v2799 = vpop.xlane.xlu0 %2798
  %v2800 = vrcp.pop %v2790
  %v2801 = vrcp.pop %v2793
  %v2802 = vrcp.pop %v2796
  %v2803 = vrcp.pop %v2799
  %v2804 = vmul.f32 %v2781, %v2800
  %v2805 = vmul.f32 %v2783, %v2801
  %v2806 = vmul.f32 %v2785, %v2802
  %v2807 = vmul.f32 %v2787, %v2803
  %v2809 = vsel %vm481, %v2804, 0
  %v2812 = vsel %vm481, %v2805, 0
  %v2815 = vsel %vm481, %v2806, 0
  %v2818 = vsel %vm481, %v2807, 0
  %2820 = vmatprep.subr.mxu0 0.0
  %2821 = vmatpush1.msra.mxu0 0.0
  %2822 = vmatprep.subr.mxu0 0.0
  %2823 = vmatpush1.msra.mxu0 0.0
  %2824 = vmatprep.subr.mxu0 0.0
  %2825 = vmatpush1.msra.mxu0 0.0
  %2826 = vmatprep.subr.mxu0 0.0
  %2827 = vmatpush1.msra.mxu0 0.0
  %2828 = vmatprep.subr.mxu0 0.0
  %2829 = vmatpush1.msra.mxu0 0.0
  %2830 = vmatprep.subr.mxu0 0.0
  %2831 = vmatpush1.msra.mxu0 0.0
  %2832 = vmatprep.subr.mxu0 0.0
  %2833 = vmatpush1.msra.mxu0 0.0
  %2834 = vmatprep.subr.mxu0 0.0
  %2835 = vmatpush1.msra.mxu0 0.0
  %2836 = vmatprep.subr.mxu0 0.0
  %2837 = vmatpush1.msra.mxu0 0.0
  %2838 = vmatprep.subr.mxu0 0.0
  %2839 = vmatpush1.msra.mxu0 0.0
  %2840 = vmatprep.subr.mxu0 0.0
  %2841 = vmatpush1.msra.mxu0 0.0
  %2842 = vmatprep.subr.mxu0 0.0
  %2843 = vmatpush1.msra.mxu0 0.0
  %2844 = vmatprep.subr.mxu0 0.0
  %2845 = vmatpush1.msra.mxu0 0.0
  %2846 = vmatprep.subr.mxu0 0.0
  %2847 = vmatpush1.msra.mxu0 0.0
  %2848 = vmatprep.subr.mxu0 0.0
  %2849 = vmatpush1.msra.mxu0 0.0
  %2850 = vmatprep.subr.mxu0 0.0
  %2851 = vmatpush1.msra.mxu0 %v1981
  %2852 = vmatprep.subr.mxu0 0.0
  %2853 = vmatpush2.msra.mxu0 0.0
  %2854 = vmatprep.subr.mxu0 0.0
  %2855 = vmatpush2.msra.mxu0 0.0
  %2856 = vmatprep.subr.mxu0 0.0
  %2857 = vmatpush2.msra.mxu0 0.0
  %2858 = vmatprep.subr.mxu0 0.0
  %2859 = vmatpush2.msra.mxu0 0.0
  %2860 = vmatprep.subr.mxu0 0.0
  %2861 = vmatpush2.msra.mxu0 0.0
  %2862 = vmatprep.subr.mxu0 0.0
  %2863 = vmatpush2.msra.mxu0 0.0
  %2864 = vmatprep.subr.mxu0 0.0
  %2865 = vmatpush2.msra.mxu0 0.0
  %2866 = vmatprep.subr.mxu0 0.0
  %2867 = vmatpush2.msra.mxu0 0.0
  %2868 = vmatprep.subr.mxu0 0.0
  %2869 = vmatpush2.msra.mxu0 0.0
  %2870 = vmatprep.subr.mxu0 0.0
  %2871 = vmatpush2.msra.mxu0 0.0
  %2872 = vmatprep.subr.mxu0 0.0
  %2873 = vmatpush2.msra.mxu0 0.0
  %2874 = vmatprep.subr.mxu0 0.0
  %2875 = vmatpush2.msra.mxu0 0.0
  %2876 = vmatprep.subr.mxu0 0.0
  %2877 = vmatpush2.msra.mxu0 0.0
  %2878 = vmatprep.subr.mxu0 0.0
  %2879 = vmatpush2.msra.mxu0 0.0
  %2880 = vmatprep.subr.mxu0 0.0
  %2881 = vmatpush2.msra.mxu0 0.0
  %2882 = vmatprep.subr.mxu0 0.0
  %2883 = vmatpush2.msra.mxu0 0.0
  %2884 = vmatprep.mubr.f32.mxu0 0.0
  %2885 = vmatmul.mubr.f32.gmra.mxu0 %v2809
  %v2886 = vpop.f32.mrf.mxu0
  %v2887 = vadd.f32 0.0, %v2886
  %v2888 = vpop.f32.mrf.mxu0
  %2889 = vmatprep.mubr.f32.mxu0 0.0
  %2890 = vmatmul.mubr.f32.gmra.mxu0 %v2812
  %v2891 = vpop.f32.mrf.mxu0
  %v2892 = vadd.f32 0.0, %v2891
  %v2893 = vpop.f32.mrf.mxu0
  %2894 = vmatprep.mubr.f32.mxu0 0.0
  %2895 = vmatmul.mubr.f32.gmra.mxu0 %v2815
  %v2896 = vpop.f32.mrf.mxu0
  %v2897 = vadd.f32 0.0, %v2896
  %v2898 = vpop.f32.mrf.mxu0
  %2899 = vmatprep.mubr.f32.mxu0 0.0
  %2900 = vmatmul.mubr.f32.gmra.mxu0 %v2818
  %v2901 = vpop.f32.mrf.mxu0
  %v2902 = vadd.f32 0.0, %v2901
  %v2903 = vpop.f32.mrf.mxu0
  %2904 = vdwg.mxu0
  %v2905 = vmul.f32 %v2887, %v98
  %v2906 = vmul.f32 %v2892, %v99
  %v2907 = vmul.f32 %v2897, %v100
  %v2908 = vmul.f32 %v2902, %v101
  %v2909 = vadd.f32 %v2905, %v2906
  %v2910 = vadd.f32 %v2909, %v2907
  %v2911 = vadd.f32 %v2910, %v2908
  %2912 = vst.msk [vmem:[%s2447 + $0x8] sm:$0xff] %vm139, %v2911
  %v2913 = vld [vmem:[%s2447] sm:$0xff]
  %v2914 = vld [vmem:[%s2447 + $0x8] sm:$0xff]
  %v2916 = vlaneseq
  %v2917 = vshrl.u32 %v2916, 7
  %v2918 = vsub.s32 0, %v2917
  %v2919 = vrot.slane %v1733, %v2918
  %v2922 = vsel %vm139, %v2913, 0
  %v2925 = vsel %vm139, %v2914, 0
  %2927 = vmatprep.subr.mxu0 0.0
  %2928 = vmatpush1.msra.mxu0 0.0
  %2929 = vmatprep.subr.mxu0 0.0
  %2930 = vmatpush1.msra.mxu0 0.0
  %2931 = vmatprep.subr.mxu0 0.0
  %2932 = vmatpush1.msra.mxu0 0.0
  %2933 = vmatprep.subr.mxu0 0.0
  %2934 = vmatpush1.msra.mxu0 0.0
  %2935 = vmatprep.subr.mxu0 0.0
  %2936 = vmatpush1.msra.mxu0 0.0
  %2937 = vmatprep.subr.mxu0 0.0
  %2938 = vmatpush1.msra.mxu0 0.0
  %2939 = vmatprep.subr.mxu0 0.0
  %2940 = vmatpush1.msra.mxu0 0.0
  %2941 = vmatprep.subr.mxu0 0.0
  %2942 = vmatpush1.msra.mxu0 0.0
  %2943 = vmatprep.subr.mxu0 0.0
  %2944 = vmatpush1.msra.mxu0 0.0
  %2945 = vmatprep.subr.mxu0 0.0
  %2946 = vmatpush1.msra.mxu0 0.0
  %2947 = vmatprep.subr.mxu0 0.0
  %2948 = vmatpush1.msra.mxu0 0.0
  %2949 = vmatprep.subr.mxu0 0.0
  %2950 = vmatpush1.msra.mxu0 0.0
  %2951 = vmatprep.subr.mxu0 0.0
  %2952 = vmatpush1.msra.mxu0 %v1731
  %2953 = vmatprep.subr.mxu0 0.0
  %2954 = vmatpush1.msra.mxu0 %v1730
  %2955 = vmatprep.subr.mxu0 0.0
  %2956 = vmatpush1.msra.mxu0 %v1729
  %2957 = vmatprep.subr.mxu0 0.0
  %2958 = vmatpush1.msra.mxu0 %v1728
  %2959 = vmatprep.subr.mxu0 0.0
  %2960 = vmatpush2.msra.mxu0 0.0
  %2961 = vmatprep.subr.mxu0 0.0
  %2962 = vmatpush2.msra.mxu0 0.0
  %2963 = vmatprep.subr.mxu0 0.0
  %2964 = vmatpush2.msra.mxu0 0.0
  %2965 = vmatprep.subr.mxu0 0.0
  %2966 = vmatpush2.msra.mxu0 0.0
  %2967 = vmatprep.subr.mxu0 0.0
  %2968 = vmatpush2.msra.mxu0 0.0
  %2969 = vmatprep.subr.mxu0 0.0
  %2970 = vmatpush2.msra.mxu0 0.0
  %2971 = vmatprep.subr.mxu0 0.0
  %2972 = vmatpush2.msra.mxu0 0.0
  %2973 = vmatprep.subr.mxu0 0.0
  %2974 = vmatpush2.msra.mxu0 0.0
  %2975 = vmatprep.subr.mxu0 0.0
  %2976 = vmatpush2.msra.mxu0 0.0
  %2977 = vmatprep.subr.mxu0 0.0
  %2978 = vmatpush2.msra.mxu0 0.0
  %2979 = vmatprep.subr.mxu0 0.0
  %2980 = vmatpush2.msra.mxu0 0.0
  %2981 = vmatprep.subr.mxu0 0.0
  %2982 = vmatpush2.msra.mxu0 0.0
  %2983 = vmatprep.subr.mxu0 0.0
  %2984 = vmatpush2.msra.mxu0 0.0
  %2985 = vmatprep.subr.mxu0 0.0
  %2986 = vmatpush2.msra.mxu0 0.0
  %2987 = vmatprep.subr.mxu0 0.0
  %2988 = vmatpush2.msra.mxu0 0.0
  %2989 = vmatprep.subr.mxu0 0.0
  %2990 = vmatpush2.msra.mxu0 0.0
  %2991 = vmatprep.mubr.f32.mxu0 0.0
  %2992 = vmatmul.mubr.f32.gmra.mxu0 %v2922
  %v2993 = vpop.f32.mrf.mxu0
  %v2994 = vadd.f32 %v2919, %v2993
  %v2995 = vpop.f32.mrf.mxu0
  %2996 = vmatprep.mubr.f32.mxu0 0.0
  %2997 = vmatmul.mubr.f32.gmra.mxu0 %v2925
  %v2998 = vpop.f32.mrf.mxu0
  %v2999 = vadd.f32 %v2919, %v2998
  %v3000 = vpop.f32.mrf.mxu0
  %3001 = vdwg.mxu0
  %s3002 = scalar_lea.vmem %s16, 1
  %v3003 = vld [vmem:[%s3002] sm:$0x1]
  %s3004 = scalar_lea.vmem %s17, 1
  %v3005 = vld [vmem:[%s3004] sm:$0x1]
  %v3006 = vadd.f32 %v79, %v2994
  %v3007 = vadd.f32 %v80, %v2999
  %v3008 = vsel %vm139, %v3006, 0.0
  %v3009 = vrot.slane %v3008, 4
  %v3010 = vadd.f32 %v3008, %v3009
  %v3011 = vrot.slane %v3010, 2
  %v3012 = vadd.f32 %v3010, %v3011
  %v3013 = vrot.slane %v3012, 1
  %v3014 = vadd.f32 %v3012, %v3013
  %v3015 = vmul.f32 %v3014, %v1405
  %v3016 = vsub.f32 %v3006, %v3015
  %v3017 = vmul.f32 %v3016, %v3016
  %v3018 = vsel %vm139, %v3017, 0.0
  %v3019 = vrot.slane %v3018, 4
  %v3020 = vadd.f32 %v3018, %v3019
  %v3021 = vrot.slane %v3020, 2
  %v3022 = vadd.f32 %v3020, %v3021
  %v3023 = vrot.slane %v3022, 1
  %v3024 = vadd.f32 %v3022, %v3023
  %v3025 = vmul.f32 %v3024, %v1405
  %v3026 = vadd.f32 %v3025, 1e-05
  %v3027 = vrsqrt.pop %v3026
  %v3028 = vmul.f32 %v3016, %v3027
  %v3029 = vsel %vm139, %v3007, 0.0
  %v3030 = vrot.slane %v3029, 4
  %v3031 = vadd.f32 %v3029, %v3030
  %v3032 = vrot.slane %v3031, 2
  %v3033 = vadd.f32 %v3031, %v3032
  %v3034 = vrot.slane %v3033, 1
  %v3035 = vadd.f32 %v3033, %v3034
  %v3036 = vmul.f32 %v3035, %v1405
  %v3037 = vsub.f32 %v3007, %v3036
  %v3038 = vmul.f32 %v3037, %v3037
  %v3039 = vsel %vm139, %v3038, 0.0
  %v3040 = vrot.slane %v3039, 4
  %v3041 = vadd.f32 %v3039, %v3040
  %v3042 = vrot.slane %v3041, 2
  %v3043 = vadd.f32 %v3041, %v3042
  %v3044 = vrot.slane %v3043, 1
  %v3045 = vadd.f32 %v3043, %v3044
  %v3046 = vmul.f32 %v3045, %v1405
  %v3047 = vadd.f32 %v3046, 1e-05
  %v3048 = vrsqrt.pop %v3047
  %v3049 = vmul.f32 %v3037, %v3048
  %v3051 = vlaneseq
  %v3052 = vshrl.u32 %v3051, 7
  %v3053 = vsub.s32 0, %v3052
  %v3054 = vrot.slane %v3003, %v3053
  %v3056 = vmul.f32 %v3028, %v3054
  %v3057 = vmul.f32 %v3049, %v3054
  %v3059 = vlaneseq
  %v3060 = vshrl.u32 %v3059, 7
  %v3061 = vsub.s32 0, %v3060
  %v3062 = vrot.slane %v3005, %v3061
  %v3064 = vadd.f32 %v3056, %v3062
  %v3065 = vadd.f32 %v3057, %v3062
  %s3066 = scalar_lea.vmem %s18, 32
  %v3067 = vld [vmem:[%s3066] sm:$0xff]
  %v3068 = vld [vmem:[%s3066 + $0x8] sm:$0xff]
  %v3069 = vld [vmem:[%s3066 + $0x10] sm:$0xff]
  %v3070 = vld [vmem:[%s3066 + $0x18] sm:$0xff]
  %s3071 = scalar_lea.vmem %s19, 1
  %v3072 = vld [vmem:[%s3071] sm:$0x1]
  %v3074 = vlaneseq
  %v3075 = vshrl.u32 %v3074, 7
  %v3076 = vsub.s32 0, %v3075
  %v3077 = vrot.slane %v3072, %v3076
  %v3080 = vsel %vm139, %v3064, 0
  %v3083 = vsel %vm139, %v3065, 0
  %3085 = vmatprep.subr.mxu0 0.0
  %3086 = vmatpush1.msra.mxu0 0.0
  %3087 = vmatprep.subr.mxu0 0.0
  %3088 = vmatpush1.msra.mxu0 0.0
  %3089 = vmatprep.subr.mxu0 0.0
  %3090 = vmatpush1.msra.mxu0 0.0
  %3091 = vmatprep.subr.mxu0 0.0
  %3092 = vmatpush1.msra.mxu0 0.0
  %3093 = vmatprep.subr.mxu0 0.0
  %3094 = vmatpush1.msra.mxu0 0.0
  %3095 = vmatprep.subr.mxu0 0.0
  %3096 = vmatpush1.msra.mxu0 0.0
  %3097 = vmatprep.subr.mxu0 0.0
  %3098 = vmatpush1.msra.mxu0 0.0
  %3099 = vmatprep.subr.mxu0 0.0
  %3100 = vmatpush1.msra.mxu0 0.0
  %3101 = vmatprep.subr.mxu0 0.0
  %3102 = vmatpush1.msra.mxu0 0.0
  %3103 = vmatprep.subr.mxu0 0.0
  %3104 = vmatpush1.msra.mxu0 0.0
  %3105 = vmatprep.subr.mxu0 0.0
  %3106 = vmatpush1.msra.mxu0 0.0
  %3107 = vmatprep.subr.mxu0 0.0
  %3108 = vmatpush1.msra.mxu0 0.0
  %3109 = vmatprep.subr.mxu0 0.0
  %3110 = vmatpush1.msra.mxu0 %v3070
  %3111 = vmatprep.subr.mxu0 0.0
  %3112 = vmatpush1.msra.mxu0 %v3069
  %3113 = vmatprep.subr.mxu0 0.0
  %3114 = vmatpush1.msra.mxu0 %v3068
  %3115 = vmatprep.subr.mxu0 0.0
  %3116 = vmatpush1.msra.mxu0 %v3067
  %3117 = vmatprep.subr.mxu0 0.0
  %3118 = vmatpush2.msra.mxu0 0.0
  %3119 = vmatprep.subr.mxu0 0.0
  %3120 = vmatpush2.msra.mxu0 0.0
  %3121 = vmatprep.subr.mxu0 0.0
  %3122 = vmatpush2.msra.mxu0 0.0
  %3123 = vmatprep.subr.mxu0 0.0
  %3124 = vmatpush2.msra.mxu0 0.0
  %3125 = vmatprep.subr.mxu0 0.0
  %3126 = vmatpush2.msra.mxu0 0.0
  %3127 = vmatprep.subr.mxu0 0.0
  %3128 = vmatpush2.msra.mxu0 0.0
  %3129 = vmatprep.subr.mxu0 0.0
  %3130 = vmatpush2.msra.mxu0 0.0
  %3131 = vmatprep.subr.mxu0 0.0
  %3132 = vmatpush2.msra.mxu0 0.0
  %3133 = vmatprep.subr.mxu0 0.0
  %3134 = vmatpush2.msra.mxu0 0.0
  %3135 = vmatprep.subr.mxu0 0.0
  %3136 = vmatpush2.msra.mxu0 0.0
  %3137 = vmatprep.subr.mxu0 0.0
  %3138 = vmatpush2.msra.mxu0 0.0
  %3139 = vmatprep.subr.mxu0 0.0
  %3140 = vmatpush2.msra.mxu0 0.0
  %3141 = vmatprep.subr.mxu0 0.0
  %3142 = vmatpush2.msra.mxu0 0.0
  %3143 = vmatprep.subr.mxu0 0.0
  %3144 = vmatpush2.msra.mxu0 0.0
  %3145 = vmatprep.subr.mxu0 0.0
  %3146 = vmatpush2.msra.mxu0 0.0
  %3147 = vmatprep.subr.mxu0 0.0
  %3148 = vmatpush2.msra.mxu0 0.0
  %3149 = vmatprep.mubr.f32.mxu0 0.0
  %3150 = vmatmul.mubr.f32.gmra.mxu0 %v3080
  %v3151 = vpop.f32.mrf.mxu0
  %v3152 = vadd.f32 %v3077, %v3151
  %v3153 = vpop.f32.mrf.mxu0
  %3154 = vmatprep.mubr.f32.mxu0 0.0
  %3155 = vmatmul.mubr.f32.gmra.mxu0 %v3083
  %v3156 = vpop.f32.mrf.mxu0
  %v3157 = vadd.f32 %v3077, %v3156
  %v3158 = vpop.f32.mrf.mxu0
  %3159 = vdwg.mxu0
  %v3160 = vmax.f32 %v3152, 0.0
  %v3161 = vmax.f32 %v3157, 0.0
  %s3162 = scalar_lea.vmem %s20, 64
  %v3163 = vld [vmem:[%s3162] sm:$0xff]
  %v3164 = vld [vmem:[%s3162 + $0x8] sm:$0xff]
  %v3165 = vld [vmem:[%s3162 + $0x10] sm:$0xff]
  %v3166 = vld [vmem:[%s3162 + $0x18] sm:$0xff]
  %v3167 = vld [vmem:[%s3162 + $0x20] sm:$0xff]
  %v3168 = vld [vmem:[%s3162 + $0x28] sm:$0xff]
  %v3169 = vld [vmem:[%s3162 + $0x30] sm:$0xff]
  %v3170 = vld [vmem:[%s3162 + $0x38] sm:$0xff]
  %s3171 = scalar_lea.vmem %s21, 1
  %v3172 = vld [vmem:[%s3171] sm:$0x1]
  %v3174 = vlaneseq
  %v3175 = vshrl.u32 %v3174, 7
  %v3176 = vsub.s32 0, %v3175
  %v3177 = vrot.slane %v3172, %v3176
  %v3180 = vsel %vm1566, %v3160, 0
  %v3183 = vsel %vm1566, %v3161, 0
  %3185 = vmatprep.subr.mxu0 0.0
  %3186 = vmatpush1.msra.mxu0 0.0
  %3187 = vmatprep.subr.mxu0 0.0
  %3188 = vmatpush1.msra.mxu0 0.0
  %3189 = vmatprep.subr.mxu0 0.0
  %3190 = vmatpush1.msra.mxu0 0.0
  %3191 = vmatprep.subr.mxu0 0.0
  %3192 = vmatpush1.msra.mxu0 0.0
  %3193 = vmatprep.subr.mxu0 0.0
  %3194 = vmatpush1.msra.mxu0 0.0
  %3195 = vmatprep.subr.mxu0 0.0
  %3196 = vmatpush1.msra.mxu0 0.0
  %3197 = vmatprep.subr.mxu0 0.0
  %3198 = vmatpush1.msra.mxu0 0.0
  %3199 = vmatprep.subr.mxu0 0.0
  %3200 = vmatpush1.msra.mxu0 0.0
  %3201 = vmatprep.subr.mxu0 0.0
  %3202 = vmatpush1.msra.mxu0 %v3170
  %3203 = vmatprep.subr.mxu0 0.0
  %3204 = vmatpush1.msra.mxu0 %v3169
  %3205 = vmatprep.subr.mxu0 0.0
  %3206 = vmatpush1.msra.mxu0 %v3168
  %3207 = vmatprep.subr.mxu0 0.0
  %3208 = vmatpush1.msra.mxu0 %v3167
  %3209 = vmatprep.subr.mxu0 0.0
  %3210 = vmatpush1.msra.mxu0 %v3166
  %3211 = vmatprep.subr.mxu0 0.0
  %3212 = vmatpush1.msra.mxu0 %v3165
  %3213 = vmatprep.subr.mxu0 0.0
  %3214 = vmatpush1.msra.mxu0 %v3164
  %3215 = vmatprep.subr.mxu0 0.0
  %3216 = vmatpush1.msra.mxu0 %v3163
  %3217 = vmatprep.subr.mxu0 0.0
  %3218 = vmatpush2.msra.mxu0 0.0
  %3219 = vmatprep.subr.mxu0 0.0
  %3220 = vmatpush2.msra.mxu0 0.0
  %3221 = vmatprep.subr.mxu0 0.0
  %3222 = vmatpush2.msra.mxu0 0.0
  %3223 = vmatprep.subr.mxu0 0.0
  %3224 = vmatpush2.msra.mxu0 0.0
  %3225 = vmatprep.subr.mxu0 0.0
  %3226 = vmatpush2.msra.mxu0 0.0
  %3227 = vmatprep.subr.mxu0 0.0
  %3228 = vmatpush2.msra.mxu0 0.0
  %3229 = vmatprep.subr.mxu0 0.0
  %3230 = vmatpush2.msra.mxu0 0.0
  %3231 = vmatprep.subr.mxu0 0.0
  %3232 = vmatpush2.msra.mxu0 0.0
  %3233 = vmatprep.subr.mxu0 0.0
  %3234 = vmatpush2.msra.mxu0 0.0
  %3235 = vmatprep.subr.mxu0 0.0
  %3236 = vmatpush2.msra.mxu0 0.0
  %3237 = vmatprep.subr.mxu0 0.0
  %3238 = vmatpush2.msra.mxu0 0.0
  %3239 = vmatprep.subr.mxu0 0.0
  %3240 = vmatpush2.msra.mxu0 0.0
  %3241 = vmatprep.subr.mxu0 0.0
  %3242 = vmatpush2.msra.mxu0 0.0
  %3243 = vmatprep.subr.mxu0 0.0
  %3244 = vmatpush2.msra.mxu0 0.0
  %3245 = vmatprep.subr.mxu0 0.0
  %3246 = vmatpush2.msra.mxu0 0.0
  %3247 = vmatprep.subr.mxu0 0.0
  %3248 = vmatpush2.msra.mxu0 0.0
  %3249 = vmatprep.mubr.f32.mxu0 0.0
  %3250 = vmatmul.mubr.f32.gmra.mxu0 %v3180
  %v3251 = vpop.f32.mrf.mxu0
  %v3252 = vadd.f32 %v3177, %v3251
  %v3253 = vpop.f32.mrf.mxu0
  %3254 = vmatprep.mubr.f32.mxu0 0.0
  %3255 = vmatmul.mubr.f32.gmra.mxu0 %v3183
  %v3256 = vpop.f32.mrf.mxu0
  %v3257 = vadd.f32 %v3177, %v3256
  %v3258 = vpop.f32.mrf.mxu0
  %3259 = vdwg.mxu0
  %s3260 = scalar_lea.vmem %s22, 1
  %v3261 = vld [vmem:[%s3260] sm:$0x1]
  %s3262 = scalar_lea.vmem %s23, 1
  %v3263 = vld [vmem:[%s3262] sm:$0x1]
  %v3264 = vadd.f32 %v3064, %v3252
  %v3265 = vadd.f32 %v3065, %v3257
  %v3266 = vsel %vm139, %v3264, 0.0
  %v3267 = vrot.slane %v3266, 4
  %v3268 = vadd.f32 %v3266, %v3267
  %v3269 = vrot.slane %v3268, 2
  %v3270 = vadd.f32 %v3268, %v3269
  %v3271 = vrot.slane %v3270, 1
  %v3272 = vadd.f32 %v3270, %v3271
  %v3273 = vmul.f32 %v3272, %v1405
  %v3274 = vsub.f32 %v3264, %v3273
  %v3275 = vmul.f32 %v3274, %v3274
  %v3276 = vsel %vm139, %v3275, 0.0
  %v3277 = vrot.slane %v3276, 4
  %v3278 = vadd.f32 %v3276, %v3277
  %v3279 = vrot.slane %v3278, 2
  %v3280 = vadd.f32 %v3278, %v3279
  %v3281 = vrot.slane %v3280, 1
  %v3282 = vadd.f32 %v3280, %v3281
  %v3283 = vmul.f32 %v3282, %v1405
  %v3284 = vadd.f32 %v3283, 1e-05
  %v3285 = vrsqrt.pop %v3284
  %v3286 = vmul.f32 %v3274, %v3285
  %v3287 = vsel %vm139, %v3265, 0.0
  %v3288 = vrot.slane %v3287, 4
  %v3289 = vadd.f32 %v3287, %v3288
  %v3290 = vrot.slane %v3289, 2
  %v3291 = vadd.f32 %v3289, %v3290
  %v3292 = vrot.slane %v3291, 1
  %v3293 = vadd.f32 %v3291, %v3292
  %v3294 = vmul.f32 %v3293, %v1405
  %v3295 = vsub.f32 %v3265, %v3294
  %v3296 = vmul.f32 %v3295, %v3295
  %v3297 = vsel %vm139, %v3296, 0.0
  %v3298 = vrot.slane %v3297, 4
  %v3299 = vadd.f32 %v3297, %v3298
  %v3300 = vrot.slane %v3299, 2
  %v3301 = vadd.f32 %v3299, %v3300
  %v3302 = vrot.slane %v3301, 1
  %v3303 = vadd.f32 %v3301, %v3302
  %v3304 = vmul.f32 %v3303, %v1405
  %v3305 = vadd.f32 %v3304, 1e-05
  %v3306 = vrsqrt.pop %v3305
  %v3307 = vmul.f32 %v3295, %v3306
  %v3309 = vlaneseq
  %v3310 = vshrl.u32 %v3309, 7
  %v3311 = vsub.s32 0, %v3310
  %v3312 = vrot.slane %v3261, %v3311
  %v3314 = vmul.f32 %v3286, %v3312
  %v3315 = vmul.f32 %v3307, %v3312
  %v3317 = vlaneseq
  %v3318 = vshrl.u32 %v3317, 7
  %v3319 = vsub.s32 0, %v3318
  %v3320 = vrot.slane %v3263, %v3319
  %v3322 = vadd.f32 %v3314, %v3320
  %v3323 = vadd.f32 %v3315, %v3320
  %s3324 = scalar_lea.vmem %s24, 16
  %3325 = vst.msk [vmem:[%s3324] sm:$0xff] %vm139, %v3322
  %3326 = vst.msk [vmem:[%s3324 + $0x8] sm:$0xff] %vm139, %v3323
  // Predicated region
  $region98: #{encoder_layer_forward.1} parent=0 // pred_check
    _
  $region99: #{encoder_layer_forward.1} parent=0 // pred_check_branch
    %3328 = sbr.rel (0) target = $region101
  $region100: #{encoder_layer_forward.1} parent=0 // pred_region
    _
  $region101: #{encoder_layer_forward.1} parent=0 // pred_fallthru
    _
  // Predicated region
  $region102: #{encoder_layer_forward.1} parent=0 // pred_check
    _
  $region103: #{encoder_layer_forward.1} parent=0 // pred_check_branch
    %3330 = sbr.rel (0) target = $region105
  $region104: #{encoder_layer_forward.1} parent=0 // pred_region
    _
  $region105: #{encoder_layer_forward.1} parent=0 // pred_fallthru
    _

</llo_original>
